<compile_context>
chip_gen: v6e
topology: v6e:2x2x1
jax: 0.10.0
libtpu: 0.0.40
codegen_flags: <defaults>
</compile_context>

<pallas_src>
import numpy as np
import jax
import jax.numpy as jnp
from jax import lax
from jax.experimental import pallas as pl
from jax.experimental.pallas import tpu as pltpu

# ---------------- static problem sizes (match the PyTorch module) ------------
N, C_IN, H, W = 2, 3, 16, 16
K = 3                      # conv kernel size
C_OUT = 16                 # conv output channels
FC_OUT = 10                # linear output features
HW = H * W                 # 256
NHW = N * HW               # 512
HP, WP = H + 2, W + 2      # spatially padded input (padding=1)

# Packed-parameter buffer layout: rows of a (P_ROWS, C_OUT) f32 matrix.
# Each conv tap's (C_IN, C_OUT) weight block starts on an 8-row boundary so
# every in-kernel slice is sublane-aligned.
BC_ROW = 72                # conv bias  (1, C_OUT)
WF_ROW = 80                # fc weight  (C_OUT, FC_OUT) in lanes [0, FC_OUT)
BF_ROW = 96                # fc bias    (1, FC_OUT)
P_ROWS = 104               # multiple of 8


def gemma3_kernel(x_ref, p_ref, out_ref):
    """Fused conv3x3 + ReLU + global avg-pool + linear.

    x_ref  : (N, HP, WP, C_IN)  zero-padded NHWC input            (VMEM)
    p_ref  : (P_ROWS, C_OUT)    packed weights/biases             (VMEM)
    out_ref: (N, FC_OUT)        logits                            (VMEM)
    """
    # ---- Conv2d(3->16, k=3, s=1, p=1) as 9 shifted-window MXU matmuls ------
    acc = jnp.zeros((NHW, C_OUT), jnp.float32)
    for kh in range(K):
        for kw in range(K):
            k = kh * K + kw
            # h-slice: leading dim (free); w-slice: small sublane shift;
            # reshape collapses leading dims only (layout preserving).
            patch = x_ref[:, kh:kh + H, kw:kw + W, :].reshape(NHW, C_IN)
            wk = p_ref[8 * k:8 * k + C_IN, :]                   # (C_IN, C_OUT)
            acc = acc + jnp.dot(patch, wk,
                                preferred_element_type=jnp.float32)
    conv = jnp.maximum(acc + p_ref[BC_ROW:BC_ROW + 1, :], 0.0)  # (NHW, C_OUT)

    # ---- AdaptiveAvgPool2d((1,1)) as a matmul against an in-kernel-built
    #      (N, NHW) block-averaging matrix (no DMA'd constant) --------------
    rows = lax.broadcasted_iota(jnp.int32, (N, NHW), 0)
    cols = lax.broadcasted_iota(jnp.int32, (N, NHW), 1)
    in_block = (cols >= rows * HW) & (cols < (rows + 1) * HW)
    pool = jnp.where(in_block, jnp.float32(1.0 / HW), jnp.float32(0.0))
    pooled = jnp.dot(pool, conv,
                     preferred_element_type=jnp.float32)        # (N, C_OUT)

    # ---- Linear(16 -> 10) ---------------------------------------------------
    wf = p_ref[WF_ROW:WF_ROW + C_OUT, 0:FC_OUT]                 # (C_OUT, FC_OUT)
    bf = p_ref[BF_ROW:BF_ROW + 1, 0:FC_OUT]                     # (1, FC_OUT)
    out_ref[...] = jnp.dot(pooled, wf,
                           preferred_element_type=jnp.float32) + bf


def prepare_params(conv_w, conv_b, fc_w, fc_b):
    """One-time packing of all parameters into a single (P_ROWS, C_OUT) buffer."""
    p = jnp.zeros((P_ROWS, C_OUT), jnp.float32)
    for kh in range(K):
        for kw in range(K):
            k = kh * K + kw
            wk = jnp.transpose(conv_w[:, :, kh, kw], (1, 0))    # (C_IN, C_OUT)
            p = p.at[8 * k:8 * k + C_IN, :].set(wk)
    p = p.at[BC_ROW, :].set(conv_b)
    p = p.at[WF_ROW:WF_ROW + C_OUT, 0:FC_OUT].set(jnp.transpose(fc_w, (1, 0)))
    p = p.at[BF_ROW, 0:FC_OUT].set(fc_b)
    return p


@jax.jit
def gemma3_forward(x_nchw, params):
    """x_nchw: (N, C_IN, H, W) f32 -> logits (N, FC_OUT) f32."""
    # Only pre-op: NCHW -> NHWC + zero padding (padding=1), ~7.6 KiB.
    # The im2col itself now lives inside the kernel.
    x = jnp.transpose(x_nchw, (0, 2, 3, 1))                     # NHWC
    x = jnp.pad(x, ((0, 0), (1, 1), (1, 1), (0, 0)))            # (N, HP, WP, C_IN)

    vmem = pltpu.MemorySpace.VMEM
    return pl.pallas_call(
        gemma3_kernel,
        out_shape=jax.ShapeDtypeStruct((N, FC_OUT), jnp.float32),
        in_specs=[pl.BlockSpec(memory_space=vmem),
                  pl.BlockSpec(memory_space=vmem)],
        out_specs=pl.BlockSpec(memory_space=vmem),
    )(x, params)


def _reference(x_nchw, conv_w, conv_b, fc_w, fc_b):
    """Pure-JAX reference (verification only)."""
    conv = jax.lax.conv_general_dilated(
        x_nchw, conv_w, window_strides=(1, 1), padding=((1, 1), (1, 1)),
        dimension_numbers=("NCHW", "OIHW", "NCHW"))
    conv = jnp.maximum(conv + conv_b.reshape(1, C_OUT, 1, 1), 0.0)
    pooled = conv.mean(axis=(2, 3))                             # (N, C_OUT)
    return pooled @ fc_w.T + fc_b


if __name__ == "__main__":
    key = jax.random.PRNGKey(0)
    k_x, k_cw, k_cb, k_fw, k_fb = jax.random.split(key, 5)

    # Deterministic synthetic parameters (shapes match nn.Conv2d / nn.Linear).
    x = jax.random.normal(k_x, (N, C_IN, H, W), dtype=jnp.float32)
    conv_w = 0.1 * jax.random.normal(k_cw, (C_OUT, C_IN, K, K), dtype=jnp.float32)
    conv_b = 0.1 * jax.random.normal(k_cb, (C_OUT,), dtype=jnp.float32)
    fc_w = 0.1 * jax.random.normal(k_fw, (FC_OUT, C_OUT), dtype=jnp.float32)
    fc_b = 0.1 * jax.random.normal(k_fb, (FC_OUT,), dtype=jnp.float32)

    params = prepare_params(conv_w, conv_b, fc_w, fc_b)

    out = gemma3_forward(x, params)
    out = jax.block_until_ready(out)

    ref = jax.block_until_ready(_reference(x, conv_w, conv_b, fc_w, fc_b))
    np.testing.assert_allclose(np.asarray(out), np.asarray(ref),
                               rtol=1e-4, atol=1e-4)
    print("KERNEL_OK")
</pallas_src>

<mosaic_0001>
module attributes {stable_mosaic.version = 11 : i64} {
  func.func @gemma3_kernel(%arg0: memref<2x18x18x3xf32, #tpu.memory_space<vmem>>, %arg1: memref<104x16xf32, #tpu.memory_space<vmem>>, %arg2: memref<2x10xf32, #tpu.memory_space<vmem>>) attributes {dimension_semantics = [], scalar_prefetch = 0 : i64, scratch_operands = 0 : i64, tpu.core_type = #tpu.core_type<tc>} {
    %cst = arith.constant 0.000000e+00 : f32
    %0 = vector.broadcast %cst : f32 to vector<512x16xf32>
    %c0 = arith.constant 0 : index
    %c0_0 = arith.constant 0 : index
    %c0_1 = arith.constant 0 : index
    %c0_2 = arith.constant 0 : index
    %1 = vector.load %arg0[%c0, %c0_0, %c0_1, %c0_2] : memref<2x18x18x3xf32, #tpu.memory_space<vmem>>, vector<2x16x16x3xf32>
    %2 = vector.shape_cast %1 : vector<2x16x16x3xf32> to vector<512x3xf32>
    %c0_3 = arith.constant 0 : index
    %c0_4 = arith.constant 0 : index
    %3 = vector.load %arg1[%c0_3, %c0_4] : memref<104x16xf32, #tpu.memory_space<vmem>>, vector<3x16xf32>
    %cst_5 = arith.constant dense<0.000000e+00> : vector<512x16xf32>
    %4 = tpu.matmul %2, %3, %cst_5 {dimension_numbers = #tpu.dot_dimension_numbers<[1], [0], [0], [1], [0, 0, 1, 1], [], []>} : vector<512x3xf32>, vector<3x16xf32>, vector<512x16xf32> -> vector<512x16xf32>
    %5 = arith.addf %0, %4 : vector<512x16xf32>
    %c0_6 = arith.constant 0 : index
    %c0_7 = arith.constant 0 : index
    %c1 = arith.constant 1 : index
    %c0_8 = arith.constant 0 : index
    %6 = vector.load %arg0[%c0_6, %c0_7, %c1, %c0_8] : memref<2x18x18x3xf32, #tpu.memory_space<vmem>>, vector<2x16x16x3xf32>
    %7 = vector.shape_cast %6 : vector<2x16x16x3xf32> to vector<512x3xf32>
    %c8 = arith.constant 8 : index
    %c0_9 = arith.constant 0 : index
    %8 = vector.load %arg1[%c8, %c0_9] : memref<104x16xf32, #tpu.memory_space<vmem>>, vector<3x16xf32>
    %cst_10 = arith.constant dense<0.000000e+00> : vector<512x16xf32>
    %9 = tpu.matmul %7, %8, %cst_10 {dimension_numbers = #tpu.dot_dimension_numbers<[1], [0], [0], [1], [0, 0, 1, 1], [], []>} : vector<512x3xf32>, vector<3x16xf32>, vector<512x16xf32> -> vector<512x16xf32>
    %10 = arith.addf %5, %9 : vector<512x16xf32>
    %c0_11 = arith.constant 0 : index
    %c0_12 = arith.constant 0 : index
    %c2 = arith.constant 2 : index
    %c0_13 = arith.constant 0 : index
    %11 = vector.load %arg0[%c0_11, %c0_12, %c2, %c0_13] : memref<2x18x18x3xf32, #tpu.memory_space<vmem>>, vector<2x16x16x3xf32>
    %12 = vector.shape_cast %11 : vector<2x16x16x3xf32> to vector<512x3xf32>
    %c16 = arith.constant 16 : index
    %c0_14 = arith.constant 0 : index
    %13 = vector.load %arg1[%c16, %c0_14] : memref<104x16xf32, #tpu.memory_space<vmem>>, vector<3x16xf32>
    %cst_15 = arith.constant dense<0.000000e+00> : vector<512x16xf32>
    %14 = tpu.matmul %12, %13, %cst_15 {dimension_numbers = #tpu.dot_dimension_numbers<[1], [0], [0], [1], [0, 0, 1, 1], [], []>} : vector<512x3xf32>, vector<3x16xf32>, vector<512x16xf32> -> vector<512x16xf32>
    %15 = arith.addf %10, %14 : vector<512x16xf32>
    %c0_16 = arith.constant 0 : index
    %c1_17 = arith.constant 1 : index
    %c0_18 = arith.constant 0 : index
    %c0_19 = arith.constant 0 : index
    %16 = vector.load %arg0[%c0_16, %c1_17, %c0_18, %c0_19] : memref<2x18x18x3xf32, #tpu.memory_space<vmem>>, vector<2x16x16x3xf32>
    %17 = vector.shape_cast %16 : vector<2x16x16x3xf32> to vector<512x3xf32>
    %c24 = arith.constant 24 : index
    %c0_20 = arith.constant 0 : index
    %18 = vector.load %arg1[%c24, %c0_20] : memref<104x16xf32, #tpu.memory_space<vmem>>, vector<3x16xf32>
    %cst_21 = arith.constant dense<0.000000e+00> : vector<512x16xf32>
    %19 = tpu.matmul %17, %18, %cst_21 {dimension_numbers = #tpu.dot_dimension_numbers<[1], [0], [0], [1], [0, 0, 1, 1], [], []>} : vector<512x3xf32>, vector<3x16xf32>, vector<512x16xf32> -> vector<512x16xf32>
    %20 = arith.addf %15, %19 : vector<512x16xf32>
    %c0_22 = arith.constant 0 : index
    %c1_23 = arith.constant 1 : index
    %c1_24 = arith.constant 1 : index
    %c0_25 = arith.constant 0 : index
    %21 = vector.load %arg0[%c0_22, %c1_23, %c1_24, %c0_25] : memref<2x18x18x3xf32, #tpu.memory_space<vmem>>, vector<2x16x16x3xf32>
    %22 = vector.shape_cast %21 : vector<2x16x16x3xf32> to vector<512x3xf32>
    %c32 = arith.constant 32 : index
    %c0_26 = arith.constant 0 : index
    %23 = vector.load %arg1[%c32, %c0_26] : memref<104x16xf32, #tpu.memory_space<vmem>>, vector<3x16xf32>
    %cst_27 = arith.constant dense<0.000000e+00> : vector<512x16xf32>
    %24 = tpu.matmul %22, %23, %cst_27 {dimension_numbers = #tpu.dot_dimension_numbers<[1], [0], [0], [1], [0, 0, 1, 1], [], []>} : vector<512x3xf32>, vector<3x16xf32>, vector<512x16xf32> -> vector<512x16xf32>
    %25 = arith.addf %20, %24 : vector<512x16xf32>
    %c0_28 = arith.constant 0 : index
    %c1_29 = arith.constant 1 : index
    %c2_30 = arith.constant 2 : index
    %c0_31 = arith.constant 0 : index
    %26 = vector.load %arg0[%c0_28, %c1_29, %c2_30, %c0_31] : memref<2x18x18x3xf32, #tpu.memory_space<vmem>>, vector<2x16x16x3xf32>
    %27 = vector.shape_cast %26 : vector<2x16x16x3xf32> to vector<512x3xf32>
    %c40 = arith.constant 40 : index
    %c0_32 = arith.constant 0 : index
    %28 = vector.load %arg1[%c40, %c0_32] : memref<104x16xf32, #tpu.memory_space<vmem>>, vector<3x16xf32>
    %cst_33 = arith.constant dense<0.000000e+00> : vector<512x16xf32>
    %29 = tpu.matmul %27, %28, %cst_33 {dimension_numbers = #tpu.dot_dimension_numbers<[1], [0], [0], [1], [0, 0, 1, 1], [], []>} : vector<512x3xf32>, vector<3x16xf32>, vector<512x16xf32> -> vector<512x16xf32>
    %30 = arith.addf %25, %29 : vector<512x16xf32>
    %c0_34 = arith.constant 0 : index
    %c2_35 = arith.constant 2 : index
    %c0_36 = arith.constant 0 : index
    %c0_37 = arith.constant 0 : index
    %31 = vector.load %arg0[%c0_34, %c2_35, %c0_36, %c0_37] : memref<2x18x18x3xf32, #tpu.memory_space<vmem>>, vector<2x16x16x3xf32>
    %32 = vector.shape_cast %31 : vector<2x16x16x3xf32> to vector<512x3xf32>
    %c48 = arith.constant 48 : index
    %c0_38 = arith.constant 0 : index
    %33 = vector.load %arg1[%c48, %c0_38] : memref<104x16xf32, #tpu.memory_space<vmem>>, vector<3x16xf32>
    %cst_39 = arith.constant dense<0.000000e+00> : vector<512x16xf32>
    %34 = tpu.matmul %32, %33, %cst_39 {dimension_numbers = #tpu.dot_dimension_numbers<[1], [0], [0], [1], [0, 0, 1, 1], [], []>} : vector<512x3xf32>, vector<3x16xf32>, vector<512x16xf32> -> vector<512x16xf32>
    %35 = arith.addf %30, %34 : vector<512x16xf32>
    %c0_40 = arith.constant 0 : index
    %c2_41 = arith.constant 2 : index
    %c1_42 = arith.constant 1 : index
    %c0_43 = arith.constant 0 : index
    %36 = vector.load %arg0[%c0_40, %c2_41, %c1_42, %c0_43] : memref<2x18x18x3xf32, #tpu.memory_space<vmem>>, vector<2x16x16x3xf32>
    %37 = vector.shape_cast %36 : vector<2x16x16x3xf32> to vector<512x3xf32>
    %c56 = arith.constant 56 : index
    %c0_44 = arith.constant 0 : index
    %38 = vector.load %arg1[%c56, %c0_44] : memref<104x16xf32, #tpu.memory_space<vmem>>, vector<3x16xf32>
    %cst_45 = arith.constant dense<0.000000e+00> : vector<512x16xf32>
    %39 = tpu.matmul %37, %38, %cst_45 {dimension_numbers = #tpu.dot_dimension_numbers<[1], [0], [0], [1], [0, 0, 1, 1], [], []>} : vector<512x3xf32>, vector<3x16xf32>, vector<512x16xf32> -> vector<512x16xf32>
    %40 = arith.addf %35, %39 : vector<512x16xf32>
    %c0_46 = arith.constant 0 : index
    %c2_47 = arith.constant 2 : index
    %c2_48 = arith.constant 2 : index
    %c0_49 = arith.constant 0 : index
    %41 = vector.load %arg0[%c0_46, %c2_47, %c2_48, %c0_49] : memref<2x18x18x3xf32, #tpu.memory_space<vmem>>, vector<2x16x16x3xf32>
    %42 = vector.shape_cast %41 : vector<2x16x16x3xf32> to vector<512x3xf32>
    %c64 = arith.constant 64 : index
    %c0_50 = arith.constant 0 : index
    %43 = vector.load %arg1[%c64, %c0_50] : memref<104x16xf32, #tpu.memory_space<vmem>>, vector<3x16xf32>
    %cst_51 = arith.constant dense<0.000000e+00> : vector<512x16xf32>
    %44 = tpu.matmul %42, %43, %cst_51 {dimension_numbers = #tpu.dot_dimension_numbers<[1], [0], [0], [1], [0, 0, 1, 1], [], []>} : vector<512x3xf32>, vector<3x16xf32>, vector<512x16xf32> -> vector<512x16xf32>
    %45 = arith.addf %40, %44 : vector<512x16xf32>
    %c72 = arith.constant 72 : index
    %c0_52 = arith.constant 0 : index
    %46 = vector.load %arg1[%c72, %c0_52] : memref<104x16xf32, #tpu.memory_space<vmem>>, vector<1x16xf32>
    %47 = vector.broadcast %46 : vector<1x16xf32> to vector<512x16xf32>
    %48 = arith.addf %45, %47 : vector<512x16xf32>
    %cst_53 = arith.constant 0.000000e+00 : f32
    %49 = vector.broadcast %cst_53 : f32 to vector<512x16xf32>
    %50 = arith.maximumf %48, %49 : vector<512x16xf32>
    %51 = tpu.iota {dimensions = array<i32: 0>} : vector<2x512xi32>
    %52 = tpu.iota {dimensions = array<i32: 1>} : vector<2x512xi32>
    %c256_i32 = arith.constant 256 : i32
    %53 = vector.broadcast %c256_i32 : i32 to vector<2x512xi32>
    %54 = arith.muli %51, %53 : vector<2x512xi32>
    %55 = arith.cmpi sge, %52, %54 : vector<2x512xi32>
    %c1_i32 = arith.constant 1 : i32
    %56 = vector.broadcast %c1_i32 : i32 to vector<2x512xi32>
    %57 = arith.addi %51, %56 : vector<2x512xi32>
    %c256_i32_54 = arith.constant 256 : i32
    %58 = vector.broadcast %c256_i32_54 : i32 to vector<2x512xi32>
    %59 = arith.muli %57, %58 : vector<2x512xi32>
    %60 = arith.cmpi slt, %52, %59 : vector<2x512xi32>
    %61 = arith.andi %55, %60 : vector<2x512xi1>
    %cst_55 = arith.constant 3.906250e-03 : f32
    %cst_56 = arith.constant 0.000000e+00 : f32
    %62 = vector.broadcast %cst_55 : f32 to vector<2x512xf32>
    %63 = vector.broadcast %cst_56 : f32 to vector<2x512xf32>
    %64 = arith.select %61, %62, %63 : vector<2x512xi1>, vector<2x512xf32>
    %cst_57 = arith.constant dense<0.000000e+00> : vector<2x16xf32>
    %65 = tpu.matmul %64, %50, %cst_57 {dimension_numbers = #tpu.dot_dimension_numbers<[1], [0], [0], [1], [0, 0, 1, 1], [], []>} : vector<2x512xf32>, vector<512x16xf32>, vector<2x16xf32> -> vector<2x16xf32>
    %c80 = arith.constant 80 : index
    %c0_58 = arith.constant 0 : index
    %66 = vector.load %arg1[%c80, %c0_58] : memref<104x16xf32, #tpu.memory_space<vmem>>, vector<16x10xf32>
    %c96 = arith.constant 96 : index
    %c0_59 = arith.constant 0 : index
    %67 = vector.load %arg1[%c96, %c0_59] : memref<104x16xf32, #tpu.memory_space<vmem>>, vector<1x10xf32>
    %cst_60 = arith.constant dense<0.000000e+00> : vector<2x10xf32>
    %68 = tpu.matmul %65, %66, %cst_60 {dimension_numbers = #tpu.dot_dimension_numbers<[1], [0], [0], [1], [0, 0, 1, 1], [], []>} : vector<2x16xf32>, vector<16x10xf32>, vector<2x10xf32> -> vector<2x10xf32>
    %69 = vector.broadcast %67 : vector<1x10xf32> to vector<2x10xf32>
    %70 = arith.addf %68, %69 : vector<2x10xf32>
    %c0_61 = arith.constant 0 : index
    %c0_62 = arith.constant 0 : index
    %71 = vector.load %arg2[%c0_61, %c0_62] : memref<2x10xf32, #tpu.memory_space<vmem>>, vector<2x10xf32>
    tpu.vector_store %arg2[%c0_61, %c0_62], %70 {strides = array<i32>} : memref<2x10xf32, #tpu.memory_space<vmem>>, vector<2x10xf32>,
    return
  }
}

</mosaic_0001>

<llo_original>
// kernel: gemma3_forward.1
$region0: #{gemma3_forward.1}
  #allocation0 [shape = 'u32[]', space=smem, size = 0x4, offset = 0x4, fixed_abs, tag = 'smem constant byte address 0x4 - core index']
  #allocation1 [shape = 'u32[144,128]{1,0:T(1,128)}', space=vmem, size = 0x12000, scoped, tag = 'internal scratch']
  %s0 = inlined_call_operand.vmem [shape: f32[2,18,18,3], index: 0, kind: input, shape index: {}]
  %s1 = inlined_call_operand.vmem [shape: f32[104,16], index: 1, kind: input, shape index: {}]
  %s2 = inlined_call_operand.hbm [shape: f32[2,10], index: 2, kind: output, shape index: {}]
  %s3 = sld [smem:[#allocation0]]
  $region18: #{gemma3_forward.1} parent=0
    _
  %s5 = ssub.s32 1, %s3
  %s6 = scalar_select 0, %s5, %s3
  $region1: #{gemma3_forward.1} parent=0
    #allocation2 [shape = 'u8[1024]{0}', space=vmem, size = 0x400, scoped, tag = 'output window, operand 0, single buffered']
    #allocation3 [shape = 's32[1]{0}', space=sflag, size = 0x4, scoped, tag = 'scoped memory for gemma3_forward.1']
    %7 = vsyncpa [#allocation3], 0
    // Predicated region
    $region2: #{gemma3_forward.1} parent=1 // pred_check
      _
    $region3: #{gemma3_forward.1} parent=1 // pred_check_branch
      %9 = sbr.rel (0) target = $region5
    $region4: #{gemma3_forward.1} parent=1 // pred_region
      _
    $region5: #{gemma3_forward.1} parent=1 // pred_fallthru
      _
    // Predicated region
    $region6: #{gemma3_forward.1} parent=1 // pred_check
      _
    $region7: #{gemma3_forward.1} parent=1 // pred_check_branch
      %11 = sbr.rel (0) target = $region9
    $region8: #{gemma3_forward.1} parent=1 // pred_region
      _
    $region9: #{gemma3_forward.1} parent=1 // pred_fallthru
      _
    %v12 = vld [vmem:[%s0] sm:$0xff]
    %v13 = vld [vmem:[%s0 + $0x8] sm:$0xff]
    %v14 = vld [vmem:[%s0 + $0x18] sm:$0xff]
    %v15 = vld [vmem:[%s0 + $0x20] sm:$0xff]
    %v16 = vld [vmem:[%s0 + $0x30] sm:$0xff]
    %v17 = vld [vmem:[%s0 + $0x38] sm:$0xff]
    %v18 = vld [vmem:[%s0 + $0x48] sm:$0xff]
    %v19 = vld [vmem:[%s0 + $0x50] sm:$0xff]
    %v20 = vld [vmem:[%s0 + $0x60] sm:$0xff]
    %v21 = vld [vmem:[%s0 + $0x68] sm:$0xff]
    %v22 = vld [vmem:[%s0 + $0x78] sm:$0xff]
    %v23 = vld [vmem:[%s0 + $0x80] sm:$0xff]
    %v24 = vld [vmem:[%s0 + $0x90] sm:$0xff]
    %v25 = vld [vmem:[%s0 + $0x98] sm:$0xff]
    %v26 = vld [vmem:[%s0 + $0xa8] sm:$0xff]
    %v27 = vld [vmem:[%s0 + $0xb0] sm:$0xff]
    %v28 = vld [vmem:[%s0 + $0xc0] sm:$0xff]
    %v29 = vld [vmem:[%s0 + $0xc8] sm:$0xff]
    %v30 = vld [vmem:[%s0 + $0xd8] sm:$0xff]
    %v31 = vld [vmem:[%s0 + $0xe0] sm:$0xff]
    %v32 = vld [vmem:[%s0 + $0xf0] sm:$0xff]
    %v33 = vld [vmem:[%s0 + $0xf8] sm:$0xff]
    %v34 = vld [vmem:[%s0 + $0x108] sm:$0xff]
    %v35 = vld [vmem:[%s0 + $0x110] sm:$0xff]
    %v36 = vld [vmem:[%s0 + $0x120] sm:$0xff]
    %v37 = vld [vmem:[%s0 + $0x128] sm:$0xff]
    %v38 = vld [vmem:[%s0 + $0x138] sm:$0xff]
    %v39 = vld [vmem:[%s0 + $0x140] sm:$0xff]
    %v40 = vld [vmem:[%s0 + $0x150] sm:$0xff]
    %v41 = vld [vmem:[%s0 + $0x158] sm:$0xff]
    %v42 = vld [vmem:[%s0 + $0x168] sm:$0xff]
    %v43 = vld [vmem:[%s0 + $0x170] sm:$0xff]
    %v44 = vld [vmem:[%s0 + $0x1b0] sm:$0xff]
    %v45 = vld [vmem:[%s0 + $0x1b8] sm:$0xff]
    %v46 = vld [vmem:[%s0 + $0x1c8] sm:$0xff]
    %v47 = vld [vmem:[%s0 + $0x1d0] sm:$0xff]
    %v48 = vld [vmem:[%s0 + $0x1e0] sm:$0xff]
    %v49 = vld [vmem:[%s0 + $0x1e8] sm:$0xff]
    %v50 = vld [vmem:[%s0 + $0x1f8] sm:$0xff]
    %v51 = vld [vmem:[%s0 + $0x200] sm:$0xff]
    %v52 = vld [vmem:[%s0 + $0x210] sm:$0xff]
    %v53 = vld [vmem:[%s0 + $0x218] sm:$0xff]
    %v54 = vld [vmem:[%s0 + $0x228] sm:$0xff]
    %v55 = vld [vmem:[%s0 + $0x230] sm:$0xff]
    %v56 = vld [vmem:[%s0 + $0x240] sm:$0xff]
    %v57 = vld [vmem:[%s0 + $0x248] sm:$0xff]
    %v58 = vld [vmem:[%s0 + $0x258] sm:$0xff]
    %v59 = vld [vmem:[%s0 + $0x260] sm:$0xff]
    %v60 = vld [vmem:[%s0 + $0x270] sm:$0xff]
    %v61 = vld [vmem:[%s0 + $0x278] sm:$0xff]
    %v62 = vld [vmem:[%s0 + $0x288] sm:$0xff]
    %v63 = vld [vmem:[%s0 + $0x290] sm:$0xff]
    %v64 = vld [vmem:[%s0 + $0x2a0] sm:$0xff]
    %v65 = vld [vmem:[%s0 + $0x2a8] sm:$0xff]
    %v66 = vld [vmem:[%s0 + $0x2b8] sm:$0xff]
    %v67 = vld [vmem:[%s0 + $0x2c0] sm:$0xff]
    %v68 = vld [vmem:[%s0 + $0x2d0] sm:$0xff]
    %v69 = vld [vmem:[%s0 + $0x2d8] sm:$0xff]
    %v70 = vld [vmem:[%s0 + $0x2e8] sm:$0xff]
    %v71 = vld [vmem:[%s0 + $0x2f0] sm:$0xff]
    %v72 = vld [vmem:[%s0 + $0x300] sm:$0xff]
    %v73 = vld [vmem:[%s0 + $0x308] sm:$0xff]
    %v74 = vld [vmem:[%s0 + $0x318] sm:$0xff]
    %v75 = vld [vmem:[%s0 + $0x320] sm:$0xff]
    %v76 = vld [vmem:[%s1] sm:$0x7]
    %v77 = vld [vmem:[%s0 + $0x1] sm:$0xff]
    %v78 = vld [vmem:[%s0 + $0x9] sm:$0xff]
    %v79 = vld [vmem:[%s0 + $0x19] sm:$0xff]
    %v80 = vld [vmem:[%s0 + $0x21] sm:$0xff]
    %v81 = vld [vmem:[%s0 + $0x31] sm:$0xff]
    %v82 = vld [vmem:[%s0 + $0x39] sm:$0xff]
    %v83 = vld [vmem:[%s0 + $0x49] sm:$0xff]
    %v84 = vld [vmem:[%s0 + $0x51] sm:$0xff]
    %v85 = vld [vmem:[%s0 + $0x61] sm:$0xff]
    %v86 = vld [vmem:[%s0 + $0x69] sm:$0xff]
    %v87 = vld [vmem:[%s0 + $0x79] sm:$0xff]
    %v88 = vld [vmem:[%s0 + $0x81] sm:$0xff]
    %v89 = vld [vmem:[%s0 + $0x91] sm:$0xff]
    %v90 = vld [vmem:[%s0 + $0x99] sm:$0xff]
    %v91 = vld [vmem:[%s0 + $0xa9] sm:$0xff]
    %v92 = vld [vmem:[%s0 + $0xb1] sm:$0xff]
    %v93 = vld [vmem:[%s0 + $0xc1] sm:$0xff]
    %v94 = vld [vmem:[%s0 + $0xc9] sm:$0xff]
    %v95 = vld [vmem:[%s0 + $0xd9] sm:$0xff]
    %v96 = vld [vmem:[%s0 + $0xe1] sm:$0xff]
    %v97 = vld [vmem:[%s0 + $0xf1] sm:$0xff]
    %v98 = vld [vmem:[%s0 + $0xf9] sm:$0xff]
    %v99 = vld [vmem:[%s0 + $0x109] sm:$0xff]
    %v100 = vld [vmem:[%s0 + $0x111] sm:$0xff]
    %v101 = vld [vmem:[%s0 + $0x121] sm:$0xff]
    %v102 = vld [vmem:[%s0 + $0x129] sm:$0xff]
    %v103 = vld [vmem:[%s0 + $0x139] sm:$0xff]
    %v104 = vld [vmem:[%s0 + $0x141] sm:$0xff]
    %v105 = vld [vmem:[%s0 + $0x151] sm:$0xff]
    %v106 = vld [vmem:[%s0 + $0x159] sm:$0xff]
    %v107 = vld [vmem:[%s0 + $0x169] sm:$0xff]
    %v108 = vld [vmem:[%s0 + $0x171] sm:$0xff]
    %v109 = vld [vmem:[%s0 + $0x1b1] sm:$0xff]
    %v110 = vld [vmem:[%s0 + $0x1b9] sm:$0xff]
    %v111 = vld [vmem:[%s0 + $0x1c9] sm:$0xff]
    %v112 = vld [vmem:[%s0 + $0x1d1] sm:$0xff]
    %v113 = vld [vmem:[%s0 + $0x1e1] sm:$0xff]
    %v114 = vld [vmem:[%s0 + $0x1e9] sm:$0xff]
    %v115 = vld [vmem:[%s0 + $0x1f9] sm:$0xff]
    %v116 = vld [vmem:[%s0 + $0x201] sm:$0xff]
    %v117 = vld [vmem:[%s0 + $0x211] sm:$0xff]
    %v118 = vld [vmem:[%s0 + $0x219] sm:$0xff]
    %v119 = vld [vmem:[%s0 + $0x229] sm:$0xff]
    %v120 = vld [vmem:[%s0 + $0x231] sm:$0xff]
    %v121 = vld [vmem:[%s0 + $0x241] sm:$0xff]
    %v122 = vld [vmem:[%s0 + $0x249] sm:$0xff]
    %v123 = vld [vmem:[%s0 + $0x259] sm:$0xff]
    %v124 = vld [vmem:[%s0 + $0x261] sm:$0xff]
    %v125 = vld [vmem:[%s0 + $0x271] sm:$0xff]
    %v126 = vld [vmem:[%s0 + $0x279] sm:$0xff]
    %v127 = vld [vmem:[%s0 + $0x289] sm:$0xff]
    %v128 = vld [vmem:[%s0 + $0x291] sm:$0xff]
    %v129 = vld [vmem:[%s0 + $0x2a1] sm:$0xff]
    %v130 = vld [vmem:[%s0 + $0x2a9] sm:$0xff]
    %v131 = vld [vmem:[%s0 + $0x2b9] sm:$0xff]
    %v132 = vld [vmem:[%s0 + $0x2c1] sm:$0xff]
    %v133 = vld [vmem:[%s0 + $0x2d1] sm:$0xff]
    %v134 = vld [vmem:[%s0 + $0x2d9] sm:$0xff]
    %v135 = vld [vmem:[%s0 + $0x2e9] sm:$0xff]
    %v136 = vld [vmem:[%s0 + $0x2f1] sm:$0xff]
    %v137 = vld [vmem:[%s0 + $0x301] sm:$0xff]
    %v138 = vld [vmem:[%s0 + $0x309] sm:$0xff]
    %v139 = vld [vmem:[%s0 + $0x319] sm:$0xff]
    %v140 = vld [vmem:[%s0 + $0x321] sm:$0xff]
    %v141 = vld [vmem:[%s1 + $0x8] sm:$0x7]
    %vm142 = vcmask 23552
    %v144 = vsel %vm142, %v77, 0
    %v147 = vsel %vm142, %v78, 0
    %v150 = vsel %vm142, %v79, 0
    %v153 = vsel %vm142, %v80, 0
    %v156 = vsel %vm142, %v81, 0
    %v159 = vsel %vm142, %v82, 0
    %v162 = vsel %vm142, %v83, 0
    %v165 = vsel %vm142, %v84, 0
    %v168 = vsel %vm142, %v85, 0
    %v171 = vsel %vm142, %v86, 0
    %v174 = vsel %vm142, %v87, 0
    %v177 = vsel %vm142, %v88, 0
    %v180 = vsel %vm142, %v89, 0
    %v183 = vsel %vm142, %v90, 0
    %v186 = vsel %vm142, %v91, 0
    %v189 = vsel %vm142, %v92, 0
    %v192 = vsel %vm142, %v93, 0
    %v195 = vsel %vm142, %v94, 0
    %v198 = vsel %vm142, %v95, 0
    %v201 = vsel %vm142, %v96, 0
    %v204 = vsel %vm142, %v97, 0
    %v207 = vsel %vm142, %v98, 0
    %v210 = vsel %vm142, %v99, 0
    %v213 = vsel %vm142, %v100, 0
    %v216 = vsel %vm142, %v101, 0
    %v219 = vsel %vm142, %v102, 0
    %v222 = vsel %vm142, %v103, 0
    %v225 = vsel %vm142, %v104, 0
    %v228 = vsel %vm142, %v105, 0
    %v231 = vsel %vm142, %v106, 0
    %v234 = vsel %vm142, %v107, 0
    %v237 = vsel %vm142, %v108, 0
    %v240 = vsel %vm142, %v109, 0
    %v243 = vsel %vm142, %v110, 0
    %v246 = vsel %vm142, %v111, 0
    %v249 = vsel %vm142, %v112, 0
    %v252 = vsel %vm142, %v113, 0
    %v255 = vsel %vm142, %v114, 0
    %v258 = vsel %vm142, %v115, 0
    %v261 = vsel %vm142, %v116, 0
    %v264 = vsel %vm142, %v117, 0
    %v267 = vsel %vm142, %v118, 0
    %v270 = vsel %vm142, %v119, 0
    %v273 = vsel %vm142, %v120, 0
    %v276 = vsel %vm142, %v121, 0
    %v279 = vsel %vm142, %v122, 0
    %v282 = vsel %vm142, %v123, 0
    %v285 = vsel %vm142, %v124, 0
    %v288 = vsel %vm142, %v125, 0
    %v291 = vsel %vm142, %v126, 0
    %v294 = vsel %vm142, %v127, 0
    %v297 = vsel %vm142, %v128, 0
    %v300 = vsel %vm142, %v129, 0
    %v303 = vsel %vm142, %v130, 0
    %v306 = vsel %vm142, %v131, 0
    %v309 = vsel %vm142, %v132, 0
    %v312 = vsel %vm142, %v133, 0
    %v315 = vsel %vm142, %v134, 0
    %v318 = vsel %vm142, %v135, 0
    %v321 = vsel %vm142, %v136, 0
    %v324 = vsel %vm142, %v137, 0
    %v327 = vsel %vm142, %v138, 0
    %v330 = vsel %vm142, %v139, 0
    %v333 = vsel %vm142, %v140, 0
    %vm335 = vcmask 1042432
    %v337 = vsel %vm335, %v141, 0
    %339 = vmatprep.subr.mxu0 0.0
    %340 = vmatpush1.msra.mxu0 0.0
    %341 = vmatprep.subr.mxu0 0.0
    %342 = vmatpush1.msra.mxu0 0.0
    %343 = vmatprep.subr.mxu0 0.0
    %344 = vmatpush1.msra.mxu0 0.0
    %345 = vmatprep.subr.mxu0 0.0
    %346 = vmatpush1.msra.mxu0 0.0
    %347 = vmatprep.subr.mxu0 0.0
    %348 = vmatpush1.msra.mxu0 0.0
    %349 = vmatprep.subr.mxu0 0.0
    %350 = vmatpush1.msra.mxu0 0.0
    %351 = vmatprep.subr.mxu0 0.0
    %352 = vmatpush1.msra.mxu0 0.0
    %353 = vmatprep.subr.mxu0 0.0
    %354 = vmatpush1.msra.mxu0 0.0
    %355 = vmatprep.subr.mxu0 0.0
    %356 = vmatpush1.msra.mxu0 0.0
    %357 = vmatprep.subr.mxu0 0.0
    %358 = vmatpush1.msra.mxu0 0.0
    %359 = vmatprep.subr.mxu0 0.0
    %360 = vmatpush1.msra.mxu0 0.0
    %361 = vmatprep.subr.mxu0 0.0
    %362 = vmatpush1.msra.mxu0 0.0
    %363 = vmatprep.subr.mxu0 0.0
    %364 = vmatpush1.msra.mxu0 0.0
    %365 = vmatprep.subr.mxu0 0.0
    %366 = vmatpush1.msra.mxu0 0.0
    %367 = vmatprep.subr.mxu0 0.0
    %368 = vmatpush1.msra.mxu0 0.0
    %369 = vmatprep.subr.mxu0 0.0
    %370 = vmatpush1.msra.mxu0 %v337
    %371 = vmatprep.subr.mxu0 0.0
    %372 = vmatpush2.msra.mxu0 0.0
    %373 = vmatprep.subr.mxu0 0.0
    %374 = vmatpush2.msra.mxu0 0.0
    %375 = vmatprep.subr.mxu0 0.0
    %376 = vmatpush2.msra.mxu0 0.0
    %377 = vmatprep.subr.mxu0 0.0
    %378 = vmatpush2.msra.mxu0 0.0
    %379 = vmatprep.subr.mxu0 0.0
    %380 = vmatpush2.msra.mxu0 0.0
    %381 = vmatprep.subr.mxu0 0.0
    %382 = vmatpush2.msra.mxu0 0.0
    %383 = vmatprep.subr.mxu0 0.0
    %384 = vmatpush2.msra.mxu0 0.0
    %385 = vmatprep.subr.mxu0 0.0
    %386 = vmatpush2.msra.mxu0 0.0
    %387 = vmatprep.subr.mxu0 0.0
    %388 = vmatpush2.msra.mxu0 0.0
    %389 = vmatprep.subr.mxu0 0.0
    %390 = vmatpush2.msra.mxu0 0.0
    %391 = vmatprep.subr.mxu0 0.0
    %392 = vmatpush2.msra.mxu0 0.0
    %393 = vmatprep.subr.mxu0 0.0
    %394 = vmatpush2.msra.mxu0 0.0
    %395 = vmatprep.subr.mxu0 0.0
    %396 = vmatpush2.msra.mxu0 0.0
    %397 = vmatprep.subr.mxu0 0.0
    %398 = vmatpush2.msra.mxu0 0.0
    %399 = vmatprep.subr.mxu0 0.0
    %400 = vmatpush2.msra.mxu0 0.0
    %401 = vmatprep.subr.mxu0 0.0
    %402 = vmatpush2.msra.mxu0 0.0
    %403 = vmatprep.mubr.f32.mxu0 0.0
    %404 = vmatmul.mubr.f32.gmra.mxu0 %v144
    %v405 = vpop.f32.mrf.mxu0
    %v406 = vadd.f32 0.0, %v405
    %v407 = vpop.f32.mrf.mxu0
    %408 = vmatprep.mubr.f32.mxu0 0.0
    %409 = vmatmul.mubr.f32.gmra.mxu0 %v147
    %v410 = vpop.f32.mrf.mxu0
    %v411 = vadd.f32 0.0, %v410
    %v412 = vpop.f32.mrf.mxu0
    %413 = vmatprep.mubr.f32.mxu0 0.0
    %414 = vmatmul.mubr.f32.gmra.mxu0 %v150
    %v415 = vpop.f32.mrf.mxu0
    %v416 = vadd.f32 0.0, %v415
    %v417 = vpop.f32.mrf.mxu0
    %418 = vmatprep.mubr.f32.mxu0 0.0
    %419 = vmatmul.mubr.f32.gmra.mxu0 %v153
    %v420 = vpop.f32.mrf.mxu0
    %v421 = vadd.f32 0.0, %v420
    %v422 = vpop.f32.mrf.mxu0
    %423 = vmatprep.mubr.f32.mxu0 0.0
    %424 = vmatmul.mubr.f32.gmra.mxu0 %v156
    %v425 = vpop.f32.mrf.mxu0
    %v426 = vadd.f32 0.0, %v425
    %v427 = vpop.f32.mrf.mxu0
    %428 = vmatprep.mubr.f32.mxu0 0.0
    %429 = vmatmul.mubr.f32.gmra.mxu0 %v159
    %v430 = vpop.f32.mrf.mxu0
    %v431 = vadd.f32 0.0, %v430
    %v432 = vpop.f32.mrf.mxu0
    %433 = vmatprep.mubr.f32.mxu0 0.0
    %434 = vmatmul.mubr.f32.gmra.mxu0 %v162
    %v435 = vpop.f32.mrf.mxu0
    %v436 = vadd.f32 0.0, %v435
    %v437 = vpop.f32.mrf.mxu0
    %438 = vmatprep.mubr.f32.mxu0 0.0
    %439 = vmatmul.mubr.f32.gmra.mxu0 %v165
    %v440 = vpop.f32.mrf.mxu0
    %v441 = vadd.f32 0.0, %v440
    %v442 = vpop.f32.mrf.mxu0
    %443 = vmatprep.mubr.f32.mxu0 0.0
    %444 = vmatmul.mubr.f32.gmra.mxu0 %v168
    %v445 = vpop.f32.mrf.mxu0
    %v446 = vadd.f32 0.0, %v445
    %v447 = vpop.f32.mrf.mxu0
    %448 = vmatprep.mubr.f32.mxu0 0.0
    %449 = vmatmul.mubr.f32.gmra.mxu0 %v171
    %v450 = vpop.f32.mrf.mxu0
    %v451 = vadd.f32 0.0, %v450
    %v452 = vpop.f32.mrf.mxu0
    %453 = vmatprep.mubr.f32.mxu0 0.0
    %454 = vmatmul.mubr.f32.gmra.mxu0 %v174
    %v455 = vpop.f32.mrf.mxu0
    %v456 = vadd.f32 0.0, %v455
    %v457 = vpop.f32.mrf.mxu0
    %458 = vmatprep.mubr.f32.mxu0 0.0
    %459 = vmatmul.mubr.f32.gmra.mxu0 %v177
    %v460 = vpop.f32.mrf.mxu0
    %v461 = vadd.f32 0.0, %v460
    %v462 = vpop.f32.mrf.mxu0
    %463 = vmatprep.mubr.f32.mxu0 0.0
    %464 = vmatmul.mubr.f32.gmra.mxu0 %v180
    %v465 = vpop.f32.mrf.mxu0
    %v466 = vadd.f32 0.0, %v465
    %v467 = vpop.f32.mrf.mxu0
    %468 = vmatprep.mubr.f32.mxu0 0.0
    %469 = vmatmul.mubr.f32.gmra.mxu0 %v183
    %v470 = vpop.f32.mrf.mxu0
    %v471 = vadd.f32 0.0, %v470
    %v472 = vpop.f32.mrf.mxu0
    %473 = vmatprep.mubr.f32.mxu0 0.0
    %474 = vmatmul.mubr.f32.gmra.mxu0 %v186
    %v475 = vpop.f32.mrf.mxu0
    %v476 = vadd.f32 0.0, %v475
    %v477 = vpop.f32.mrf.mxu0
    %478 = vmatprep.mubr.f32.mxu0 0.0
    %479 = vmatmul.mubr.f32.gmra.mxu0 %v189
    %v480 = vpop.f32.mrf.mxu0
    %v481 = vadd.f32 0.0, %v480
    %v482 = vpop.f32.mrf.mxu0
    %483 = vmatprep.mubr.f32.mxu0 0.0
    %484 = vmatmul.mubr.f32.gmra.mxu0 %v192
    %v485 = vpop.f32.mrf.mxu0
    %v486 = vadd.f32 0.0, %v485
    %v487 = vpop.f32.mrf.mxu0
    %488 = vmatprep.mubr.f32.mxu0 0.0
    %489 = vmatmul.mubr.f32.gmra.mxu0 %v195
    %v490 = vpop.f32.mrf.mxu0
    %v491 = vadd.f32 0.0, %v490
    %v492 = vpop.f32.mrf.mxu0
    %493 = vmatprep.mubr.f32.mxu0 0.0
    %494 = vmatmul.mubr.f32.gmra.mxu0 %v198
    %v495 = vpop.f32.mrf.mxu0
    %v496 = vadd.f32 0.0, %v495
    %v497 = vpop.f32.mrf.mxu0
    %498 = vmatprep.mubr.f32.mxu0 0.0
    %499 = vmatmul.mubr.f32.gmra.mxu0 %v201
    %v500 = vpop.f32.mrf.mxu0
    %v501 = vadd.f32 0.0, %v500
    %v502 = vpop.f32.mrf.mxu0
    %503 = vmatprep.mubr.f32.mxu0 0.0
    %504 = vmatmul.mubr.f32.gmra.mxu0 %v204
    %v505 = vpop.f32.mrf.mxu0
    %v506 = vadd.f32 0.0, %v505
    %v507 = vpop.f32.mrf.mxu0
    %508 = vmatprep.mubr.f32.mxu0 0.0
    %509 = vmatmul.mubr.f32.gmra.mxu0 %v207
    %v510 = vpop.f32.mrf.mxu0
    %v511 = vadd.f32 0.0, %v510
    %v512 = vpop.f32.mrf.mxu0
    %513 = vmatprep.mubr.f32.mxu0 0.0
    %514 = vmatmul.mubr.f32.gmra.mxu0 %v210
    %v515 = vpop.f32.mrf.mxu0
    %v516 = vadd.f32 0.0, %v515
    %v517 = vpop.f32.mrf.mxu0
    %518 = vmatprep.mubr.f32.mxu0 0.0
    %519 = vmatmul.mubr.f32.gmra.mxu0 %v213
    %v520 = vpop.f32.mrf.mxu0
    %v521 = vadd.f32 0.0, %v520
    %v522 = vpop.f32.mrf.mxu0
    %523 = vmatprep.mubr.f32.mxu0 0.0
    %524 = vmatmul.mubr.f32.gmra.mxu0 %v216
    %v525 = vpop.f32.mrf.mxu0
    %v526 = vadd.f32 0.0, %v525
    %v527 = vpop.f32.mrf.mxu0
    %528 = vmatprep.mubr.f32.mxu0 0.0
    %529 = vmatmul.mubr.f32.gmra.mxu0 %v219
    %v530 = vpop.f32.mrf.mxu0
    %v531 = vadd.f32 0.0, %v530
    %v532 = vpop.f32.mrf.mxu0
    %533 = vmatprep.mubr.f32.mxu0 0.0
    %534 = vmatmul.mubr.f32.gmra.mxu0 %v222
    %v535 = vpop.f32.mrf.mxu0
    %v536 = vadd.f32 0.0, %v535
    %v537 = vpop.f32.mrf.mxu0
    %538 = vmatprep.mubr.f32.mxu0 0.0
    %539 = vmatmul.mubr.f32.gmra.mxu0 %v225
    %v540 = vpop.f32.mrf.mxu0
    %v541 = vadd.f32 0.0, %v540
    %v542 = vpop.f32.mrf.mxu0
    %543 = vmatprep.mubr.f32.mxu0 0.0
    %544 = vmatmul.mubr.f32.gmra.mxu0 %v228
    %v545 = vpop.f32.mrf.mxu0
    %v546 = vadd.f32 0.0, %v545
    %v547 = vpop.f32.mrf.mxu0
    %548 = vmatprep.mubr.f32.mxu0 0.0
    %549 = vmatmul.mubr.f32.gmra.mxu0 %v231
    %v550 = vpop.f32.mrf.mxu0
    %v551 = vadd.f32 0.0, %v550
    %v552 = vpop.f32.mrf.mxu0
    %553 = vmatprep.mubr.f32.mxu0 0.0
    %554 = vmatmul.mubr.f32.gmra.mxu0 %v234
    %v555 = vpop.f32.mrf.mxu0
    %v556 = vadd.f32 0.0, %v555
    %v557 = vpop.f32.mrf.mxu0
    %558 = vmatprep.mubr.f32.mxu0 0.0
    %559 = vmatmul.mubr.f32.gmra.mxu0 %v237
    %v560 = vpop.f32.mrf.mxu0
    %v561 = vadd.f32 0.0, %v560
    %v562 = vpop.f32.mrf.mxu0
    %563 = vmatprep.mubr.f32.mxu0 0.0
    %564 = vmatmul.mubr.f32.gmra.mxu0 %v240
    %v565 = vpop.f32.mrf.mxu0
    %v566 = vadd.f32 0.0, %v565
    %v567 = vpop.f32.mrf.mxu0
    %568 = vmatprep.mubr.f32.mxu0 0.0
    %569 = vmatmul.mubr.f32.gmra.mxu0 %v243
    %v570 = vpop.f32.mrf.mxu0
    %v571 = vadd.f32 0.0, %v570
    %v572 = vpop.f32.mrf.mxu0
    %573 = vmatprep.mubr.f32.mxu0 0.0
    %574 = vmatmul.mubr.f32.gmra.mxu0 %v246
    %v575 = vpop.f32.mrf.mxu0
    %v576 = vadd.f32 0.0, %v575
    %v577 = vpop.f32.mrf.mxu0
    %578 = vmatprep.mubr.f32.mxu0 0.0
    %579 = vmatmul.mubr.f32.gmra.mxu0 %v249
    %v580 = vpop.f32.mrf.mxu0
    %v581 = vadd.f32 0.0, %v580
    %v582 = vpop.f32.mrf.mxu0
    %583 = vmatprep.mubr.f32.mxu0 0.0
    %584 = vmatmul.mubr.f32.gmra.mxu0 %v252
    %v585 = vpop.f32.mrf.mxu0
    %v586 = vadd.f32 0.0, %v585
    %v587 = vpop.f32.mrf.mxu0
    %588 = vmatprep.mubr.f32.mxu0 0.0
    %589 = vmatmul.mubr.f32.gmra.mxu0 %v255
    %v590 = vpop.f32.mrf.mxu0
    %v591 = vadd.f32 0.0, %v590
    %v592 = vpop.f32.mrf.mxu0
    %593 = vmatprep.mubr.f32.mxu0 0.0
    %594 = vmatmul.mubr.f32.gmra.mxu0 %v258
    %v595 = vpop.f32.mrf.mxu0
    %v596 = vadd.f32 0.0, %v595
    %v597 = vpop.f32.mrf.mxu0
    %598 = vmatprep.mubr.f32.mxu0 0.0
    %599 = vmatmul.mubr.f32.gmra.mxu0 %v261
    %v600 = vpop.f32.mrf.mxu0
    %v601 = vadd.f32 0.0, %v600
    %v602 = vpop.f32.mrf.mxu0
    %603 = vmatprep.mubr.f32.mxu0 0.0
    %604 = vmatmul.mubr.f32.gmra.mxu0 %v264
    %v605 = vpop.f32.mrf.mxu0
    %v606 = vadd.f32 0.0, %v605
    %v607 = vpop.f32.mrf.mxu0
    %608 = vmatprep.mubr.f32.mxu0 0.0
    %609 = vmatmul.mubr.f32.gmra.mxu0 %v267
    %v610 = vpop.f32.mrf.mxu0
    %v611 = vadd.f32 0.0, %v610
    %v612 = vpop.f32.mrf.mxu0
    %613 = vmatprep.mubr.f32.mxu0 0.0
    %614 = vmatmul.mubr.f32.gmra.mxu0 %v270
    %v615 = vpop.f32.mrf.mxu0
    %v616 = vadd.f32 0.0, %v615
    %v617 = vpop.f32.mrf.mxu0
    %618 = vmatprep.mubr.f32.mxu0 0.0
    %619 = vmatmul.mubr.f32.gmra.mxu0 %v273
    %v620 = vpop.f32.mrf.mxu0
    %v621 = vadd.f32 0.0, %v620
    %v622 = vpop.f32.mrf.mxu0
    %623 = vmatprep.mubr.f32.mxu0 0.0
    %624 = vmatmul.mubr.f32.gmra.mxu0 %v276
    %v625 = vpop.f32.mrf.mxu0
    %v626 = vadd.f32 0.0, %v625
    %v627 = vpop.f32.mrf.mxu0
    %628 = vmatprep.mubr.f32.mxu0 0.0
    %629 = vmatmul.mubr.f32.gmra.mxu0 %v279
    %v630 = vpop.f32.mrf.mxu0
    %v631 = vadd.f32 0.0, %v630
    %v632 = vpop.f32.mrf.mxu0
    %633 = vmatprep.mubr.f32.mxu0 0.0
    %634 = vmatmul.mubr.f32.gmra.mxu0 %v282
    %v635 = vpop.f32.mrf.mxu0
    %v636 = vadd.f32 0.0, %v635
    %v637 = vpop.f32.mrf.mxu0
    %638 = vmatprep.mubr.f32.mxu0 0.0
    %639 = vmatmul.mubr.f32.gmra.mxu0 %v285
    %v640 = vpop.f32.mrf.mxu0
    %v641 = vadd.f32 0.0, %v640
    %v642 = vpop.f32.mrf.mxu0
    %643 = vmatprep.mubr.f32.mxu0 0.0
    %644 = vmatmul.mubr.f32.gmra.mxu0 %v288
    %v645 = vpop.f32.mrf.mxu0
    %v646 = vadd.f32 0.0, %v645
    %v647 = vpop.f32.mrf.mxu0
    %648 = vmatprep.mubr.f32.mxu0 0.0
    %649 = vmatmul.mubr.f32.gmra.mxu0 %v291
    %v650 = vpop.f32.mrf.mxu0
    %v651 = vadd.f32 0.0, %v650
    %v652 = vpop.f32.mrf.mxu0
    %653 = vmatprep.mubr.f32.mxu0 0.0
    %654 = vmatmul.mubr.f32.gmra.mxu0 %v294
    %v655 = vpop.f32.mrf.mxu0
    %v656 = vadd.f32 0.0, %v655
    %v657 = vpop.f32.mrf.mxu0
    %658 = vmatprep.mubr.f32.mxu0 0.0
    %659 = vmatmul.mubr.f32.gmra.mxu0 %v297
    %v660 = vpop.f32.mrf.mxu0
    %v661 = vadd.f32 0.0, %v660
    %v662 = vpop.f32.mrf.mxu0
    %663 = vmatprep.mubr.f32.mxu0 0.0
    %664 = vmatmul.mubr.f32.gmra.mxu0 %v300
    %v665 = vpop.f32.mrf.mxu0
    %v666 = vadd.f32 0.0, %v665
    %v667 = vpop.f32.mrf.mxu0
    %668 = vmatprep.mubr.f32.mxu0 0.0
    %669 = vmatmul.mubr.f32.gmra.mxu0 %v303
    %v670 = vpop.f32.mrf.mxu0
    %v671 = vadd.f32 0.0, %v670
    %v672 = vpop.f32.mrf.mxu0
    %673 = vmatprep.mubr.f32.mxu0 0.0
    %674 = vmatmul.mubr.f32.gmra.mxu0 %v306
    %v675 = vpop.f32.mrf.mxu0
    %v676 = vadd.f32 0.0, %v675
    %v677 = vpop.f32.mrf.mxu0
    %678 = vmatprep.mubr.f32.mxu0 0.0
    %679 = vmatmul.mubr.f32.gmra.mxu0 %v309
    %v680 = vpop.f32.mrf.mxu0
    %v681 = vadd.f32 0.0, %v680
    %v682 = vpop.f32.mrf.mxu0
    %683 = vmatprep.mubr.f32.mxu0 0.0
    %684 = vmatmul.mubr.f32.gmra.mxu0 %v312
    %v685 = vpop.f32.mrf.mxu0
    %v686 = vadd.f32 0.0, %v685
    %v687 = vpop.f32.mrf.mxu0
    %688 = vmatprep.mubr.f32.mxu0 0.0
    %689 = vmatmul.mubr.f32.gmra.mxu0 %v315
    %v690 = vpop.f32.mrf.mxu0
    %v691 = vadd.f32 0.0, %v690
    %v692 = vpop.f32.mrf.mxu0
    %693 = vmatprep.mubr.f32.mxu0 0.0
    %694 = vmatmul.mubr.f32.gmra.mxu0 %v318
    %v695 = vpop.f32.mrf.mxu0
    %v696 = vadd.f32 0.0, %v695
    %v697 = vpop.f32.mrf.mxu0
    %698 = vmatprep.mubr.f32.mxu0 0.0
    %699 = vmatmul.mubr.f32.gmra.mxu0 %v321
    %v700 = vpop.f32.mrf.mxu0
    %v701 = vadd.f32 0.0, %v700
    %v702 = vpop.f32.mrf.mxu0
    %703 = vmatprep.mubr.f32.mxu0 0.0
    %704 = vmatmul.mubr.f32.gmra.mxu0 %v324
    %v705 = vpop.f32.mrf.mxu0
    %v706 = vadd.f32 0.0, %v705
    %v707 = vpop.f32.mrf.mxu0
    %708 = vmatprep.mubr.f32.mxu0 0.0
    %709 = vmatmul.mubr.f32.gmra.mxu0 %v327
    %v710 = vpop.f32.mrf.mxu0
    %v711 = vadd.f32 0.0, %v710
    %v712 = vpop.f32.mrf.mxu0
    %713 = vmatprep.mubr.f32.mxu0 0.0
    %714 = vmatmul.mubr.f32.gmra.mxu0 %v330
    %v715 = vpop.f32.mrf.mxu0
    %v716 = vadd.f32 0.0, %v715
    %v717 = vpop.f32.mrf.mxu0
    %718 = vmatprep.mubr.f32.mxu0 0.0
    %719 = vmatmul.mubr.f32.gmra.mxu0 %v333
    %v720 = vpop.f32.mrf.mxu0
    %v721 = vadd.f32 0.0, %v720
    %v722 = vpop.f32.mrf.mxu0
    %723 = vdwg.mxu0
    %v725 = vsel %vm142, %v12, 0
    %v728 = vsel %vm142, %v13, 0
    %v731 = vsel %vm142, %v14, 0
    %v734 = vsel %vm142, %v15, 0
    %v737 = vsel %vm142, %v16, 0
    %v740 = vsel %vm142, %v17, 0
    %v743 = vsel %vm142, %v18, 0
    %v746 = vsel %vm142, %v19, 0
    %v749 = vsel %vm142, %v20, 0
    %v752 = vsel %vm142, %v21, 0
    %v755 = vsel %vm142, %v22, 0
    %v758 = vsel %vm142, %v23, 0
    %v761 = vsel %vm142, %v24, 0
    %v764 = vsel %vm142, %v25, 0
    %v767 = vsel %vm142, %v26, 0
    %v770 = vsel %vm142, %v27, 0
    %v773 = vsel %vm142, %v28, 0
    %v776 = vsel %vm142, %v29, 0
    %v779 = vsel %vm142, %v30, 0
    %v782 = vsel %vm142, %v31, 0
    %v785 = vsel %vm142, %v32, 0
    %v788 = vsel %vm142, %v33, 0
    %v791 = vsel %vm142, %v34, 0
    %v794 = vsel %vm142, %v35, 0
    %v797 = vsel %vm142, %v36, 0
    %v800 = vsel %vm142, %v37, 0
    %v803 = vsel %vm142, %v38, 0
    %v806 = vsel %vm142, %v39, 0
    %v809 = vsel %vm142, %v40, 0
    %v812 = vsel %vm142, %v41, 0
    %v815 = vsel %vm142, %v42, 0
    %v818 = vsel %vm142, %v43, 0
    %v821 = vsel %vm142, %v44, 0
    %v824 = vsel %vm142, %v45, 0
    %v827 = vsel %vm142, %v46, 0
    %v830 = vsel %vm142, %v47, 0
    %v833 = vsel %vm142, %v48, 0
    %v836 = vsel %vm142, %v49, 0
    %v839 = vsel %vm142, %v50, 0
    %v842 = vsel %vm142, %v51, 0
    %v845 = vsel %vm142, %v52, 0
    %v848 = vsel %vm142, %v53, 0
    %v851 = vsel %vm142, %v54, 0
    %v854 = vsel %vm142, %v55, 0
    %v857 = vsel %vm142, %v56, 0
    %v860 = vsel %vm142, %v57, 0
    %v863 = vsel %vm142, %v58, 0
    %v866 = vsel %vm142, %v59, 0
    %v869 = vsel %vm142, %v60, 0
    %v872 = vsel %vm142, %v61, 0
    %v875 = vsel %vm142, %v62, 0
    %v878 = vsel %vm142, %v63, 0
    %v881 = vsel %vm142, %v64, 0
    %v884 = vsel %vm142, %v65, 0
    %v887 = vsel %vm142, %v66, 0
    %v890 = vsel %vm142, %v67, 0
    %v893 = vsel %vm142, %v68, 0
    %v896 = vsel %vm142, %v69, 0
    %v899 = vsel %vm142, %v70, 0
    %v902 = vsel %vm142, %v71, 0
    %v905 = vsel %vm142, %v72, 0
    %v908 = vsel %vm142, %v73, 0
    %v911 = vsel %vm142, %v74, 0
    %v914 = vsel %vm142, %v75, 0
    %v917 = vsel %vm335, %v76, 0
    %919 = vmatprep.subr.mxu0 0.0
    %920 = vmatpush1.msra.mxu0 0.0
    %921 = vmatprep.subr.mxu0 0.0
    %922 = vmatpush1.msra.mxu0 0.0
    %923 = vmatprep.subr.mxu0 0.0
    %924 = vmatpush1.msra.mxu0 0.0
    %925 = vmatprep.subr.mxu0 0.0
    %926 = vmatpush1.msra.mxu0 0.0
    %927 = vmatprep.subr.mxu0 0.0
    %928 = vmatpush1.msra.mxu0 0.0
    %929 = vmatprep.subr.mxu0 0.0
    %930 = vmatpush1.msra.mxu0 0.0
    %931 = vmatprep.subr.mxu0 0.0
    %932 = vmatpush1.msra.mxu0 0.0
    %933 = vmatprep.subr.mxu0 0.0
    %934 = vmatpush1.msra.mxu0 0.0
    %935 = vmatprep.subr.mxu0 0.0
    %936 = vmatpush1.msra.mxu0 0.0
    %937 = vmatprep.subr.mxu0 0.0
    %938 = vmatpush1.msra.mxu0 0.0
    %939 = vmatprep.subr.mxu0 0.0
    %940 = vmatpush1.msra.mxu0 0.0
    %941 = vmatprep.subr.mxu0 0.0
    %942 = vmatpush1.msra.mxu0 0.0
    %943 = vmatprep.subr.mxu0 0.0
    %944 = vmatpush1.msra.mxu0 0.0
    %945 = vmatprep.subr.mxu0 0.0
    %946 = vmatpush1.msra.mxu0 0.0
    %947 = vmatprep.subr.mxu0 0.0
    %948 = vmatpush1.msra.mxu0 0.0
    %949 = vmatprep.subr.mxu0 0.0
    %950 = vmatpush1.msra.mxu0 %v917
    %951 = vmatprep.subr.mxu0 0.0
    %952 = vmatpush2.msra.mxu0 0.0
    %953 = vmatprep.subr.mxu0 0.0
    %954 = vmatpush2.msra.mxu0 0.0
    %955 = vmatprep.subr.mxu0 0.0
    %956 = vmatpush2.msra.mxu0 0.0
    %957 = vmatprep.subr.mxu0 0.0
    %958 = vmatpush2.msra.mxu0 0.0
    %959 = vmatprep.subr.mxu0 0.0
    %960 = vmatpush2.msra.mxu0 0.0
    %961 = vmatprep.subr.mxu0 0.0
    %962 = vmatpush2.msra.mxu0 0.0
    %963 = vmatprep.subr.mxu0 0.0
    %964 = vmatpush2.msra.mxu0 0.0
    %965 = vmatprep.subr.mxu0 0.0
    %966 = vmatpush2.msra.mxu0 0.0
    %967 = vmatprep.subr.mxu0 0.0
    %968 = vmatpush2.msra.mxu0 0.0
    %969 = vmatprep.subr.mxu0 0.0
    %970 = vmatpush2.msra.mxu0 0.0
    %971 = vmatprep.subr.mxu0 0.0
    %972 = vmatpush2.msra.mxu0 0.0
    %973 = vmatprep.subr.mxu0 0.0
    %974 = vmatpush2.msra.mxu0 0.0
    %975 = vmatprep.subr.mxu0 0.0
    %976 = vmatpush2.msra.mxu0 0.0
    %977 = vmatprep.subr.mxu0 0.0
    %978 = vmatpush2.msra.mxu0 0.0
    %979 = vmatprep.subr.mxu0 0.0
    %980 = vmatpush2.msra.mxu0 0.0
    %981 = vmatprep.subr.mxu0 0.0
    %982 = vmatpush2.msra.mxu0 0.0
    %983 = vmatprep.mubr.f32.mxu0 0.0
    %984 = vmatmul.mubr.f32.gmra.mxu0 %v725
    %v985 = vpop.f32.mrf.mxu0
    %v986 = vadd.f32 %v406, %v985
    %v987 = vpop.f32.mrf.mxu0
    %988 = vmatprep.mubr.f32.mxu0 0.0
    %989 = vmatmul.mubr.f32.gmra.mxu0 %v728
    %v990 = vpop.f32.mrf.mxu0
    %v991 = vadd.f32 %v411, %v990
    %v992 = vpop.f32.mrf.mxu0
    %993 = vmatprep.mubr.f32.mxu0 0.0
    %994 = vmatmul.mubr.f32.gmra.mxu0 %v731
    %v995 = vpop.f32.mrf.mxu0
    %v996 = vadd.f32 %v416, %v995
    %v997 = vpop.f32.mrf.mxu0
    %998 = vmatprep.mubr.f32.mxu0 0.0
    %999 = vmatmul.mubr.f32.gmra.mxu0 %v734
    %v1000 = vpop.f32.mrf.mxu0
    %v1001 = vadd.f32 %v421, %v1000
    %v1002 = vpop.f32.mrf.mxu0
    %1003 = vmatprep.mubr.f32.mxu0 0.0
    %1004 = vmatmul.mubr.f32.gmra.mxu0 %v737
    %v1005 = vpop.f32.mrf.mxu0
    %v1006 = vadd.f32 %v426, %v1005
    %v1007 = vpop.f32.mrf.mxu0
    %1008 = vmatprep.mubr.f32.mxu0 0.0
    %1009 = vmatmul.mubr.f32.gmra.mxu0 %v740
    %v1010 = vpop.f32.mrf.mxu0
    %v1011 = vadd.f32 %v431, %v1010
    %v1012 = vpop.f32.mrf.mxu0
    %1013 = vmatprep.mubr.f32.mxu0 0.0
    %1014 = vmatmul.mubr.f32.gmra.mxu0 %v743
    %v1015 = vpop.f32.mrf.mxu0
    %v1016 = vadd.f32 %v436, %v1015
    %v1017 = vpop.f32.mrf.mxu0
    %1018 = vmatprep.mubr.f32.mxu0 0.0
    %1019 = vmatmul.mubr.f32.gmra.mxu0 %v746
    %v1020 = vpop.f32.mrf.mxu0
    %v1021 = vadd.f32 %v441, %v1020
    %v1022 = vpop.f32.mrf.mxu0
    %1023 = vmatprep.mubr.f32.mxu0 0.0
    %1024 = vmatmul.mubr.f32.gmra.mxu0 %v749
    %v1025 = vpop.f32.mrf.mxu0
    %v1026 = vadd.f32 %v446, %v1025
    %v1027 = vpop.f32.mrf.mxu0
    %1028 = vmatprep.mubr.f32.mxu0 0.0
    %1029 = vmatmul.mubr.f32.gmra.mxu0 %v752
    %v1030 = vpop.f32.mrf.mxu0
    %v1031 = vadd.f32 %v451, %v1030
    %v1032 = vpop.f32.mrf.mxu0
    %1033 = vmatprep.mubr.f32.mxu0 0.0
    %1034 = vmatmul.mubr.f32.gmra.mxu0 %v755
    %v1035 = vpop.f32.mrf.mxu0
    %v1036 = vadd.f32 %v456, %v1035
    %v1037 = vpop.f32.mrf.mxu0
    %1038 = vmatprep.mubr.f32.mxu0 0.0
    %1039 = vmatmul.mubr.f32.gmra.mxu0 %v758
    %v1040 = vpop.f32.mrf.mxu0
    %v1041 = vadd.f32 %v461, %v1040
    %v1042 = vpop.f32.mrf.mxu0
    %1043 = vmatprep.mubr.f32.mxu0 0.0
    %1044 = vmatmul.mubr.f32.gmra.mxu0 %v761
    %v1045 = vpop.f32.mrf.mxu0
    %v1046 = vadd.f32 %v466, %v1045
    %v1047 = vpop.f32.mrf.mxu0
    %1048 = vmatprep.mubr.f32.mxu0 0.0
    %1049 = vmatmul.mubr.f32.gmra.mxu0 %v764
    %v1050 = vpop.f32.mrf.mxu0
    %v1051 = vadd.f32 %v471, %v1050
    %v1052 = vpop.f32.mrf.mxu0
    %1053 = vmatprep.mubr.f32.mxu0 0.0
    %1054 = vmatmul.mubr.f32.gmra.mxu0 %v767
    %v1055 = vpop.f32.mrf.mxu0
    %v1056 = vadd.f32 %v476, %v1055
    %v1057 = vpop.f32.mrf.mxu0
    %1058 = vmatprep.mubr.f32.mxu0 0.0
    %1059 = vmatmul.mubr.f32.gmra.mxu0 %v770
    %v1060 = vpop.f32.mrf.mxu0
    %v1061 = vadd.f32 %v481, %v1060
    %v1062 = vpop.f32.mrf.mxu0
    %1063 = vmatprep.mubr.f32.mxu0 0.0
    %1064 = vmatmul.mubr.f32.gmra.mxu0 %v773
    %v1065 = vpop.f32.mrf.mxu0
    %v1066 = vadd.f32 %v486, %v1065
    %v1067 = vpop.f32.mrf.mxu0
    %1068 = vmatprep.mubr.f32.mxu0 0.0
    %1069 = vmatmul.mubr.f32.gmra.mxu0 %v776
    %v1070 = vpop.f32.mrf.mxu0
    %v1071 = vadd.f32 %v491, %v1070
    %v1072 = vpop.f32.mrf.mxu0
    %1073 = vmatprep.mubr.f32.mxu0 0.0
    %1074 = vmatmul.mubr.f32.gmra.mxu0 %v779
    %v1075 = vpop.f32.mrf.mxu0
    %v1076 = vadd.f32 %v496, %v1075
    %v1077 = vpop.f32.mrf.mxu0
    %1078 = vmatprep.mubr.f32.mxu0 0.0
    %1079 = vmatmul.mubr.f32.gmra.mxu0 %v782
    %v1080 = vpop.f32.mrf.mxu0
    %v1081 = vadd.f32 %v501, %v1080
    %v1082 = vpop.f32.mrf.mxu0
    %1083 = vmatprep.mubr.f32.mxu0 0.0
    %1084 = vmatmul.mubr.f32.gmra.mxu0 %v785
    %v1085 = vpop.f32.mrf.mxu0
    %v1086 = vadd.f32 %v506, %v1085
    %v1087 = vpop.f32.mrf.mxu0
    %1088 = vmatprep.mubr.f32.mxu0 0.0
    %1089 = vmatmul.mubr.f32.gmra.mxu0 %v788
    %v1090 = vpop.f32.mrf.mxu0
    %v1091 = vadd.f32 %v511, %v1090
    %v1092 = vpop.f32.mrf.mxu0
    %1093 = vmatprep.mubr.f32.mxu0 0.0
    %1094 = vmatmul.mubr.f32.gmra.mxu0 %v791
    %v1095 = vpop.f32.mrf.mxu0
    %v1096 = vadd.f32 %v516, %v1095
    %v1097 = vpop.f32.mrf.mxu0
    %1098 = vmatprep.mubr.f32.mxu0 0.0
    %1099 = vmatmul.mubr.f32.gmra.mxu0 %v794
    %v1100 = vpop.f32.mrf.mxu0
    %v1101 = vadd.f32 %v521, %v1100
    %v1102 = vpop.f32.mrf.mxu0
    %1103 = vmatprep.mubr.f32.mxu0 0.0
    %1104 = vmatmul.mubr.f32.gmra.mxu0 %v797
    %v1105 = vpop.f32.mrf.mxu0
    %v1106 = vadd.f32 %v526, %v1105
    %v1107 = vpop.f32.mrf.mxu0
    %1108 = vmatprep.mubr.f32.mxu0 0.0
    %1109 = vmatmul.mubr.f32.gmra.mxu0 %v800
    %v1110 = vpop.f32.mrf.mxu0
    %v1111 = vadd.f32 %v531, %v1110
    %v1112 = vpop.f32.mrf.mxu0
    %1113 = vmatprep.mubr.f32.mxu0 0.0
    %1114 = vmatmul.mubr.f32.gmra.mxu0 %v803
    %v1115 = vpop.f32.mrf.mxu0
    %v1116 = vadd.f32 %v536, %v1115
    %v1117 = vpop.f32.mrf.mxu0
    %1118 = vmatprep.mubr.f32.mxu0 0.0
    %1119 = vmatmul.mubr.f32.gmra.mxu0 %v806
    %v1120 = vpop.f32.mrf.mxu0
    %v1121 = vadd.f32 %v541, %v1120
    %v1122 = vpop.f32.mrf.mxu0
    %1123 = vmatprep.mubr.f32.mxu0 0.0
    %1124 = vmatmul.mubr.f32.gmra.mxu0 %v809
    %v1125 = vpop.f32.mrf.mxu0
    %v1126 = vadd.f32 %v546, %v1125
    %v1127 = vpop.f32.mrf.mxu0
    %1128 = vmatprep.mubr.f32.mxu0 0.0
    %1129 = vmatmul.mubr.f32.gmra.mxu0 %v812
    %v1130 = vpop.f32.mrf.mxu0
    %v1131 = vadd.f32 %v551, %v1130
    %v1132 = vpop.f32.mrf.mxu0
    %1133 = vmatprep.mubr.f32.mxu0 0.0
    %1134 = vmatmul.mubr.f32.gmra.mxu0 %v815
    %v1135 = vpop.f32.mrf.mxu0
    %v1136 = vadd.f32 %v556, %v1135
    %v1137 = vpop.f32.mrf.mxu0
    %1138 = vmatprep.mubr.f32.mxu0 0.0
    %1139 = vmatmul.mubr.f32.gmra.mxu0 %v818
    %v1140 = vpop.f32.mrf.mxu0
    %v1141 = vadd.f32 %v561, %v1140
    %v1142 = vpop.f32.mrf.mxu0
    %1143 = vmatprep.mubr.f32.mxu0 0.0
    %1144 = vmatmul.mubr.f32.gmra.mxu0 %v821
    %v1145 = vpop.f32.mrf.mxu0
    %v1146 = vadd.f32 %v566, %v1145
    %v1147 = vpop.f32.mrf.mxu0
    %1148 = vmatprep.mubr.f32.mxu0 0.0
    %1149 = vmatmul.mubr.f32.gmra.mxu0 %v824
    %v1150 = vpop.f32.mrf.mxu0
    %v1151 = vadd.f32 %v571, %v1150
    %v1152 = vpop.f32.mrf.mxu0
    %1153 = vmatprep.mubr.f32.mxu0 0.0
    %1154 = vmatmul.mubr.f32.gmra.mxu0 %v827
    %v1155 = vpop.f32.mrf.mxu0
    %v1156 = vadd.f32 %v576, %v1155
    %v1157 = vpop.f32.mrf.mxu0
    %1158 = vmatprep.mubr.f32.mxu0 0.0
    %1159 = vmatmul.mubr.f32.gmra.mxu0 %v830
    %v1160 = vpop.f32.mrf.mxu0
    %v1161 = vadd.f32 %v581, %v1160
    %v1162 = vpop.f32.mrf.mxu0
    %1163 = vmatprep.mubr.f32.mxu0 0.0
    %1164 = vmatmul.mubr.f32.gmra.mxu0 %v833
    %v1165 = vpop.f32.mrf.mxu0
    %v1166 = vadd.f32 %v586, %v1165
    %v1167 = vpop.f32.mrf.mxu0
    %1168 = vmatprep.mubr.f32.mxu0 0.0
    %1169 = vmatmul.mubr.f32.gmra.mxu0 %v836
    %v1170 = vpop.f32.mrf.mxu0
    %v1171 = vadd.f32 %v591, %v1170
    %v1172 = vpop.f32.mrf.mxu0
    %1173 = vmatprep.mubr.f32.mxu0 0.0
    %1174 = vmatmul.mubr.f32.gmra.mxu0 %v839
    %v1175 = vpop.f32.mrf.mxu0
    %v1176 = vadd.f32 %v596, %v1175
    %v1177 = vpop.f32.mrf.mxu0
    %1178 = vmatprep.mubr.f32.mxu0 0.0
    %1179 = vmatmul.mubr.f32.gmra.mxu0 %v842
    %v1180 = vpop.f32.mrf.mxu0
    %v1181 = vadd.f32 %v601, %v1180
    %v1182 = vpop.f32.mrf.mxu0
    %1183 = vmatprep.mubr.f32.mxu0 0.0
    %1184 = vmatmul.mubr.f32.gmra.mxu0 %v845
    %v1185 = vpop.f32.mrf.mxu0
    %v1186 = vadd.f32 %v606, %v1185
    %v1187 = vpop.f32.mrf.mxu0
    %1188 = vmatprep.mubr.f32.mxu0 0.0
    %1189 = vmatmul.mubr.f32.gmra.mxu0 %v848
    %v1190 = vpop.f32.mrf.mxu0
    %v1191 = vadd.f32 %v611, %v1190
    %v1192 = vpop.f32.mrf.mxu0
    %1193 = vmatprep.mubr.f32.mxu0 0.0
    %1194 = vmatmul.mubr.f32.gmra.mxu0 %v851
    %v1195 = vpop.f32.mrf.mxu0
    %v1196 = vadd.f32 %v616, %v1195
    %v1197 = vpop.f32.mrf.mxu0
    %1198 = vmatprep.mubr.f32.mxu0 0.0
    %1199 = vmatmul.mubr.f32.gmra.mxu0 %v854
    %v1200 = vpop.f32.mrf.mxu0
    %v1201 = vadd.f32 %v621, %v1200
    %v1202 = vpop.f32.mrf.mxu0
    %1203 = vmatprep.mubr.f32.mxu0 0.0
    %1204 = vmatmul.mubr.f32.gmra.mxu0 %v857
    %v1205 = vpop.f32.mrf.mxu0
    %v1206 = vadd.f32 %v626, %v1205
    %v1207 = vpop.f32.mrf.mxu0
    %1208 = vmatprep.mubr.f32.mxu0 0.0
    %1209 = vmatmul.mubr.f32.gmra.mxu0 %v860
    %v1210 = vpop.f32.mrf.mxu0
    %v1211 = vadd.f32 %v631, %v1210
    %v1212 = vpop.f32.mrf.mxu0
    %1213 = vmatprep.mubr.f32.mxu0 0.0
    %1214 = vmatmul.mubr.f32.gmra.mxu0 %v863
    %v1215 = vpop.f32.mrf.mxu0
    %v1216 = vadd.f32 %v636, %v1215
    %v1217 = vpop.f32.mrf.mxu0
    %1218 = vmatprep.mubr.f32.mxu0 0.0
    %1219 = vmatmul.mubr.f32.gmra.mxu0 %v866
    %v1220 = vpop.f32.mrf.mxu0
    %v1221 = vadd.f32 %v641, %v1220
    %v1222 = vpop.f32.mrf.mxu0
    %1223 = vmatprep.mubr.f32.mxu0 0.0
    %1224 = vmatmul.mubr.f32.gmra.mxu0 %v869
    %v1225 = vpop.f32.mrf.mxu0
    %v1226 = vadd.f32 %v646, %v1225
    %v1227 = vpop.f32.mrf.mxu0
    %1228 = vmatprep.mubr.f32.mxu0 0.0
    %1229 = vmatmul.mubr.f32.gmra.mxu0 %v872
    %v1230 = vpop.f32.mrf.mxu0
    %v1231 = vadd.f32 %v651, %v1230
    %v1232 = vpop.f32.mrf.mxu0
    %1233 = vmatprep.mubr.f32.mxu0 0.0
    %1234 = vmatmul.mubr.f32.gmra.mxu0 %v875
    %v1235 = vpop.f32.mrf.mxu0
    %v1236 = vadd.f32 %v656, %v1235
    %v1237 = vpop.f32.mrf.mxu0
    %1238 = vmatprep.mubr.f32.mxu0 0.0
    %1239 = vmatmul.mubr.f32.gmra.mxu0 %v878
    %v1240 = vpop.f32.mrf.mxu0
    %v1241 = vadd.f32 %v661, %v1240
    %v1242 = vpop.f32.mrf.mxu0
    %1243 = vmatprep.mubr.f32.mxu0 0.0
    %1244 = vmatmul.mubr.f32.gmra.mxu0 %v881
    %v1245 = vpop.f32.mrf.mxu0
    %v1246 = vadd.f32 %v666, %v1245
    %v1247 = vpop.f32.mrf.mxu0
    %1248 = vmatprep.mubr.f32.mxu0 0.0
    %1249 = vmatmul.mubr.f32.gmra.mxu0 %v884
    %v1250 = vpop.f32.mrf.mxu0
    %v1251 = vadd.f32 %v671, %v1250
    %v1252 = vpop.f32.mrf.mxu0
    %1253 = vmatprep.mubr.f32.mxu0 0.0
    %1254 = vmatmul.mubr.f32.gmra.mxu0 %v887
    %v1255 = vpop.f32.mrf.mxu0
    %v1256 = vadd.f32 %v676, %v1255
    %v1257 = vpop.f32.mrf.mxu0
    %1258 = vmatprep.mubr.f32.mxu0 0.0
    %1259 = vmatmul.mubr.f32.gmra.mxu0 %v890
    %v1260 = vpop.f32.mrf.mxu0
    %v1261 = vadd.f32 %v681, %v1260
    %v1262 = vpop.f32.mrf.mxu0
    %1263 = vmatprep.mubr.f32.mxu0 0.0
    %1264 = vmatmul.mubr.f32.gmra.mxu0 %v893
    %v1265 = vpop.f32.mrf.mxu0
    %v1266 = vadd.f32 %v686, %v1265
    %v1267 = vpop.f32.mrf.mxu0
    %1268 = vmatprep.mubr.f32.mxu0 0.0
    %1269 = vmatmul.mubr.f32.gmra.mxu0 %v896
    %v1270 = vpop.f32.mrf.mxu0
    %v1271 = vadd.f32 %v691, %v1270
    %v1272 = vpop.f32.mrf.mxu0
    %1273 = vmatprep.mubr.f32.mxu0 0.0
    %1274 = vmatmul.mubr.f32.gmra.mxu0 %v899
    %v1275 = vpop.f32.mrf.mxu0
    %v1276 = vadd.f32 %v696, %v1275
    %v1277 = vpop.f32.mrf.mxu0
    %1278 = vmatprep.mubr.f32.mxu0 0.0
    %1279 = vmatmul.mubr.f32.gmra.mxu0 %v902
    %v1280 = vpop.f32.mrf.mxu0
    %v1281 = vadd.f32 %v701, %v1280
    %v1282 = vpop.f32.mrf.mxu0
    %1283 = vmatprep.mubr.f32.mxu0 0.0
    %1284 = vmatmul.mubr.f32.gmra.mxu0 %v905
    %v1285 = vpop.f32.mrf.mxu0
    %v1286 = vadd.f32 %v706, %v1285
    %v1287 = vpop.f32.mrf.mxu0
    %1288 = vmatprep.mubr.f32.mxu0 0.0
    %1289 = vmatmul.mubr.f32.gmra.mxu0 %v908
    %v1290 = vpop.f32.mrf.mxu0
    %v1291 = vadd.f32 %v711, %v1290
    %v1292 = vpop.f32.mrf.mxu0
    %1293 = vmatprep.mubr.f32.mxu0 0.0
    %1294 = vmatmul.mubr.f32.gmra.mxu0 %v911
    %v1295 = vpop.f32.mrf.mxu0
    %v1296 = vadd.f32 %v716, %v1295
    %v1297 = vpop.f32.mrf.mxu0
    %1298 = vmatprep.mubr.f32.mxu0 0.0
    %1299 = vmatmul.mubr.f32.gmra.mxu0 %v914
    %v1300 = vpop.f32.mrf.mxu0
    %v1301 = vadd.f32 %v721, %v1300
    %v1302 = vpop.f32.mrf.mxu0
    %1303 = vdwg.mxu0
    %v1304 = vld [vmem:[%s0 + $0x2] sm:$0xff]
    %v1305 = vld [vmem:[%s0 + $0xa] sm:$0xff]
    %v1306 = vld [vmem:[%s0 + $0x1a] sm:$0xff]
    %v1307 = vld [vmem:[%s0 + $0x22] sm:$0xff]
    %v1308 = vld [vmem:[%s0 + $0x32] sm:$0xff]
    %v1309 = vld [vmem:[%s0 + $0x3a] sm:$0xff]
    %v1310 = vld [vmem:[%s0 + $0x4a] sm:$0xff]
    %v1311 = vld [vmem:[%s0 + $0x52] sm:$0xff]
    %v1312 = vld [vmem:[%s0 + $0x62] sm:$0xff]
    %v1313 = vld [vmem:[%s0 + $0x6a] sm:$0xff]
    %v1314 = vld [vmem:[%s0 + $0x7a] sm:$0xff]
    %v1315 = vld [vmem:[%s0 + $0x82] sm:$0xff]
    %v1316 = vld [vmem:[%s0 + $0x92] sm:$0xff]
    %v1317 = vld [vmem:[%s0 + $0x9a] sm:$0xff]
    %v1318 = vld [vmem:[%s0 + $0xaa] sm:$0xff]
    %v1319 = vld [vmem:[%s0 + $0xb2] sm:$0xff]
    %v1320 = vld [vmem:[%s0 + $0xc2] sm:$0xff]
    %v1321 = vld [vmem:[%s0 + $0xca] sm:$0xff]
    %v1322 = vld [vmem:[%s0 + $0xda] sm:$0xff]
    %v1323 = vld [vmem:[%s0 + $0xe2] sm:$0xff]
    %v1324 = vld [vmem:[%s0 + $0xf2] sm:$0xff]
    %v1325 = vld [vmem:[%s0 + $0xfa] sm:$0xff]
    %v1326 = vld [vmem:[%s0 + $0x10a] sm:$0xff]
    %v1327 = vld [vmem:[%s0 + $0x112] sm:$0xff]
    %v1328 = vld [vmem:[%s0 + $0x122] sm:$0xff]
    %v1329 = vld [vmem:[%s0 + $0x12a] sm:$0xff]
    %v1330 = vld [vmem:[%s0 + $0x13a] sm:$0xff]
    %v1331 = vld [vmem:[%s0 + $0x142] sm:$0xff]
    %v1332 = vld [vmem:[%s0 + $0x152] sm:$0xff]
    %v1333 = vld [vmem:[%s0 + $0x15a] sm:$0xff]
    %v1334 = vld [vmem:[%s0 + $0x16a] sm:$0xff]
    %v1335 = vld [vmem:[%s0 + $0x172] sm:$0xff]
    %v1336 = vld [vmem:[%s0 + $0x1b2] sm:$0xff]
    %v1337 = vld [vmem:[%s0 + $0x1ba] sm:$0xff]
    %v1338 = vld [vmem:[%s0 + $0x1ca] sm:$0xff]
    %v1339 = vld [vmem:[%s0 + $0x1d2] sm:$0xff]
    %v1340 = vld [vmem:[%s0 + $0x1e2] sm:$0xff]
    %v1341 = vld [vmem:[%s0 + $0x1ea] sm:$0xff]
    %v1342 = vld [vmem:[%s0 + $0x1fa] sm:$0xff]
    %v1343 = vld [vmem:[%s0 + $0x202] sm:$0xff]
    %v1344 = vld [vmem:[%s0 + $0x212] sm:$0xff]
    %v1345 = vld [vmem:[%s0 + $0x21a] sm:$0xff]
    %v1346 = vld [vmem:[%s0 + $0x22a] sm:$0xff]
    %v1347 = vld [vmem:[%s0 + $0x232] sm:$0xff]
    %v1348 = vld [vmem:[%s0 + $0x242] sm:$0xff]
    %v1349 = vld [vmem:[%s0 + $0x24a] sm:$0xff]
    %v1350 = vld [vmem:[%s0 + $0x25a] sm:$0xff]
    %v1351 = vld [vmem:[%s0 + $0x262] sm:$0xff]
    %v1352 = vld [vmem:[%s0 + $0x272] sm:$0xff]
    %v1353 = vld [vmem:[%s0 + $0x27a] sm:$0xff]
    %v1354 = vld [vmem:[%s0 + $0x28a] sm:$0xff]
    %v1355 = vld [vmem:[%s0 + $0x292] sm:$0xff]
    %v1356 = vld [vmem:[%s0 + $0x2a2] sm:$0xff]
    %v1357 = vld [vmem:[%s0 + $0x2aa] sm:$0xff]
    %v1358 = vld [vmem:[%s0 + $0x2ba] sm:$0xff]
    %v1359 = vld [vmem:[%s0 + $0x2c2] sm:$0xff]
    %v1360 = vld [vmem:[%s0 + $0x2d2] sm:$0xff]
    %v1361 = vld [vmem:[%s0 + $0x2da] sm:$0xff]
    %v1362 = vld [vmem:[%s0 + $0x2ea] sm:$0xff]
    %v1363 = vld [vmem:[%s0 + $0x2f2] sm:$0xff]
    %v1364 = vld [vmem:[%s0 + $0x302] sm:$0xff]
    %v1365 = vld [vmem:[%s0 + $0x30a] sm:$0xff]
    %v1366 = vld [vmem:[%s0 + $0x31a] sm:$0xff]
    %v1367 = vld [vmem:[%s0 + $0x322] sm:$0xff]
    %v1368 = vld [vmem:[%s1 + $0x10] sm:$0x7]
    %v1370 = vsel %vm142, %v1304, 0
    %v1373 = vsel %vm142, %v1305, 0
    %v1376 = vsel %vm142, %v1306, 0
    %v1379 = vsel %vm142, %v1307, 0
    %v1382 = vsel %vm142, %v1308, 0
    %v1385 = vsel %vm142, %v1309, 0
    %v1388 = vsel %vm142, %v1310, 0
    %v1391 = vsel %vm142, %v1311, 0
    %v1394 = vsel %vm142, %v1312, 0
    %v1397 = vsel %vm142, %v1313, 0
    %v1400 = vsel %vm142, %v1314, 0
    %v1403 = vsel %vm142, %v1315, 0
    %v1406 = vsel %vm142, %v1316, 0
    %v1409 = vsel %vm142, %v1317, 0
    %v1412 = vsel %vm142, %v1318, 0
    %v1415 = vsel %vm142, %v1319, 0
    %v1418 = vsel %vm142, %v1320, 0
    %v1421 = vsel %vm142, %v1321, 0
    %v1424 = vsel %vm142, %v1322, 0
    %v1427 = vsel %vm142, %v1323, 0
    %v1430 = vsel %vm142, %v1324, 0
    %v1433 = vsel %vm142, %v1325, 0
    %v1436 = vsel %vm142, %v1326, 0
    %v1439 = vsel %vm142, %v1327, 0
    %v1442 = vsel %vm142, %v1328, 0
    %v1445 = vsel %vm142, %v1329, 0
    %v1448 = vsel %vm142, %v1330, 0
    %v1451 = vsel %vm142, %v1331, 0
    %v1454 = vsel %vm142, %v1332, 0
    %v1457 = vsel %vm142, %v1333, 0
    %v1460 = vsel %vm142, %v1334, 0
    %v1463 = vsel %vm142, %v1335, 0
    %v1466 = vsel %vm142, %v1336, 0
    %v1469 = vsel %vm142, %v1337, 0
    %v1472 = vsel %vm142, %v1338, 0
    %v1475 = vsel %vm142, %v1339, 0
    %v1478 = vsel %vm142, %v1340, 0
    %v1481 = vsel %vm142, %v1341, 0
    %v1484 = vsel %vm142, %v1342, 0
    %v1487 = vsel %vm142, %v1343, 0
    %v1490 = vsel %vm142, %v1344, 0
    %v1493 = vsel %vm142, %v1345, 0
    %v1496 = vsel %vm142, %v1346, 0
    %v1499 = vsel %vm142, %v1347, 0
    %v1502 = vsel %vm142, %v1348, 0
    %v1505 = vsel %vm142, %v1349, 0
    %v1508 = vsel %vm142, %v1350, 0
    %v1511 = vsel %vm142, %v1351, 0
    %v1514 = vsel %vm142, %v1352, 0
    %v1517 = vsel %vm142, %v1353, 0
    %v1520 = vsel %vm142, %v1354, 0
    %v1523 = vsel %vm142, %v1355, 0
    %v1526 = vsel %vm142, %v1356, 0
    %v1529 = vsel %vm142, %v1357, 0
    %v1532 = vsel %vm142, %v1358, 0
    %v1535 = vsel %vm142, %v1359, 0
    %v1538 = vsel %vm142, %v1360, 0
    %v1541 = vsel %vm142, %v1361, 0
    %v1544 = vsel %vm142, %v1362, 0
    %v1547 = vsel %vm142, %v1363, 0
    %v1550 = vsel %vm142, %v1364, 0
    %v1553 = vsel %vm142, %v1365, 0
    %v1556 = vsel %vm142, %v1366, 0
    %v1559 = vsel %vm142, %v1367, 0
    %v1562 = vsel %vm335, %v1368, 0
    %1564 = vmatprep.subr.mxu0 0.0
    %1565 = vmatpush1.msra.mxu0 0.0
    %1566 = vmatprep.subr.mxu0 0.0
    %1567 = vmatpush1.msra.mxu0 0.0
    %1568 = vmatprep.subr.mxu0 0.0
    %1569 = vmatpush1.msra.mxu0 0.0
    %1570 = vmatprep.subr.mxu0 0.0
    %1571 = vmatpush1.msra.mxu0 0.0
    %1572 = vmatprep.subr.mxu0 0.0
    %1573 = vmatpush1.msra.mxu0 0.0
    %1574 = vmatprep.subr.mxu0 0.0
    %1575 = vmatpush1.msra.mxu0 0.0
    %1576 = vmatprep.subr.mxu0 0.0
    %1577 = vmatpush1.msra.mxu0 0.0
    %1578 = vmatprep.subr.mxu0 0.0
    %1579 = vmatpush1.msra.mxu0 0.0
    %1580 = vmatprep.subr.mxu0 0.0
    %1581 = vmatpush1.msra.mxu0 0.0
    %1582 = vmatprep.subr.mxu0 0.0
    %1583 = vmatpush1.msra.mxu0 0.0
    %1584 = vmatprep.subr.mxu0 0.0
    %1585 = vmatpush1.msra.mxu0 0.0
    %1586 = vmatprep.subr.mxu0 0.0
    %1587 = vmatpush1.msra.mxu0 0.0
    %1588 = vmatprep.subr.mxu0 0.0
    %1589 = vmatpush1.msra.mxu0 0.0
    %1590 = vmatprep.subr.mxu0 0.0
    %1591 = vmatpush1.msra.mxu0 0.0
    %1592 = vmatprep.subr.mxu0 0.0
    %1593 = vmatpush1.msra.mxu0 0.0
    %1594 = vmatprep.subr.mxu0 0.0
    %1595 = vmatpush1.msra.mxu0 %v1562
    %1596 = vmatprep.subr.mxu0 0.0
    %1597 = vmatpush2.msra.mxu0 0.0
    %1598 = vmatprep.subr.mxu0 0.0
    %1599 = vmatpush2.msra.mxu0 0.0
    %1600 = vmatprep.subr.mxu0 0.0
    %1601 = vmatpush2.msra.mxu0 0.0
    %1602 = vmatprep.subr.mxu0 0.0
    %1603 = vmatpush2.msra.mxu0 0.0
    %1604 = vmatprep.subr.mxu0 0.0
    %1605 = vmatpush2.msra.mxu0 0.0
    %1606 = vmatprep.subr.mxu0 0.0
    %1607 = vmatpush2.msra.mxu0 0.0
    %1608 = vmatprep.subr.mxu0 0.0
    %1609 = vmatpush2.msra.mxu0 0.0
    %1610 = vmatprep.subr.mxu0 0.0
    %1611 = vmatpush2.msra.mxu0 0.0
    %1612 = vmatprep.subr.mxu0 0.0
    %1613 = vmatpush2.msra.mxu0 0.0
    %1614 = vmatprep.subr.mxu0 0.0
    %1615 = vmatpush2.msra.mxu0 0.0
    %1616 = vmatprep.subr.mxu0 0.0
    %1617 = vmatpush2.msra.mxu0 0.0
    %1618 = vmatprep.subr.mxu0 0.0
    %1619 = vmatpush2.msra.mxu0 0.0
    %1620 = vmatprep.subr.mxu0 0.0
    %1621 = vmatpush2.msra.mxu0 0.0
    %1622 = vmatprep.subr.mxu0 0.0
    %1623 = vmatpush2.msra.mxu0 0.0
    %1624 = vmatprep.subr.mxu0 0.0
    %1625 = vmatpush2.msra.mxu0 0.0
    %1626 = vmatprep.subr.mxu0 0.0
    %1627 = vmatpush2.msra.mxu0 0.0
    %1628 = vmatprep.mubr.f32.mxu0 0.0
    %1629 = vmatmul.mubr.f32.gmra.mxu0 %v1370
    %v1630 = vpop.f32.mrf.mxu0
    %v1631 = vadd.f32 0.0, %v1630
    %v1632 = vpop.f32.mrf.mxu0
    %1633 = vmatprep.mubr.f32.mxu0 0.0
    %1634 = vmatmul.mubr.f32.gmra.mxu0 %v1373
    %v1635 = vpop.f32.mrf.mxu0
    %v1636 = vadd.f32 0.0, %v1635
    %v1637 = vpop.f32.mrf.mxu0
    %1638 = vmatprep.mubr.f32.mxu0 0.0
    %1639 = vmatmul.mubr.f32.gmra.mxu0 %v1376
    %v1640 = vpop.f32.mrf.mxu0
    %v1641 = vadd.f32 0.0, %v1640
    %v1642 = vpop.f32.mrf.mxu0
    %1643 = vmatprep.mubr.f32.mxu0 0.0
    %1644 = vmatmul.mubr.f32.gmra.mxu0 %v1379
    %v1645 = vpop.f32.mrf.mxu0
    %v1646 = vadd.f32 0.0, %v1645
    %v1647 = vpop.f32.mrf.mxu0
    %1648 = vmatprep.mubr.f32.mxu0 0.0
    %1649 = vmatmul.mubr.f32.gmra.mxu0 %v1382
    %v1650 = vpop.f32.mrf.mxu0
    %v1651 = vadd.f32 0.0, %v1650
    %v1652 = vpop.f32.mrf.mxu0
    %1653 = vmatprep.mubr.f32.mxu0 0.0
    %1654 = vmatmul.mubr.f32.gmra.mxu0 %v1385
    %v1655 = vpop.f32.mrf.mxu0
    %v1656 = vadd.f32 0.0, %v1655
    %v1657 = vpop.f32.mrf.mxu0
    %1658 = vmatprep.mubr.f32.mxu0 0.0
    %1659 = vmatmul.mubr.f32.gmra.mxu0 %v1388
    %v1660 = vpop.f32.mrf.mxu0
    %v1661 = vadd.f32 0.0, %v1660
    %v1662 = vpop.f32.mrf.mxu0
    %1663 = vmatprep.mubr.f32.mxu0 0.0
    %1664 = vmatmul.mubr.f32.gmra.mxu0 %v1391
    %v1665 = vpop.f32.mrf.mxu0
    %v1666 = vadd.f32 0.0, %v1665
    %v1667 = vpop.f32.mrf.mxu0
    %1668 = vmatprep.mubr.f32.mxu0 0.0
    %1669 = vmatmul.mubr.f32.gmra.mxu0 %v1394
    %v1670 = vpop.f32.mrf.mxu0
    %v1671 = vadd.f32 0.0, %v1670
    %v1672 = vpop.f32.mrf.mxu0
    %1673 = vmatprep.mubr.f32.mxu0 0.0
    %1674 = vmatmul.mubr.f32.gmra.mxu0 %v1397
    %v1675 = vpop.f32.mrf.mxu0
    %v1676 = vadd.f32 0.0, %v1675
    %v1677 = vpop.f32.mrf.mxu0
    %1678 = vmatprep.mubr.f32.mxu0 0.0
    %1679 = vmatmul.mubr.f32.gmra.mxu0 %v1400
    %v1680 = vpop.f32.mrf.mxu0
    %v1681 = vadd.f32 0.0, %v1680
    %v1682 = vpop.f32.mrf.mxu0
    %1683 = vmatprep.mubr.f32.mxu0 0.0
    %1684 = vmatmul.mubr.f32.gmra.mxu0 %v1403
    %v1685 = vpop.f32.mrf.mxu0
    %v1686 = vadd.f32 0.0, %v1685
    %v1687 = vpop.f32.mrf.mxu0
    %1688 = vmatprep.mubr.f32.mxu0 0.0
    %1689 = vmatmul.mubr.f32.gmra.mxu0 %v1406
    %v1690 = vpop.f32.mrf.mxu0
    %v1691 = vadd.f32 0.0, %v1690
    %v1692 = vpop.f32.mrf.mxu0
    %1693 = vmatprep.mubr.f32.mxu0 0.0
    %1694 = vmatmul.mubr.f32.gmra.mxu0 %v1409
    %v1695 = vpop.f32.mrf.mxu0
    %v1696 = vadd.f32 0.0, %v1695
    %v1697 = vpop.f32.mrf.mxu0
    %1698 = vmatprep.mubr.f32.mxu0 0.0
    %1699 = vmatmul.mubr.f32.gmra.mxu0 %v1412
    %v1700 = vpop.f32.mrf.mxu0
    %v1701 = vadd.f32 0.0, %v1700
    %v1702 = vpop.f32.mrf.mxu0
    %1703 = vmatprep.mubr.f32.mxu0 0.0
    %1704 = vmatmul.mubr.f32.gmra.mxu0 %v1415
    %v1705 = vpop.f32.mrf.mxu0
    %v1706 = vadd.f32 0.0, %v1705
    %v1707 = vpop.f32.mrf.mxu0
    %1708 = vmatprep.mubr.f32.mxu0 0.0
    %1709 = vmatmul.mubr.f32.gmra.mxu0 %v1418
    %v1710 = vpop.f32.mrf.mxu0
    %v1711 = vadd.f32 0.0, %v1710
    %v1712 = vpop.f32.mrf.mxu0
    %1713 = vmatprep.mubr.f32.mxu0 0.0
    %1714 = vmatmul.mubr.f32.gmra.mxu0 %v1421
    %v1715 = vpop.f32.mrf.mxu0
    %v1716 = vadd.f32 0.0, %v1715
    %v1717 = vpop.f32.mrf.mxu0
    %1718 = vmatprep.mubr.f32.mxu0 0.0
    %1719 = vmatmul.mubr.f32.gmra.mxu0 %v1424
    %v1720 = vpop.f32.mrf.mxu0
    %v1721 = vadd.f32 0.0, %v1720
    %v1722 = vpop.f32.mrf.mxu0
    %1723 = vmatprep.mubr.f32.mxu0 0.0
    %1724 = vmatmul.mubr.f32.gmra.mxu0 %v1427
    %v1725 = vpop.f32.mrf.mxu0
    %v1726 = vadd.f32 0.0, %v1725
    %v1727 = vpop.f32.mrf.mxu0
    %1728 = vmatprep.mubr.f32.mxu0 0.0
    %1729 = vmatmul.mubr.f32.gmra.mxu0 %v1430
    %v1730 = vpop.f32.mrf.mxu0
    %v1731 = vadd.f32 0.0, %v1730
    %v1732 = vpop.f32.mrf.mxu0
    %1733 = vmatprep.mubr.f32.mxu0 0.0
    %1734 = vmatmul.mubr.f32.gmra.mxu0 %v1433
    %v1735 = vpop.f32.mrf.mxu0
    %v1736 = vadd.f32 0.0, %v1735
    %v1737 = vpop.f32.mrf.mxu0
    %1738 = vmatprep.mubr.f32.mxu0 0.0
    %1739 = vmatmul.mubr.f32.gmra.mxu0 %v1436
    %v1740 = vpop.f32.mrf.mxu0
    %v1741 = vadd.f32 0.0, %v1740
    %v1742 = vpop.f32.mrf.mxu0
    %1743 = vmatprep.mubr.f32.mxu0 0.0
    %1744 = vmatmul.mubr.f32.gmra.mxu0 %v1439
    %v1745 = vpop.f32.mrf.mxu0
    %v1746 = vadd.f32 0.0, %v1745
    %v1747 = vpop.f32.mrf.mxu0
    %1748 = vmatprep.mubr.f32.mxu0 0.0
    %1749 = vmatmul.mubr.f32.gmra.mxu0 %v1442
    %v1750 = vpop.f32.mrf.mxu0
    %v1751 = vadd.f32 0.0, %v1750
    %v1752 = vpop.f32.mrf.mxu0
    %1753 = vmatprep.mubr.f32.mxu0 0.0
    %1754 = vmatmul.mubr.f32.gmra.mxu0 %v1445
    %v1755 = vpop.f32.mrf.mxu0
    %v1756 = vadd.f32 0.0, %v1755
    %v1757 = vpop.f32.mrf.mxu0
    %1758 = vmatprep.mubr.f32.mxu0 0.0
    %1759 = vmatmul.mubr.f32.gmra.mxu0 %v1448
    %v1760 = vpop.f32.mrf.mxu0
    %v1761 = vadd.f32 0.0, %v1760
    %v1762 = vpop.f32.mrf.mxu0
    %1763 = vmatprep.mubr.f32.mxu0 0.0
    %1764 = vmatmul.mubr.f32.gmra.mxu0 %v1451
    %v1765 = vpop.f32.mrf.mxu0
    %v1766 = vadd.f32 0.0, %v1765
    %v1767 = vpop.f32.mrf.mxu0
    %1768 = vmatprep.mubr.f32.mxu0 0.0
    %1769 = vmatmul.mubr.f32.gmra.mxu0 %v1454
    %v1770 = vpop.f32.mrf.mxu0
    %v1771 = vadd.f32 0.0, %v1770
    %v1772 = vpop.f32.mrf.mxu0
    %1773 = vmatprep.mubr.f32.mxu0 0.0
    %1774 = vmatmul.mubr.f32.gmra.mxu0 %v1457
    %v1775 = vpop.f32.mrf.mxu0
    %v1776 = vadd.f32 0.0, %v1775
    %v1777 = vpop.f32.mrf.mxu0
    %1778 = vmatprep.mubr.f32.mxu0 0.0
    %1779 = vmatmul.mubr.f32.gmra.mxu0 %v1460
    %v1780 = vpop.f32.mrf.mxu0
    %v1781 = vadd.f32 0.0, %v1780
    %v1782 = vpop.f32.mrf.mxu0
    %1783 = vmatprep.mubr.f32.mxu0 0.0
    %1784 = vmatmul.mubr.f32.gmra.mxu0 %v1463
    %v1785 = vpop.f32.mrf.mxu0
    %v1786 = vadd.f32 0.0, %v1785
    %v1787 = vpop.f32.mrf.mxu0
    %1788 = vmatprep.mubr.f32.mxu0 0.0
    %1789 = vmatmul.mubr.f32.gmra.mxu0 %v1466
    %v1790 = vpop.f32.mrf.mxu0
    %v1791 = vadd.f32 0.0, %v1790
    %v1792 = vpop.f32.mrf.mxu0
    %1793 = vmatprep.mubr.f32.mxu0 0.0
    %1794 = vmatmul.mubr.f32.gmra.mxu0 %v1469
    %v1795 = vpop.f32.mrf.mxu0
    %v1796 = vadd.f32 0.0, %v1795
    %v1797 = vpop.f32.mrf.mxu0
    %1798 = vmatprep.mubr.f32.mxu0 0.0
    %1799 = vmatmul.mubr.f32.gmra.mxu0 %v1472
    %v1800 = vpop.f32.mrf.mxu0
    %v1801 = vadd.f32 0.0, %v1800
    %v1802 = vpop.f32.mrf.mxu0
    %1803 = vmatprep.mubr.f32.mxu0 0.0
    %1804 = vmatmul.mubr.f32.gmra.mxu0 %v1475
    %v1805 = vpop.f32.mrf.mxu0
    %v1806 = vadd.f32 0.0, %v1805
    %v1807 = vpop.f32.mrf.mxu0
    %1808 = vmatprep.mubr.f32.mxu0 0.0
    %1809 = vmatmul.mubr.f32.gmra.mxu0 %v1478
    %v1810 = vpop.f32.mrf.mxu0
    %v1811 = vadd.f32 0.0, %v1810
    %v1812 = vpop.f32.mrf.mxu0
    %1813 = vmatprep.mubr.f32.mxu0 0.0
    %1814 = vmatmul.mubr.f32.gmra.mxu0 %v1481
    %v1815 = vpop.f32.mrf.mxu0
    %v1816 = vadd.f32 0.0, %v1815
    %v1817 = vpop.f32.mrf.mxu0
    %1818 = vmatprep.mubr.f32.mxu0 0.0
    %1819 = vmatmul.mubr.f32.gmra.mxu0 %v1484
    %v1820 = vpop.f32.mrf.mxu0
    %v1821 = vadd.f32 0.0, %v1820
    %v1822 = vpop.f32.mrf.mxu0
    %1823 = vmatprep.mubr.f32.mxu0 0.0
    %1824 = vmatmul.mubr.f32.gmra.mxu0 %v1487
    %v1825 = vpop.f32.mrf.mxu0
    %v1826 = vadd.f32 0.0, %v1825
    %v1827 = vpop.f32.mrf.mxu0
    %1828 = vmatprep.mubr.f32.mxu0 0.0
    %1829 = vmatmul.mubr.f32.gmra.mxu0 %v1490
    %v1830 = vpop.f32.mrf.mxu0
    %v1831 = vadd.f32 0.0, %v1830
    %v1832 = vpop.f32.mrf.mxu0
    %1833 = vmatprep.mubr.f32.mxu0 0.0
    %1834 = vmatmul.mubr.f32.gmra.mxu0 %v1493
    %v1835 = vpop.f32.mrf.mxu0
    %v1836 = vadd.f32 0.0, %v1835
    %v1837 = vpop.f32.mrf.mxu0
    %1838 = vmatprep.mubr.f32.mxu0 0.0
    %1839 = vmatmul.mubr.f32.gmra.mxu0 %v1496
    %v1840 = vpop.f32.mrf.mxu0
    %v1841 = vadd.f32 0.0, %v1840
    %v1842 = vpop.f32.mrf.mxu0
    %1843 = vmatprep.mubr.f32.mxu0 0.0
    %1844 = vmatmul.mubr.f32.gmra.mxu0 %v1499
    %v1845 = vpop.f32.mrf.mxu0
    %v1846 = vadd.f32 0.0, %v1845
    %v1847 = vpop.f32.mrf.mxu0
    %1848 = vmatprep.mubr.f32.mxu0 0.0
    %1849 = vmatmul.mubr.f32.gmra.mxu0 %v1502
    %v1850 = vpop.f32.mrf.mxu0
    %v1851 = vadd.f32 0.0, %v1850
    %v1852 = vpop.f32.mrf.mxu0
    %1853 = vmatprep.mubr.f32.mxu0 0.0
    %1854 = vmatmul.mubr.f32.gmra.mxu0 %v1505
    %v1855 = vpop.f32.mrf.mxu0
    %v1856 = vadd.f32 0.0, %v1855
    %v1857 = vpop.f32.mrf.mxu0
    %1858 = vmatprep.mubr.f32.mxu0 0.0
    %1859 = vmatmul.mubr.f32.gmra.mxu0 %v1508
    %v1860 = vpop.f32.mrf.mxu0
    %v1861 = vadd.f32 0.0, %v1860
    %v1862 = vpop.f32.mrf.mxu0
    %1863 = vmatprep.mubr.f32.mxu0 0.0
    %1864 = vmatmul.mubr.f32.gmra.mxu0 %v1511
    %v1865 = vpop.f32.mrf.mxu0
    %v1866 = vadd.f32 0.0, %v1865
    %v1867 = vpop.f32.mrf.mxu0
    %1868 = vmatprep.mubr.f32.mxu0 0.0
    %1869 = vmatmul.mubr.f32.gmra.mxu0 %v1514
    %v1870 = vpop.f32.mrf.mxu0
    %v1871 = vadd.f32 0.0, %v1870
    %v1872 = vpop.f32.mrf.mxu0
    %1873 = vmatprep.mubr.f32.mxu0 0.0
    %1874 = vmatmul.mubr.f32.gmra.mxu0 %v1517
    %v1875 = vpop.f32.mrf.mxu0
    %v1876 = vadd.f32 0.0, %v1875
    %v1877 = vpop.f32.mrf.mxu0
    %1878 = vmatprep.mubr.f32.mxu0 0.0
    %1879 = vmatmul.mubr.f32.gmra.mxu0 %v1520
    %v1880 = vpop.f32.mrf.mxu0
    %v1881 = vadd.f32 0.0, %v1880
    %v1882 = vpop.f32.mrf.mxu0
    %1883 = vmatprep.mubr.f32.mxu0 0.0
    %1884 = vmatmul.mubr.f32.gmra.mxu0 %v1523
    %v1885 = vpop.f32.mrf.mxu0
    %v1886 = vadd.f32 0.0, %v1885
    %v1887 = vpop.f32.mrf.mxu0
    %1888 = vmatprep.mubr.f32.mxu0 0.0
    %1889 = vmatmul.mubr.f32.gmra.mxu0 %v1526
    %v1890 = vpop.f32.mrf.mxu0
    %v1891 = vadd.f32 0.0, %v1890
    %v1892 = vpop.f32.mrf.mxu0
    %1893 = vmatprep.mubr.f32.mxu0 0.0
    %1894 = vmatmul.mubr.f32.gmra.mxu0 %v1529
    %v1895 = vpop.f32.mrf.mxu0
    %v1896 = vadd.f32 0.0, %v1895
    %v1897 = vpop.f32.mrf.mxu0
    %1898 = vmatprep.mubr.f32.mxu0 0.0
    %1899 = vmatmul.mubr.f32.gmra.mxu0 %v1532
    %v1900 = vpop.f32.mrf.mxu0
    %v1901 = vadd.f32 0.0, %v1900
    %v1902 = vpop.f32.mrf.mxu0
    %1903 = vmatprep.mubr.f32.mxu0 0.0
    %1904 = vmatmul.mubr.f32.gmra.mxu0 %v1535
    %v1905 = vpop.f32.mrf.mxu0
    %v1906 = vadd.f32 0.0, %v1905
    %v1907 = vpop.f32.mrf.mxu0
    %1908 = vmatprep.mubr.f32.mxu0 0.0
    %1909 = vmatmul.mubr.f32.gmra.mxu0 %v1538
    %v1910 = vpop.f32.mrf.mxu0
    %v1911 = vadd.f32 0.0, %v1910
    %v1912 = vpop.f32.mrf.mxu0
    %1913 = vmatprep.mubr.f32.mxu0 0.0
    %1914 = vmatmul.mubr.f32.gmra.mxu0 %v1541
    %v1915 = vpop.f32.mrf.mxu0
    %v1916 = vadd.f32 0.0, %v1915
    %v1917 = vpop.f32.mrf.mxu0
    %1918 = vmatprep.mubr.f32.mxu0 0.0
    %1919 = vmatmul.mubr.f32.gmra.mxu0 %v1544
    %v1920 = vpop.f32.mrf.mxu0
    %v1921 = vadd.f32 0.0, %v1920
    %v1922 = vpop.f32.mrf.mxu0
    %1923 = vmatprep.mubr.f32.mxu0 0.0
    %1924 = vmatmul.mubr.f32.gmra.mxu0 %v1547
    %v1925 = vpop.f32.mrf.mxu0
    %v1926 = vadd.f32 0.0, %v1925
    %v1927 = vpop.f32.mrf.mxu0
    %1928 = vmatprep.mubr.f32.mxu0 0.0
    %1929 = vmatmul.mubr.f32.gmra.mxu0 %v1550
    %v1930 = vpop.f32.mrf.mxu0
    %v1931 = vadd.f32 0.0, %v1930
    %v1932 = vpop.f32.mrf.mxu0
    %1933 = vmatprep.mubr.f32.mxu0 0.0
    %1934 = vmatmul.mubr.f32.gmra.mxu0 %v1553
    %v1935 = vpop.f32.mrf.mxu0
    %v1936 = vadd.f32 0.0, %v1935
    %v1937 = vpop.f32.mrf.mxu0
    %1938 = vmatprep.mubr.f32.mxu0 0.0
    %1939 = vmatmul.mubr.f32.gmra.mxu0 %v1556
    %v1940 = vpop.f32.mrf.mxu0
    %v1941 = vadd.f32 0.0, %v1940
    %v1942 = vpop.f32.mrf.mxu0
    %1943 = vmatprep.mubr.f32.mxu0 0.0
    %1944 = vmatmul.mubr.f32.gmra.mxu0 %v1559
    %v1945 = vpop.f32.mrf.mxu0
    %v1946 = vadd.f32 0.0, %v1945
    %v1947 = vpop.f32.mrf.mxu0
    %1948 = vdwg.mxu0
    %v1949 = vadd.f32 %v986, %v1631
    %v1950 = vadd.f32 %v991, %v1636
    %v1951 = vadd.f32 %v996, %v1641
    %v1952 = vadd.f32 %v1001, %v1646
    %v1953 = vadd.f32 %v1006, %v1651
    %v1954 = vadd.f32 %v1011, %v1656
    %v1955 = vadd.f32 %v1016, %v1661
    %v1956 = vadd.f32 %v1021, %v1666
    %v1957 = vadd.f32 %v1026, %v1671
    %v1958 = vadd.f32 %v1031, %v1676
    %v1959 = vadd.f32 %v1036, %v1681
    %v1960 = vadd.f32 %v1041, %v1686
    %v1961 = vadd.f32 %v1046, %v1691
    %v1962 = vadd.f32 %v1051, %v1696
    %v1963 = vadd.f32 %v1056, %v1701
    %v1964 = vadd.f32 %v1061, %v1706
    %v1965 = vadd.f32 %v1066, %v1711
    %v1966 = vadd.f32 %v1071, %v1716
    %v1967 = vadd.f32 %v1076, %v1721
    %v1968 = vadd.f32 %v1081, %v1726
    %v1969 = vadd.f32 %v1086, %v1731
    %v1970 = vadd.f32 %v1091, %v1736
    %v1971 = vadd.f32 %v1096, %v1741
    %v1972 = vadd.f32 %v1101, %v1746
    %v1973 = vadd.f32 %v1106, %v1751
    %v1974 = vadd.f32 %v1111, %v1756
    %v1975 = vadd.f32 %v1116, %v1761
    %v1976 = vadd.f32 %v1121, %v1766
    %v1977 = vadd.f32 %v1126, %v1771
    %v1978 = vadd.f32 %v1131, %v1776
    %v1979 = vadd.f32 %v1136, %v1781
    %v1980 = vadd.f32 %v1141, %v1786
    %v1981 = vadd.f32 %v1146, %v1791
    %v1982 = vadd.f32 %v1151, %v1796
    %v1983 = vadd.f32 %v1156, %v1801
    %v1984 = vadd.f32 %v1161, %v1806
    %v1985 = vadd.f32 %v1166, %v1811
    %v1986 = vadd.f32 %v1171, %v1816
    %v1987 = vadd.f32 %v1176, %v1821
    %v1988 = vadd.f32 %v1181, %v1826
    %v1989 = vadd.f32 %v1186, %v1831
    %v1990 = vadd.f32 %v1191, %v1836
    %v1991 = vadd.f32 %v1196, %v1841
    %v1992 = vadd.f32 %v1201, %v1846
    %v1993 = vadd.f32 %v1206, %v1851
    %v1994 = vadd.f32 %v1211, %v1856
    %v1995 = vadd.f32 %v1216, %v1861
    %v1996 = vadd.f32 %v1221, %v1866
    %v1997 = vadd.f32 %v1226, %v1871
    %v1998 = vadd.f32 %v1231, %v1876
    %v1999 = vadd.f32 %v1236, %v1881
    %v2000 = vadd.f32 %v1241, %v1886
    %v2001 = vadd.f32 %v1246, %v1891
    %v2002 = vadd.f32 %v1251, %v1896
    %v2003 = vadd.f32 %v1256, %v1901
    %v2004 = vadd.f32 %v1261, %v1906
    %v2005 = vadd.f32 %v1266, %v1911
    %v2006 = vadd.f32 %v1271, %v1916
    %v2007 = vadd.f32 %v1276, %v1921
    %v2008 = vadd.f32 %v1281, %v1926
    %v2009 = vadd.f32 %v1286, %v1931
    %v2010 = vadd.f32 %v1291, %v1936
    %v2011 = vadd.f32 %v1296, %v1941
    %v2012 = vadd.f32 %v1301, %v1946
    %s2013 = scalar_lea.vmem %s0, 24
    %v2014 = vld [vmem:[%s2013] sm:$0xff]
    %v2015 = vld [vmem:[%s2013 + $0x8] sm:$0xff]
    %v2016 = vld [vmem:[%s2013 + $0x18] sm:$0xff]
    %v2017 = vld [vmem:[%s2013 + $0x20] sm:$0xff]
    %v2018 = vld [vmem:[%s2013 + $0x30] sm:$0xff]
    %v2019 = vld [vmem:[%s2013 + $0x38] sm:$0xff]
    %v2020 = vld [vmem:[%s2013 + $0x48] sm:$0xff]
    %v2021 = vld [vmem:[%s2013 + $0x50] sm:$0xff]
    %v2022 = vld [vmem:[%s2013 + $0x60] sm:$0xff]
    %v2023 = vld [vmem:[%s2013 + $0x68] sm:$0xff]
    %v2024 = vld [vmem:[%s2013 + $0x78] sm:$0xff]
    %v2025 = vld [vmem:[%s2013 + $0x80] sm:$0xff]
    %v2026 = vld [vmem:[%s2013 + $0x90] sm:$0xff]
    %v2027 = vld [vmem:[%s2013 + $0x98] sm:$0xff]
    %v2028 = vld [vmem:[%s2013 + $0xa8] sm:$0xff]
    %v2029 = vld [vmem:[%s2013 + $0xb0] sm:$0xff]
    %v2030 = vld [vmem:[%s2013 + $0xc0] sm:$0xff]
    %v2031 = vld [vmem:[%s2013 + $0xc8] sm:$0xff]
    %v2032 = vld [vmem:[%s2013 + $0xd8] sm:$0xff]
    %v2033 = vld [vmem:[%s2013 + $0xe0] sm:$0xff]
    %v2034 = vld [vmem:[%s2013 + $0xf0] sm:$0xff]
    %v2035 = vld [vmem:[%s2013 + $0xf8] sm:$0xff]
    %v2036 = vld [vmem:[%s2013 + $0x108] sm:$0xff]
    %v2037 = vld [vmem:[%s2013 + $0x110] sm:$0xff]
    %v2038 = vld [vmem:[%s2013 + $0x120] sm:$0xff]
    %v2039 = vld [vmem:[%s2013 + $0x128] sm:$0xff]
    %v2040 = vld [vmem:[%s2013 + $0x138] sm:$0xff]
    %v2041 = vld [vmem:[%s2013 + $0x140] sm:$0xff]
    %v2042 = vld [vmem:[%s2013 + $0x150] sm:$0xff]
    %v2043 = vld [vmem:[%s2013 + $0x158] sm:$0xff]
    %v2044 = vld [vmem:[%s2013 + $0x168] sm:$0xff]
    %v2045 = vld [vmem:[%s2013 + $0x170] sm:$0xff]
    %v2046 = vld [vmem:[%s2013 + $0x1b0] sm:$0xff]
    %v2047 = vld [vmem:[%s2013 + $0x1b8] sm:$0xff]
    %v2048 = vld [vmem:[%s2013 + $0x1c8] sm:$0xff]
    %v2049 = vld [vmem:[%s2013 + $0x1d0] sm:$0xff]
    %v2050 = vld [vmem:[%s2013 + $0x1e0] sm:$0xff]
    %v2051 = vld [vmem:[%s2013 + $0x1e8] sm:$0xff]
    %v2052 = vld [vmem:[%s2013 + $0x1f8] sm:$0xff]
    %v2053 = vld [vmem:[%s2013 + $0x200] sm:$0xff]
    %v2054 = vld [vmem:[%s2013 + $0x210] sm:$0xff]
    %v2055 = vld [vmem:[%s2013 + $0x218] sm:$0xff]
    %v2056 = vld [vmem:[%s2013 + $0x228] sm:$0xff]
    %v2057 = vld [vmem:[%s2013 + $0x230] sm:$0xff]
    %v2058 = vld [vmem:[%s2013 + $0x240] sm:$0xff]
    %v2059 = vld [vmem:[%s2013 + $0x248] sm:$0xff]
    %v2060 = vld [vmem:[%s2013 + $0x258] sm:$0xff]
    %v2061 = vld [vmem:[%s2013 + $0x260] sm:$0xff]
    %v2062 = vld [vmem:[%s2013 + $0x270] sm:$0xff]
    %v2063 = vld [vmem:[%s2013 + $0x278] sm:$0xff]
    %v2064 = vld [vmem:[%s2013 + $0x288] sm:$0xff]
    %v2065 = vld [vmem:[%s2013 + $0x290] sm:$0xff]
    %v2066 = vld [vmem:[%s2013 + $0x2a0] sm:$0xff]
    %v2067 = vld [vmem:[%s2013 + $0x2a8] sm:$0xff]
    %v2068 = vld [vmem:[%s2013 + $0x2b8] sm:$0xff]
    %v2069 = vld [vmem:[%s2013 + $0x2c0] sm:$0xff]
    %v2070 = vld [vmem:[%s2013 + $0x2d0] sm:$0xff]
    %v2071 = vld [vmem:[%s2013 + $0x2d8] sm:$0xff]
    %v2072 = vld [vmem:[%s2013 + $0x2e8] sm:$0xff]
    %v2073 = vld [vmem:[%s2013 + $0x2f0] sm:$0xff]
    %v2074 = vld [vmem:[%s2013 + $0x300] sm:$0xff]
    %v2075 = vld [vmem:[%s2013 + $0x308] sm:$0xff]
    %v2076 = vld [vmem:[%s2013 + $0x318] sm:$0xff]
    %v2077 = vld [vmem:[%s2013 + $0x320] sm:$0xff]
    %v2078 = vld [vmem:[%s1 + $0x18] sm:$0x7]
    %v2080 = vsel %vm142, %v2014, 0
    %v2083 = vsel %vm142, %v2015, 0
    %v2086 = vsel %vm142, %v2016, 0
    %v2089 = vsel %vm142, %v2017, 0
    %v2092 = vsel %vm142, %v2018, 0
    %v2095 = vsel %vm142, %v2019, 0
    %v2098 = vsel %vm142, %v2020, 0
    %v2101 = vsel %vm142, %v2021, 0
    %v2104 = vsel %vm142, %v2022, 0
    %v2107 = vsel %vm142, %v2023, 0
    %v2110 = vsel %vm142, %v2024, 0
    %v2113 = vsel %vm142, %v2025, 0
    %v2116 = vsel %vm142, %v2026, 0
    %v2119 = vsel %vm142, %v2027, 0
    %v2122 = vsel %vm142, %v2028, 0
    %v2125 = vsel %vm142, %v2029, 0
    %v2128 = vsel %vm142, %v2030, 0
    %v2131 = vsel %vm142, %v2031, 0
    %v2134 = vsel %vm142, %v2032, 0
    %v2137 = vsel %vm142, %v2033, 0
    %v2140 = vsel %vm142, %v2034, 0
    %v2143 = vsel %vm142, %v2035, 0
    %v2146 = vsel %vm142, %v2036, 0
    %v2149 = vsel %vm142, %v2037, 0
    %v2152 = vsel %vm142, %v2038, 0
    %v2155 = vsel %vm142, %v2039, 0
    %v2158 = vsel %vm142, %v2040, 0
    %v2161 = vsel %vm142, %v2041, 0
    %v2164 = vsel %vm142, %v2042, 0
    %v2167 = vsel %vm142, %v2043, 0
    %v2170 = vsel %vm142, %v2044, 0
    %v2173 = vsel %vm142, %v2045, 0
    %v2176 = vsel %vm142, %v2046, 0
    %v2179 = vsel %vm142, %v2047, 0
    %v2182 = vsel %vm142, %v2048, 0
    %v2185 = vsel %vm142, %v2049, 0
    %v2188 = vsel %vm142, %v2050, 0
    %v2191 = vsel %vm142, %v2051, 0
    %v2194 = vsel %vm142, %v2052, 0
    %v2197 = vsel %vm142, %v2053, 0
    %v2200 = vsel %vm142, %v2054, 0
    %v2203 = vsel %vm142, %v2055, 0
    %v2206 = vsel %vm142, %v2056, 0
    %v2209 = vsel %vm142, %v2057, 0
    %v2212 = vsel %vm142, %v2058, 0
    %v2215 = vsel %vm142, %v2059, 0
    %v2218 = vsel %vm142, %v2060, 0
    %v2221 = vsel %vm142, %v2061, 0
    %v2224 = vsel %vm142, %v2062, 0
    %v2227 = vsel %vm142, %v2063, 0
    %v2230 = vsel %vm142, %v2064, 0
    %v2233 = vsel %vm142, %v2065, 0
    %v2236 = vsel %vm142, %v2066, 0
    %v2239 = vsel %vm142, %v2067, 0
    %v2242 = vsel %vm142, %v2068, 0
    %v2245 = vsel %vm142, %v2069, 0
    %v2248 = vsel %vm142, %v2070, 0
    %v2251 = vsel %vm142, %v2071, 0
    %v2254 = vsel %vm142, %v2072, 0
    %v2257 = vsel %vm142, %v2073, 0
    %v2260 = vsel %vm142, %v2074, 0
    %v2263 = vsel %vm142, %v2075, 0
    %v2266 = vsel %vm142, %v2076, 0
    %v2269 = vsel %vm142, %v2077, 0
    %v2272 = vsel %vm335, %v2078, 0
    %2274 = vmatprep.subr.mxu0 0.0
    %2275 = vmatpush1.msra.mxu0 0.0
    %2276 = vmatprep.subr.mxu0 0.0
    %2277 = vmatpush1.msra.mxu0 0.0
    %2278 = vmatprep.subr.mxu0 0.0
    %2279 = vmatpush1.msra.mxu0 0.0
    %2280 = vmatprep.subr.mxu0 0.0
    %2281 = vmatpush1.msra.mxu0 0.0
    %2282 = vmatprep.subr.mxu0 0.0
    %2283 = vmatpush1.msra.mxu0 0.0
    %2284 = vmatprep.subr.mxu0 0.0
    %2285 = vmatpush1.msra.mxu0 0.0
    %2286 = vmatprep.subr.mxu0 0.0
    %2287 = vmatpush1.msra.mxu0 0.0
    %2288 = vmatprep.subr.mxu0 0.0
    %2289 = vmatpush1.msra.mxu0 0.0
    %2290 = vmatprep.subr.mxu0 0.0
    %2291 = vmatpush1.msra.mxu0 0.0
    %2292 = vmatprep.subr.mxu0 0.0
    %2293 = vmatpush1.msra.mxu0 0.0
    %2294 = vmatprep.subr.mxu0 0.0
    %2295 = vmatpush1.msra.mxu0 0.0
    %2296 = vmatprep.subr.mxu0 0.0
    %2297 = vmatpush1.msra.mxu0 0.0
    %2298 = vmatprep.subr.mxu0 0.0
    %2299 = vmatpush1.msra.mxu0 0.0
    %2300 = vmatprep.subr.mxu0 0.0
    %2301 = vmatpush1.msra.mxu0 0.0
    %2302 = vmatprep.subr.mxu0 0.0
    %2303 = vmatpush1.msra.mxu0 0.0
    %2304 = vmatprep.subr.mxu0 0.0
    %2305 = vmatpush1.msra.mxu0 %v2272
    %2306 = vmatprep.subr.mxu0 0.0
    %2307 = vmatpush2.msra.mxu0 0.0
    %2308 = vmatprep.subr.mxu0 0.0
    %2309 = vmatpush2.msra.mxu0 0.0
    %2310 = vmatprep.subr.mxu0 0.0
    %2311 = vmatpush2.msra.mxu0 0.0
    %2312 = vmatprep.subr.mxu0 0.0
    %2313 = vmatpush2.msra.mxu0 0.0
    %2314 = vmatprep.subr.mxu0 0.0
    %2315 = vmatpush2.msra.mxu0 0.0
    %2316 = vmatprep.subr.mxu0 0.0
    %2317 = vmatpush2.msra.mxu0 0.0
    %2318 = vmatprep.subr.mxu0 0.0
    %2319 = vmatpush2.msra.mxu0 0.0
    %2320 = vmatprep.subr.mxu0 0.0
    %2321 = vmatpush2.msra.mxu0 0.0
    %2322 = vmatprep.subr.mxu0 0.0
    %2323 = vmatpush2.msra.mxu0 0.0
    %2324 = vmatprep.subr.mxu0 0.0
    %2325 = vmatpush2.msra.mxu0 0.0
    %2326 = vmatprep.subr.mxu0 0.0
    %2327 = vmatpush2.msra.mxu0 0.0
    %2328 = vmatprep.subr.mxu0 0.0
    %2329 = vmatpush2.msra.mxu0 0.0
    %2330 = vmatprep.subr.mxu0 0.0
    %2331 = vmatpush2.msra.mxu0 0.0
    %2332 = vmatprep.subr.mxu0 0.0
    %2333 = vmatpush2.msra.mxu0 0.0
    %2334 = vmatprep.subr.mxu0 0.0
    %2335 = vmatpush2.msra.mxu0 0.0
    %2336 = vmatprep.subr.mxu0 0.0
    %2337 = vmatpush2.msra.mxu0 0.0
    %2338 = vmatprep.mubr.f32.mxu0 0.0
    %2339 = vmatmul.mubr.f32.gmra.mxu0 %v2080
    %v2340 = vpop.f32.mrf.mxu0
    %v2341 = vadd.f32 0.0, %v2340
    %v2342 = vpop.f32.mrf.mxu0
    %2343 = vmatprep.mubr.f32.mxu0 0.0
    %2344 = vmatmul.mubr.f32.gmra.mxu0 %v2083
    %v2345 = vpop.f32.mrf.mxu0
    %v2346 = vadd.f32 0.0, %v2345
    %v2347 = vpop.f32.mrf.mxu0
    %2348 = vmatprep.mubr.f32.mxu0 0.0
    %2349 = vmatmul.mubr.f32.gmra.mxu0 %v2086
    %v2350 = vpop.f32.mrf.mxu0
    %v2351 = vadd.f32 0.0, %v2350
    %v2352 = vpop.f32.mrf.mxu0
    %2353 = vmatprep.mubr.f32.mxu0 0.0
    %2354 = vmatmul.mubr.f32.gmra.mxu0 %v2089
    %v2355 = vpop.f32.mrf.mxu0
    %v2356 = vadd.f32 0.0, %v2355
    %v2357 = vpop.f32.mrf.mxu0
    %2358 = vmatprep.mubr.f32.mxu0 0.0
    %2359 = vmatmul.mubr.f32.gmra.mxu0 %v2092
    %v2360 = vpop.f32.mrf.mxu0
    %v2361 = vadd.f32 0.0, %v2360
    %v2362 = vpop.f32.mrf.mxu0
    %2363 = vmatprep.mubr.f32.mxu0 0.0
    %2364 = vmatmul.mubr.f32.gmra.mxu0 %v2095
    %v2365 = vpop.f32.mrf.mxu0
    %v2366 = vadd.f32 0.0, %v2365
    %v2367 = vpop.f32.mrf.mxu0
    %2368 = vmatprep.mubr.f32.mxu0 0.0
    %2369 = vmatmul.mubr.f32.gmra.mxu0 %v2098
    %v2370 = vpop.f32.mrf.mxu0
    %v2371 = vadd.f32 0.0, %v2370
    %v2372 = vpop.f32.mrf.mxu0
    %2373 = vmatprep.mubr.f32.mxu0 0.0
    %2374 = vmatmul.mubr.f32.gmra.mxu0 %v2101
    %v2375 = vpop.f32.mrf.mxu0
    %v2376 = vadd.f32 0.0, %v2375
    %v2377 = vpop.f32.mrf.mxu0
    %2378 = vmatprep.mubr.f32.mxu0 0.0
    %2379 = vmatmul.mubr.f32.gmra.mxu0 %v2104
    %v2380 = vpop.f32.mrf.mxu0
    %v2381 = vadd.f32 0.0, %v2380
    %v2382 = vpop.f32.mrf.mxu0
    %2383 = vmatprep.mubr.f32.mxu0 0.0
    %2384 = vmatmul.mubr.f32.gmra.mxu0 %v2107
    %v2385 = vpop.f32.mrf.mxu0
    %v2386 = vadd.f32 0.0, %v2385
    %v2387 = vpop.f32.mrf.mxu0
    %2388 = vmatprep.mubr.f32.mxu0 0.0
    %2389 = vmatmul.mubr.f32.gmra.mxu0 %v2110
    %v2390 = vpop.f32.mrf.mxu0
    %v2391 = vadd.f32 0.0, %v2390
    %v2392 = vpop.f32.mrf.mxu0
    %2393 = vmatprep.mubr.f32.mxu0 0.0
    %2394 = vmatmul.mubr.f32.gmra.mxu0 %v2113
    %v2395 = vpop.f32.mrf.mxu0
    %v2396 = vadd.f32 0.0, %v2395
    %v2397 = vpop.f32.mrf.mxu0
    %2398 = vmatprep.mubr.f32.mxu0 0.0
    %2399 = vmatmul.mubr.f32.gmra.mxu0 %v2116
    %v2400 = vpop.f32.mrf.mxu0
    %v2401 = vadd.f32 0.0, %v2400
    %v2402 = vpop.f32.mrf.mxu0
    %2403 = vmatprep.mubr.f32.mxu0 0.0
    %2404 = vmatmul.mubr.f32.gmra.mxu0 %v2119
    %v2405 = vpop.f32.mrf.mxu0
    %v2406 = vadd.f32 0.0, %v2405
    %v2407 = vpop.f32.mrf.mxu0
    %2408 = vmatprep.mubr.f32.mxu0 0.0
    %2409 = vmatmul.mubr.f32.gmra.mxu0 %v2122
    %v2410 = vpop.f32.mrf.mxu0
    %v2411 = vadd.f32 0.0, %v2410
    %v2412 = vpop.f32.mrf.mxu0
    %2413 = vmatprep.mubr.f32.mxu0 0.0
    %2414 = vmatmul.mubr.f32.gmra.mxu0 %v2125
    %v2415 = vpop.f32.mrf.mxu0
    %v2416 = vadd.f32 0.0, %v2415
    %v2417 = vpop.f32.mrf.mxu0
    %2418 = vmatprep.mubr.f32.mxu0 0.0
    %2419 = vmatmul.mubr.f32.gmra.mxu0 %v2128
    %v2420 = vpop.f32.mrf.mxu0
    %v2421 = vadd.f32 0.0, %v2420
    %v2422 = vpop.f32.mrf.mxu0
    %2423 = vmatprep.mubr.f32.mxu0 0.0
    %2424 = vmatmul.mubr.f32.gmra.mxu0 %v2131
    %v2425 = vpop.f32.mrf.mxu0
    %v2426 = vadd.f32 0.0, %v2425
    %v2427 = vpop.f32.mrf.mxu0
    %2428 = vmatprep.mubr.f32.mxu0 0.0
    %2429 = vmatmul.mubr.f32.gmra.mxu0 %v2134
    %v2430 = vpop.f32.mrf.mxu0
    %v2431 = vadd.f32 0.0, %v2430
    %v2432 = vpop.f32.mrf.mxu0
    %2433 = vmatprep.mubr.f32.mxu0 0.0
    %2434 = vmatmul.mubr.f32.gmra.mxu0 %v2137
    %v2435 = vpop.f32.mrf.mxu0
    %v2436 = vadd.f32 0.0, %v2435
    %v2437 = vpop.f32.mrf.mxu0
    %2438 = vmatprep.mubr.f32.mxu0 0.0
    %2439 = vmatmul.mubr.f32.gmra.mxu0 %v2140
    %v2440 = vpop.f32.mrf.mxu0
    %v2441 = vadd.f32 0.0, %v2440
    %v2442 = vpop.f32.mrf.mxu0
    %2443 = vmatprep.mubr.f32.mxu0 0.0
    %2444 = vmatmul.mubr.f32.gmra.mxu0 %v2143
    %v2445 = vpop.f32.mrf.mxu0
    %v2446 = vadd.f32 0.0, %v2445
    %v2447 = vpop.f32.mrf.mxu0
    %2448 = vmatprep.mubr.f32.mxu0 0.0
    %2449 = vmatmul.mubr.f32.gmra.mxu0 %v2146
    %v2450 = vpop.f32.mrf.mxu0
    %v2451 = vadd.f32 0.0, %v2450
    %v2452 = vpop.f32.mrf.mxu0
    %2453 = vmatprep.mubr.f32.mxu0 0.0
    %2454 = vmatmul.mubr.f32.gmra.mxu0 %v2149
    %v2455 = vpop.f32.mrf.mxu0
    %v2456 = vadd.f32 0.0, %v2455
    %v2457 = vpop.f32.mrf.mxu0
    %2458 = vmatprep.mubr.f32.mxu0 0.0
    %2459 = vmatmul.mubr.f32.gmra.mxu0 %v2152
    %v2460 = vpop.f32.mrf.mxu0
    %v2461 = vadd.f32 0.0, %v2460
    %v2462 = vpop.f32.mrf.mxu0
    %2463 = vmatprep.mubr.f32.mxu0 0.0
    %2464 = vmatmul.mubr.f32.gmra.mxu0 %v2155
    %v2465 = vpop.f32.mrf.mxu0
    %v2466 = vadd.f32 0.0, %v2465
    %v2467 = vpop.f32.mrf.mxu0
    %2468 = vmatprep.mubr.f32.mxu0 0.0
    %2469 = vmatmul.mubr.f32.gmra.mxu0 %v2158
    %v2470 = vpop.f32.mrf.mxu0
    %v2471 = vadd.f32 0.0, %v2470
    %v2472 = vpop.f32.mrf.mxu0
    %2473 = vmatprep.mubr.f32.mxu0 0.0
    %2474 = vmatmul.mubr.f32.gmra.mxu0 %v2161
    %v2475 = vpop.f32.mrf.mxu0
    %v2476 = vadd.f32 0.0, %v2475
    %v2477 = vpop.f32.mrf.mxu0
    %2478 = vmatprep.mubr.f32.mxu0 0.0
    %2479 = vmatmul.mubr.f32.gmra.mxu0 %v2164
    %v2480 = vpop.f32.mrf.mxu0
    %v2481 = vadd.f32 0.0, %v2480
    %v2482 = vpop.f32.mrf.mxu0
    %2483 = vmatprep.mubr.f32.mxu0 0.0
    %2484 = vmatmul.mubr.f32.gmra.mxu0 %v2167
    %v2485 = vpop.f32.mrf.mxu0
    %v2486 = vadd.f32 0.0, %v2485
    %v2487 = vpop.f32.mrf.mxu0
    %2488 = vmatprep.mubr.f32.mxu0 0.0
    %2489 = vmatmul.mubr.f32.gmra.mxu0 %v2170
    %v2490 = vpop.f32.mrf.mxu0
    %v2491 = vadd.f32 0.0, %v2490
    %v2492 = vpop.f32.mrf.mxu0
    %2493 = vmatprep.mubr.f32.mxu0 0.0
    %2494 = vmatmul.mubr.f32.gmra.mxu0 %v2173
    %v2495 = vpop.f32.mrf.mxu0
    %v2496 = vadd.f32 0.0, %v2495
    %v2497 = vpop.f32.mrf.mxu0
    %2498 = vmatprep.mubr.f32.mxu0 0.0
    %2499 = vmatmul.mubr.f32.gmra.mxu0 %v2176
    %v2500 = vpop.f32.mrf.mxu0
    %v2501 = vadd.f32 0.0, %v2500
    %v2502 = vpop.f32.mrf.mxu0
    %2503 = vmatprep.mubr.f32.mxu0 0.0
    %2504 = vmatmul.mubr.f32.gmra.mxu0 %v2179
    %v2505 = vpop.f32.mrf.mxu0
    %v2506 = vadd.f32 0.0, %v2505
    %v2507 = vpop.f32.mrf.mxu0
    %2508 = vmatprep.mubr.f32.mxu0 0.0
    %2509 = vmatmul.mubr.f32.gmra.mxu0 %v2182
    %v2510 = vpop.f32.mrf.mxu0
    %v2511 = vadd.f32 0.0, %v2510
    %v2512 = vpop.f32.mrf.mxu0
    %2513 = vmatprep.mubr.f32.mxu0 0.0
    %2514 = vmatmul.mubr.f32.gmra.mxu0 %v2185
    %v2515 = vpop.f32.mrf.mxu0
    %v2516 = vadd.f32 0.0, %v2515
    %v2517 = vpop.f32.mrf.mxu0
    %2518 = vmatprep.mubr.f32.mxu0 0.0
    %2519 = vmatmul.mubr.f32.gmra.mxu0 %v2188
    %v2520 = vpop.f32.mrf.mxu0
    %v2521 = vadd.f32 0.0, %v2520
    %v2522 = vpop.f32.mrf.mxu0
    %2523 = vmatprep.mubr.f32.mxu0 0.0
    %2524 = vmatmul.mubr.f32.gmra.mxu0 %v2191
    %v2525 = vpop.f32.mrf.mxu0
    %v2526 = vadd.f32 0.0, %v2525
    %v2527 = vpop.f32.mrf.mxu0
    %2528 = vmatprep.mubr.f32.mxu0 0.0
    %2529 = vmatmul.mubr.f32.gmra.mxu0 %v2194
    %v2530 = vpop.f32.mrf.mxu0
    %v2531 = vadd.f32 0.0, %v2530
    %v2532 = vpop.f32.mrf.mxu0
    %2533 = vmatprep.mubr.f32.mxu0 0.0
    %2534 = vmatmul.mubr.f32.gmra.mxu0 %v2197
    %v2535 = vpop.f32.mrf.mxu0
    %v2536 = vadd.f32 0.0, %v2535
    %v2537 = vpop.f32.mrf.mxu0
    %2538 = vmatprep.mubr.f32.mxu0 0.0
    %2539 = vmatmul.mubr.f32.gmra.mxu0 %v2200
    %v2540 = vpop.f32.mrf.mxu0
    %v2541 = vadd.f32 0.0, %v2540
    %v2542 = vpop.f32.mrf.mxu0
    %2543 = vmatprep.mubr.f32.mxu0 0.0
    %2544 = vmatmul.mubr.f32.gmra.mxu0 %v2203
    %v2545 = vpop.f32.mrf.mxu0
    %v2546 = vadd.f32 0.0, %v2545
    %v2547 = vpop.f32.mrf.mxu0
    %2548 = vmatprep.mubr.f32.mxu0 0.0
    %2549 = vmatmul.mubr.f32.gmra.mxu0 %v2206
    %v2550 = vpop.f32.mrf.mxu0
    %v2551 = vadd.f32 0.0, %v2550
    %v2552 = vpop.f32.mrf.mxu0
    %2553 = vmatprep.mubr.f32.mxu0 0.0
    %2554 = vmatmul.mubr.f32.gmra.mxu0 %v2209
    %v2555 = vpop.f32.mrf.mxu0
    %v2556 = vadd.f32 0.0, %v2555
    %v2557 = vpop.f32.mrf.mxu0
    %2558 = vmatprep.mubr.f32.mxu0 0.0
    %2559 = vmatmul.mubr.f32.gmra.mxu0 %v2212
    %v2560 = vpop.f32.mrf.mxu0
    %v2561 = vadd.f32 0.0, %v2560
    %v2562 = vpop.f32.mrf.mxu0
    %2563 = vmatprep.mubr.f32.mxu0 0.0
    %2564 = vmatmul.mubr.f32.gmra.mxu0 %v2215
    %v2565 = vpop.f32.mrf.mxu0
    %v2566 = vadd.f32 0.0, %v2565
    %v2567 = vpop.f32.mrf.mxu0
    %2568 = vmatprep.mubr.f32.mxu0 0.0
    %2569 = vmatmul.mubr.f32.gmra.mxu0 %v2218
    %v2570 = vpop.f32.mrf.mxu0
    %v2571 = vadd.f32 0.0, %v2570
    %v2572 = vpop.f32.mrf.mxu0
    %2573 = vmatprep.mubr.f32.mxu0 0.0
    %2574 = vmatmul.mubr.f32.gmra.mxu0 %v2221
    %v2575 = vpop.f32.mrf.mxu0
    %v2576 = vadd.f32 0.0, %v2575
    %v2577 = vpop.f32.mrf.mxu0
    %2578 = vmatprep.mubr.f32.mxu0 0.0
    %2579 = vmatmul.mubr.f32.gmra.mxu0 %v2224
    %v2580 = vpop.f32.mrf.mxu0
    %v2581 = vadd.f32 0.0, %v2580
    %v2582 = vpop.f32.mrf.mxu0
    %2583 = vmatprep.mubr.f32.mxu0 0.0
    %2584 = vmatmul.mubr.f32.gmra.mxu0 %v2227
    %v2585 = vpop.f32.mrf.mxu0
    %v2586 = vadd.f32 0.0, %v2585
    %v2587 = vpop.f32.mrf.mxu0
    %2588 = vmatprep.mubr.f32.mxu0 0.0
    %2589 = vmatmul.mubr.f32.gmra.mxu0 %v2230
    %v2590 = vpop.f32.mrf.mxu0
    %v2591 = vadd.f32 0.0, %v2590
    %v2592 = vpop.f32.mrf.mxu0
    %2593 = vmatprep.mubr.f32.mxu0 0.0
    %2594 = vmatmul.mubr.f32.gmra.mxu0 %v2233
    %v2595 = vpop.f32.mrf.mxu0
    %v2596 = vadd.f32 0.0, %v2595
    %v2597 = vpop.f32.mrf.mxu0
    %2598 = vmatprep.mubr.f32.mxu0 0.0
    %2599 = vmatmul.mubr.f32.gmra.mxu0 %v2236
    %v2600 = vpop.f32.mrf.mxu0
    %v2601 = vadd.f32 0.0, %v2600
    %v2602 = vpop.f32.mrf.mxu0
    %2603 = vmatprep.mubr.f32.mxu0 0.0
    %2604 = vmatmul.mubr.f32.gmra.mxu0 %v2239
    %v2605 = vpop.f32.mrf.mxu0
    %v2606 = vadd.f32 0.0, %v2605
    %v2607 = vpop.f32.mrf.mxu0
    %2608 = vmatprep.mubr.f32.mxu0 0.0
    %2609 = vmatmul.mubr.f32.gmra.mxu0 %v2242
    %v2610 = vpop.f32.mrf.mxu0
    %v2611 = vadd.f32 0.0, %v2610
    %v2612 = vpop.f32.mrf.mxu0
    %2613 = vmatprep.mubr.f32.mxu0 0.0
    %2614 = vmatmul.mubr.f32.gmra.mxu0 %v2245
    %v2615 = vpop.f32.mrf.mxu0
    %v2616 = vadd.f32 0.0, %v2615
    %v2617 = vpop.f32.mrf.mxu0
    %2618 = vmatprep.mubr.f32.mxu0 0.0
    %2619 = vmatmul.mubr.f32.gmra.mxu0 %v2248
    %v2620 = vpop.f32.mrf.mxu0
    %v2621 = vadd.f32 0.0, %v2620
    %v2622 = vpop.f32.mrf.mxu0
    %2623 = vmatprep.mubr.f32.mxu0 0.0
    %2624 = vmatmul.mubr.f32.gmra.mxu0 %v2251
    %v2625 = vpop.f32.mrf.mxu0
    %v2626 = vadd.f32 0.0, %v2625
    %v2627 = vpop.f32.mrf.mxu0
    %2628 = vmatprep.mubr.f32.mxu0 0.0
    %2629 = vmatmul.mubr.f32.gmra.mxu0 %v2254
    %v2630 = vpop.f32.mrf.mxu0
    %v2631 = vadd.f32 0.0, %v2630
    %v2632 = vpop.f32.mrf.mxu0
    %2633 = vmatprep.mubr.f32.mxu0 0.0
    %2634 = vmatmul.mubr.f32.gmra.mxu0 %v2257
    %v2635 = vpop.f32.mrf.mxu0
    %v2636 = vadd.f32 0.0, %v2635
    %v2637 = vpop.f32.mrf.mxu0
    %2638 = vmatprep.mubr.f32.mxu0 0.0
    %2639 = vmatmul.mubr.f32.gmra.mxu0 %v2260
    %v2640 = vpop.f32.mrf.mxu0
    %v2641 = vadd.f32 0.0, %v2640
    %v2642 = vpop.f32.mrf.mxu0
    %2643 = vmatprep.mubr.f32.mxu0 0.0
    %2644 = vmatmul.mubr.f32.gmra.mxu0 %v2263
    %v2645 = vpop.f32.mrf.mxu0
    %v2646 = vadd.f32 0.0, %v2645
    %v2647 = vpop.f32.mrf.mxu0
    %2648 = vmatprep.mubr.f32.mxu0 0.0
    %2649 = vmatmul.mubr.f32.gmra.mxu0 %v2266
    %v2650 = vpop.f32.mrf.mxu0
    %v2651 = vadd.f32 0.0, %v2650
    %v2652 = vpop.f32.mrf.mxu0
    %2653 = vmatprep.mubr.f32.mxu0 0.0
    %2654 = vmatmul.mubr.f32.gmra.mxu0 %v2269
    %v2655 = vpop.f32.mrf.mxu0
    %v2656 = vadd.f32 0.0, %v2655
    %v2657 = vpop.f32.mrf.mxu0
    %2658 = vdwg.mxu0
    %v2659 = vadd.f32 %v1949, %v2341
    %v2660 = vadd.f32 %v1950, %v2346
    %v2661 = vadd.f32 %v1951, %v2351
    %v2662 = vadd.f32 %v1952, %v2356
    %v2663 = vadd.f32 %v1953, %v2361
    %v2664 = vadd.f32 %v1954, %v2366
    %v2665 = vadd.f32 %v1955, %v2371
    %v2666 = vadd.f32 %v1956, %v2376
    %v2667 = vadd.f32 %v1957, %v2381
    %v2668 = vadd.f32 %v1958, %v2386
    %v2669 = vadd.f32 %v1959, %v2391
    %v2670 = vadd.f32 %v1960, %v2396
    %v2671 = vadd.f32 %v1961, %v2401
    %v2672 = vadd.f32 %v1962, %v2406
    %v2673 = vadd.f32 %v1963, %v2411
    %v2674 = vadd.f32 %v1964, %v2416
    %v2675 = vadd.f32 %v1965, %v2421
    %v2676 = vadd.f32 %v1966, %v2426
    %v2677 = vadd.f32 %v1967, %v2431
    %v2678 = vadd.f32 %v1968, %v2436
    %v2679 = vadd.f32 %v1969, %v2441
    %v2680 = vadd.f32 %v1970, %v2446
    %v2681 = vadd.f32 %v1971, %v2451
    %v2682 = vadd.f32 %v1972, %v2456
    %v2683 = vadd.f32 %v1973, %v2461
    %v2684 = vadd.f32 %v1974, %v2466
    %v2685 = vadd.f32 %v1975, %v2471
    %v2686 = vadd.f32 %v1976, %v2476
    %v2687 = vadd.f32 %v1977, %v2481
    %v2688 = vadd.f32 %v1978, %v2486
    %v2689 = vadd.f32 %v1979, %v2491
    %v2690 = vadd.f32 %v1980, %v2496
    %v2691 = vadd.f32 %v1981, %v2501
    %v2692 = vadd.f32 %v1982, %v2506
    %v2693 = vadd.f32 %v1983, %v2511
    %v2694 = vadd.f32 %v1984, %v2516
    %v2695 = vadd.f32 %v1985, %v2521
    %v2696 = vadd.f32 %v1986, %v2526
    %v2697 = vadd.f32 %v1987, %v2531
    %v2698 = vadd.f32 %v1988, %v2536
    %v2699 = vadd.f32 %v1989, %v2541
    %v2700 = vadd.f32 %v1990, %v2546
    %v2701 = vadd.f32 %v1991, %v2551
    %v2702 = vadd.f32 %v1992, %v2556
    %v2703 = vadd.f32 %v1993, %v2561
    %v2704 = vadd.f32 %v1994, %v2566
    %v2705 = vadd.f32 %v1995, %v2571
    %v2706 = vadd.f32 %v1996, %v2576
    %v2707 = vadd.f32 %v1997, %v2581
    %v2708 = vadd.f32 %v1998, %v2586
    %v2709 = vadd.f32 %v1999, %v2591
    %v2710 = vadd.f32 %v2000, %v2596
    %v2711 = vadd.f32 %v2001, %v2601
    %v2712 = vadd.f32 %v2002, %v2606
    %v2713 = vadd.f32 %v2003, %v2611
    %v2714 = vadd.f32 %v2004, %v2616
    %v2715 = vadd.f32 %v2005, %v2621
    %v2716 = vadd.f32 %v2006, %v2626
    %v2717 = vadd.f32 %v2007, %v2631
    %v2718 = vadd.f32 %v2008, %v2636
    %v2719 = vadd.f32 %v2009, %v2641
    %v2720 = vadd.f32 %v2010, %v2646
    %v2721 = vadd.f32 %v2011, %v2651
    %v2722 = vadd.f32 %v2012, %v2656
    %v2723 = vld [vmem:[%s2013 + $0x1] sm:$0xff]
    %v2724 = vld [vmem:[%s2013 + $0x9] sm:$0xff]
    %v2725 = vld [vmem:[%s2013 + $0x19] sm:$0xff]
    %v2726 = vld [vmem:[%s2013 + $0x21] sm:$0xff]
    %v2727 = vld [vmem:[%s2013 + $0x31] sm:$0xff]
    %v2728 = vld [vmem:[%s2013 + $0x39] sm:$0xff]
    %v2729 = vld [vmem:[%s2013 + $0x49] sm:$0xff]
    %v2730 = vld [vmem:[%s2013 + $0x51] sm:$0xff]
    %v2731 = vld [vmem:[%s2013 + $0x61] sm:$0xff]
    %v2732 = vld [vmem:[%s2013 + $0x69] sm:$0xff]
    %v2733 = vld [vmem:[%s2013 + $0x79] sm:$0xff]
    %v2734 = vld [vmem:[%s2013 + $0x81] sm:$0xff]
    %v2735 = vld [vmem:[%s2013 + $0x91] sm:$0xff]
    %v2736 = vld [vmem:[%s2013 + $0x99] sm:$0xff]
    %v2737 = vld [vmem:[%s2013 + $0xa9] sm:$0xff]
    %v2738 = vld [vmem:[%s2013 + $0xb1] sm:$0xff]
    %v2739 = vld [vmem:[%s2013 + $0xc1] sm:$0xff]
    %v2740 = vld [vmem:[%s2013 + $0xc9] sm:$0xff]
    %v2741 = vld [vmem:[%s2013 + $0xd9] sm:$0xff]
    %v2742 = vld [vmem:[%s2013 + $0xe1] sm:$0xff]
    %v2743 = vld [vmem:[%s2013 + $0xf1] sm:$0xff]
    %v2744 = vld [vmem:[%s2013 + $0xf9] sm:$0xff]
    %v2745 = vld [vmem:[%s2013 + $0x109] sm:$0xff]
    %v2746 = vld [vmem:[%s2013 + $0x111] sm:$0xff]
    %v2747 = vld [vmem:[%s2013 + $0x121] sm:$0xff]
    %v2748 = vld [vmem:[%s2013 + $0x129] sm:$0xff]
    %v2749 = vld [vmem:[%s2013 + $0x139] sm:$0xff]
    %v2750 = vld [vmem:[%s2013 + $0x141] sm:$0xff]
    %v2751 = vld [vmem:[%s2013 + $0x151] sm:$0xff]
    %v2752 = vld [vmem:[%s2013 + $0x159] sm:$0xff]
    %v2753 = vld [vmem:[%s2013 + $0x169] sm:$0xff]
    %v2754 = vld [vmem:[%s2013 + $0x171] sm:$0xff]
    %v2755 = vld [vmem:[%s2013 + $0x1b1] sm:$0xff]
    %v2756 = vld [vmem:[%s2013 + $0x1b9] sm:$0xff]
    %v2757 = vld [vmem:[%s2013 + $0x1c9] sm:$0xff]
    %v2758 = vld [vmem:[%s2013 + $0x1d1] sm:$0xff]
    %v2759 = vld [vmem:[%s2013 + $0x1e1] sm:$0xff]
    %v2760 = vld [vmem:[%s2013 + $0x1e9] sm:$0xff]
    %v2761 = vld [vmem:[%s2013 + $0x1f9] sm:$0xff]
    %v2762 = vld [vmem:[%s2013 + $0x201] sm:$0xff]
    %v2763 = vld [vmem:[%s2013 + $0x211] sm:$0xff]
    %v2764 = vld [vmem:[%s2013 + $0x219] sm:$0xff]
    %v2765 = vld [vmem:[%s2013 + $0x229] sm:$0xff]
    %v2766 = vld [vmem:[%s2013 + $0x231] sm:$0xff]
    %v2767 = vld [vmem:[%s2013 + $0x241] sm:$0xff]
    %v2768 = vld [vmem:[%s2013 + $0x249] sm:$0xff]
    %v2769 = vld [vmem:[%s2013 + $0x259] sm:$0xff]
    %v2770 = vld [vmem:[%s2013 + $0x261] sm:$0xff]
    %v2771 = vld [vmem:[%s2013 + $0x271] sm:$0xff]
    %v2772 = vld [vmem:[%s2013 + $0x279] sm:$0xff]
    %v2773 = vld [vmem:[%s2013 + $0x289] sm:$0xff]
    %v2774 = vld [vmem:[%s2013 + $0x291] sm:$0xff]
    %v2775 = vld [vmem:[%s2013 + $0x2a1] sm:$0xff]
    %v2776 = vld [vmem:[%s2013 + $0x2a9] sm:$0xff]
    %v2777 = vld [vmem:[%s2013 + $0x2b9] sm:$0xff]
    %v2778 = vld [vmem:[%s2013 + $0x2c1] sm:$0xff]
    %v2779 = vld [vmem:[%s2013 + $0x2d1] sm:$0xff]
    %v2780 = vld [vmem:[%s2013 + $0x2d9] sm:$0xff]
    %v2781 = vld [vmem:[%s2013 + $0x2e9] sm:$0xff]
    %v2782 = vld [vmem:[%s2013 + $0x2f1] sm:$0xff]
    %v2783 = vld [vmem:[%s2013 + $0x301] sm:$0xff]
    %v2784 = vld [vmem:[%s2013 + $0x309] sm:$0xff]
    %v2785 = vld [vmem:[%s2013 + $0x319] sm:$0xff]
    %v2786 = vld [vmem:[%s2013 + $0x321] sm:$0xff]
    %v2787 = vld [vmem:[%s1 + $0x20] sm:$0x7]
    %v2789 = vsel %vm142, %v2723, 0
    %v2792 = vsel %vm142, %v2724, 0
    %v2795 = vsel %vm142, %v2725, 0
    %v2798 = vsel %vm142, %v2726, 0
    %v2801 = vsel %vm142, %v2727, 0
    %v2804 = vsel %vm142, %v2728, 0
    %v2807 = vsel %vm142, %v2729, 0
    %v2810 = vsel %vm142, %v2730, 0
    %v2813 = vsel %vm142, %v2731, 0
    %v2816 = vsel %vm142, %v2732, 0
    %v2819 = vsel %vm142, %v2733, 0
    %v2822 = vsel %vm142, %v2734, 0
    %v2825 = vsel %vm142, %v2735, 0
    %v2828 = vsel %vm142, %v2736, 0
    %v2831 = vsel %vm142, %v2737, 0
    %v2834 = vsel %vm142, %v2738, 0
    %v2837 = vsel %vm142, %v2739, 0
    %v2840 = vsel %vm142, %v2740, 0
    %v2843 = vsel %vm142, %v2741, 0
    %v2846 = vsel %vm142, %v2742, 0
    %v2849 = vsel %vm142, %v2743, 0
    %v2852 = vsel %vm142, %v2744, 0
    %v2855 = vsel %vm142, %v2745, 0
    %v2858 = vsel %vm142, %v2746, 0
    %v2861 = vsel %vm142, %v2747, 0
    %v2864 = vsel %vm142, %v2748, 0
    %v2867 = vsel %vm142, %v2749, 0
    %v2870 = vsel %vm142, %v2750, 0
    %v2873 = vsel %vm142, %v2751, 0
    %v2876 = vsel %vm142, %v2752, 0
    %v2879 = vsel %vm142, %v2753, 0
    %v2882 = vsel %vm142, %v2754, 0
    %v2885 = vsel %vm142, %v2755, 0
    %v2888 = vsel %vm142, %v2756, 0
    %v2891 = vsel %vm142, %v2757, 0
    %v2894 = vsel %vm142, %v2758, 0
    %v2897 = vsel %vm142, %v2759, 0
    %v2900 = vsel %vm142, %v2760, 0
    %v2903 = vsel %vm142, %v2761, 0
    %v2906 = vsel %vm142, %v2762, 0
    %v2909 = vsel %vm142, %v2763, 0
    %v2912 = vsel %vm142, %v2764, 0
    %v2915 = vsel %vm142, %v2765, 0
    %v2918 = vsel %vm142, %v2766, 0
    %v2921 = vsel %vm142, %v2767, 0
    %v2924 = vsel %vm142, %v2768, 0
    %v2927 = vsel %vm142, %v2769, 0
    %v2930 = vsel %vm142, %v2770, 0
    %v2933 = vsel %vm142, %v2771, 0
    %v2936 = vsel %vm142, %v2772, 0
    %v2939 = vsel %vm142, %v2773, 0
    %v2942 = vsel %vm142, %v2774, 0
    %v2945 = vsel %vm142, %v2775, 0
    %v2948 = vsel %vm142, %v2776, 0
    %v2951 = vsel %vm142, %v2777, 0
    %v2954 = vsel %vm142, %v2778, 0
    %v2957 = vsel %vm142, %v2779, 0
    %v2960 = vsel %vm142, %v2780, 0
    %v2963 = vsel %vm142, %v2781, 0
    %v2966 = vsel %vm142, %v2782, 0
    %v2969 = vsel %vm142, %v2783, 0
    %v2972 = vsel %vm142, %v2784, 0
    %v2975 = vsel %vm142, %v2785, 0
    %v2978 = vsel %vm142, %v2786, 0
    %v2981 = vsel %vm335, %v2787, 0
    %2983 = vmatprep.subr.mxu0 0.0
    %2984 = vmatpush1.msra.mxu0 0.0
    %2985 = vmatprep.subr.mxu0 0.0
    %2986 = vmatpush1.msra.mxu0 0.0
    %2987 = vmatprep.subr.mxu0 0.0
    %2988 = vmatpush1.msra.mxu0 0.0
    %2989 = vmatprep.subr.mxu0 0.0
    %2990 = vmatpush1.msra.mxu0 0.0
    %2991 = vmatprep.subr.mxu0 0.0
    %2992 = vmatpush1.msra.mxu0 0.0
    %2993 = vmatprep.subr.mxu0 0.0
    %2994 = vmatpush1.msra.mxu0 0.0
    %2995 = vmatprep.subr.mxu0 0.0
    %2996 = vmatpush1.msra.mxu0 0.0
    %2997 = vmatprep.subr.mxu0 0.0
    %2998 = vmatpush1.msra.mxu0 0.0
    %2999 = vmatprep.subr.mxu0 0.0
    %3000 = vmatpush1.msra.mxu0 0.0
    %3001 = vmatprep.subr.mxu0 0.0
    %3002 = vmatpush1.msra.mxu0 0.0
    %3003 = vmatprep.subr.mxu0 0.0
    %3004 = vmatpush1.msra.mxu0 0.0
    %3005 = vmatprep.subr.mxu0 0.0
    %3006 = vmatpush1.msra.mxu0 0.0
    %3007 = vmatprep.subr.mxu0 0.0
    %3008 = vmatpush1.msra.mxu0 0.0
    %3009 = vmatprep.subr.mxu0 0.0
    %3010 = vmatpush1.msra.mxu0 0.0
    %3011 = vmatprep.subr.mxu0 0.0
    %3012 = vmatpush1.msra.mxu0 0.0
    %3013 = vmatprep.subr.mxu0 0.0
    %3014 = vmatpush1.msra.mxu0 %v2981
    %3015 = vmatprep.subr.mxu0 0.0
    %3016 = vmatpush2.msra.mxu0 0.0
    %3017 = vmatprep.subr.mxu0 0.0
    %3018 = vmatpush2.msra.mxu0 0.0
    %3019 = vmatprep.subr.mxu0 0.0
    %3020 = vmatpush2.msra.mxu0 0.0
    %3021 = vmatprep.subr.mxu0 0.0
    %3022 = vmatpush2.msra.mxu0 0.0
    %3023 = vmatprep.subr.mxu0 0.0
    %3024 = vmatpush2.msra.mxu0 0.0
    %3025 = vmatprep.subr.mxu0 0.0
    %3026 = vmatpush2.msra.mxu0 0.0
    %3027 = vmatprep.subr.mxu0 0.0
    %3028 = vmatpush2.msra.mxu0 0.0
    %3029 = vmatprep.subr.mxu0 0.0
    %3030 = vmatpush2.msra.mxu0 0.0
    %3031 = vmatprep.subr.mxu0 0.0
    %3032 = vmatpush2.msra.mxu0 0.0
    %3033 = vmatprep.subr.mxu0 0.0
    %3034 = vmatpush2.msra.mxu0 0.0
    %3035 = vmatprep.subr.mxu0 0.0
    %3036 = vmatpush2.msra.mxu0 0.0
    %3037 = vmatprep.subr.mxu0 0.0
    %3038 = vmatpush2.msra.mxu0 0.0
    %3039 = vmatprep.subr.mxu0 0.0
    %3040 = vmatpush2.msra.mxu0 0.0
    %3041 = vmatprep.subr.mxu0 0.0
    %3042 = vmatpush2.msra.mxu0 0.0
    %3043 = vmatprep.subr.mxu0 0.0
    %3044 = vmatpush2.msra.mxu0 0.0
    %3045 = vmatprep.subr.mxu0 0.0
    %3046 = vmatpush2.msra.mxu0 0.0
    %3047 = vmatprep.mubr.f32.mxu0 0.0
    %3048 = vmatmul.mubr.f32.gmra.mxu0 %v2789
    %v3049 = vpop.f32.mrf.mxu0
    %v3050 = vadd.f32 0.0, %v3049
    %v3051 = vpop.f32.mrf.mxu0
    %3052 = vmatprep.mubr.f32.mxu0 0.0
    %3053 = vmatmul.mubr.f32.gmra.mxu0 %v2792
    %v3054 = vpop.f32.mrf.mxu0
    %v3055 = vadd.f32 0.0, %v3054
    %v3056 = vpop.f32.mrf.mxu0
    %3057 = vmatprep.mubr.f32.mxu0 0.0
    %3058 = vmatmul.mubr.f32.gmra.mxu0 %v2795
    %v3059 = vpop.f32.mrf.mxu0
    %v3060 = vadd.f32 0.0, %v3059
    %v3061 = vpop.f32.mrf.mxu0
    %3062 = vmatprep.mubr.f32.mxu0 0.0
    %3063 = vmatmul.mubr.f32.gmra.mxu0 %v2798
    %v3064 = vpop.f32.mrf.mxu0
    %v3065 = vadd.f32 0.0, %v3064
    %v3066 = vpop.f32.mrf.mxu0
    %3067 = vmatprep.mubr.f32.mxu0 0.0
    %3068 = vmatmul.mubr.f32.gmra.mxu0 %v2801
    %v3069 = vpop.f32.mrf.mxu0
    %v3070 = vadd.f32 0.0, %v3069
    %v3071 = vpop.f32.mrf.mxu0
    %3072 = vmatprep.mubr.f32.mxu0 0.0
    %3073 = vmatmul.mubr.f32.gmra.mxu0 %v2804
    %v3074 = vpop.f32.mrf.mxu0
    %v3075 = vadd.f32 0.0, %v3074
    %v3076 = vpop.f32.mrf.mxu0
    %3077 = vmatprep.mubr.f32.mxu0 0.0
    %3078 = vmatmul.mubr.f32.gmra.mxu0 %v2807
    %v3079 = vpop.f32.mrf.mxu0
    %v3080 = vadd.f32 0.0, %v3079
    %v3081 = vpop.f32.mrf.mxu0
    %3082 = vmatprep.mubr.f32.mxu0 0.0
    %3083 = vmatmul.mubr.f32.gmra.mxu0 %v2810
    %v3084 = vpop.f32.mrf.mxu0
    %v3085 = vadd.f32 0.0, %v3084
    %v3086 = vpop.f32.mrf.mxu0
    %3087 = vmatprep.mubr.f32.mxu0 0.0
    %3088 = vmatmul.mubr.f32.gmra.mxu0 %v2813
    %v3089 = vpop.f32.mrf.mxu0
    %v3090 = vadd.f32 0.0, %v3089
    %v3091 = vpop.f32.mrf.mxu0
    %3092 = vmatprep.mubr.f32.mxu0 0.0
    %3093 = vmatmul.mubr.f32.gmra.mxu0 %v2816
    %v3094 = vpop.f32.mrf.mxu0
    %v3095 = vadd.f32 0.0, %v3094
    %v3096 = vpop.f32.mrf.mxu0
    %3097 = vmatprep.mubr.f32.mxu0 0.0
    %3098 = vmatmul.mubr.f32.gmra.mxu0 %v2819
    %v3099 = vpop.f32.mrf.mxu0
    %v3100 = vadd.f32 0.0, %v3099
    %v3101 = vpop.f32.mrf.mxu0
    %3102 = vmatprep.mubr.f32.mxu0 0.0
    %3103 = vmatmul.mubr.f32.gmra.mxu0 %v2822
    %v3104 = vpop.f32.mrf.mxu0
    %v3105 = vadd.f32 0.0, %v3104
    %v3106 = vpop.f32.mrf.mxu0
    %3107 = vmatprep.mubr.f32.mxu0 0.0
    %3108 = vmatmul.mubr.f32.gmra.mxu0 %v2825
    %v3109 = vpop.f32.mrf.mxu0
    %v3110 = vadd.f32 0.0, %v3109
    %v3111 = vpop.f32.mrf.mxu0
    %3112 = vmatprep.mubr.f32.mxu0 0.0
    %3113 = vmatmul.mubr.f32.gmra.mxu0 %v2828
    %v3114 = vpop.f32.mrf.mxu0
    %v3115 = vadd.f32 0.0, %v3114
    %v3116 = vpop.f32.mrf.mxu0
    %3117 = vmatprep.mubr.f32.mxu0 0.0
    %3118 = vmatmul.mubr.f32.gmra.mxu0 %v2831
    %v3119 = vpop.f32.mrf.mxu0
    %v3120 = vadd.f32 0.0, %v3119
    %v3121 = vpop.f32.mrf.mxu0
    %3122 = vmatprep.mubr.f32.mxu0 0.0
    %3123 = vmatmul.mubr.f32.gmra.mxu0 %v2834
    %v3124 = vpop.f32.mrf.mxu0
    %v3125 = vadd.f32 0.0, %v3124
    %v3126 = vpop.f32.mrf.mxu0
    %3127 = vmatprep.mubr.f32.mxu0 0.0
    %3128 = vmatmul.mubr.f32.gmra.mxu0 %v2837
    %v3129 = vpop.f32.mrf.mxu0
    %v3130 = vadd.f32 0.0, %v3129
    %v3131 = vpop.f32.mrf.mxu0
    %3132 = vmatprep.mubr.f32.mxu0 0.0
    %3133 = vmatmul.mubr.f32.gmra.mxu0 %v2840
    %v3134 = vpop.f32.mrf.mxu0
    %v3135 = vadd.f32 0.0, %v3134
    %v3136 = vpop.f32.mrf.mxu0
    %3137 = vmatprep.mubr.f32.mxu0 0.0
    %3138 = vmatmul.mubr.f32.gmra.mxu0 %v2843
    %v3139 = vpop.f32.mrf.mxu0
    %v3140 = vadd.f32 0.0, %v3139
    %v3141 = vpop.f32.mrf.mxu0
    %3142 = vmatprep.mubr.f32.mxu0 0.0
    %3143 = vmatmul.mubr.f32.gmra.mxu0 %v2846
    %v3144 = vpop.f32.mrf.mxu0
    %v3145 = vadd.f32 0.0, %v3144
    %v3146 = vpop.f32.mrf.mxu0
    %3147 = vmatprep.mubr.f32.mxu0 0.0
    %3148 = vmatmul.mubr.f32.gmra.mxu0 %v2849
    %v3149 = vpop.f32.mrf.mxu0
    %v3150 = vadd.f32 0.0, %v3149
    %v3151 = vpop.f32.mrf.mxu0
    %3152 = vmatprep.mubr.f32.mxu0 0.0
    %3153 = vmatmul.mubr.f32.gmra.mxu0 %v2852
    %v3154 = vpop.f32.mrf.mxu0
    %v3155 = vadd.f32 0.0, %v3154
    %v3156 = vpop.f32.mrf.mxu0
    %3157 = vmatprep.mubr.f32.mxu0 0.0
    %3158 = vmatmul.mubr.f32.gmra.mxu0 %v2855
    %v3159 = vpop.f32.mrf.mxu0
    %v3160 = vadd.f32 0.0, %v3159
    %v3161 = vpop.f32.mrf.mxu0
    %3162 = vmatprep.mubr.f32.mxu0 0.0
    %3163 = vmatmul.mubr.f32.gmra.mxu0 %v2858
    %v3164 = vpop.f32.mrf.mxu0
    %v3165 = vadd.f32 0.0, %v3164
    %v3166 = vpop.f32.mrf.mxu0
    %3167 = vmatprep.mubr.f32.mxu0 0.0
    %3168 = vmatmul.mubr.f32.gmra.mxu0 %v2861
    %v3169 = vpop.f32.mrf.mxu0
    %v3170 = vadd.f32 0.0, %v3169
    %v3171 = vpop.f32.mrf.mxu0
    %3172 = vmatprep.mubr.f32.mxu0 0.0
    %3173 = vmatmul.mubr.f32.gmra.mxu0 %v2864
    %v3174 = vpop.f32.mrf.mxu0
    %v3175 = vadd.f32 0.0, %v3174
    %v3176 = vpop.f32.mrf.mxu0
    %3177 = vmatprep.mubr.f32.mxu0 0.0
    %3178 = vmatmul.mubr.f32.gmra.mxu0 %v2867
    %v3179 = vpop.f32.mrf.mxu0
    %v3180 = vadd.f32 0.0, %v3179
    %v3181 = vpop.f32.mrf.mxu0
    %3182 = vmatprep.mubr.f32.mxu0 0.0
    %3183 = vmatmul.mubr.f32.gmra.mxu0 %v2870
    %v3184 = vpop.f32.mrf.mxu0
    %v3185 = vadd.f32 0.0, %v3184
    %v3186 = vpop.f32.mrf.mxu0
    %3187 = vmatprep.mubr.f32.mxu0 0.0
    %3188 = vmatmul.mubr.f32.gmra.mxu0 %v2873
    %v3189 = vpop.f32.mrf.mxu0
    %v3190 = vadd.f32 0.0, %v3189
    %v3191 = vpop.f32.mrf.mxu0
    %3192 = vmatprep.mubr.f32.mxu0 0.0
    %3193 = vmatmul.mubr.f32.gmra.mxu0 %v2876
    %v3194 = vpop.f32.mrf.mxu0
    %v3195 = vadd.f32 0.0, %v3194
    %v3196 = vpop.f32.mrf.mxu0
    %3197 = vmatprep.mubr.f32.mxu0 0.0
    %3198 = vmatmul.mubr.f32.gmra.mxu0 %v2879
    %v3199 = vpop.f32.mrf.mxu0
    %v3200 = vadd.f32 0.0, %v3199
    %v3201 = vpop.f32.mrf.mxu0
    %3202 = vmatprep.mubr.f32.mxu0 0.0
    %3203 = vmatmul.mubr.f32.gmra.mxu0 %v2882
    %v3204 = vpop.f32.mrf.mxu0
    %v3205 = vadd.f32 0.0, %v3204
    %v3206 = vpop.f32.mrf.mxu0
    %3207 = vmatprep.mubr.f32.mxu0 0.0
    %3208 = vmatmul.mubr.f32.gmra.mxu0 %v2885
    %v3209 = vpop.f32.mrf.mxu0
    %v3210 = vadd.f32 0.0, %v3209
    %v3211 = vpop.f32.mrf.mxu0
    %3212 = vmatprep.mubr.f32.mxu0 0.0
    %3213 = vmatmul.mubr.f32.gmra.mxu0 %v2888
    %v3214 = vpop.f32.mrf.mxu0
    %v3215 = vadd.f32 0.0, %v3214
    %v3216 = vpop.f32.mrf.mxu0
    %3217 = vmatprep.mubr.f32.mxu0 0.0
    %3218 = vmatmul.mubr.f32.gmra.mxu0 %v2891
    %v3219 = vpop.f32.mrf.mxu0
    %v3220 = vadd.f32 0.0, %v3219
    %v3221 = vpop.f32.mrf.mxu0
    %3222 = vmatprep.mubr.f32.mxu0 0.0
    %3223 = vmatmul.mubr.f32.gmra.mxu0 %v2894
    %v3224 = vpop.f32.mrf.mxu0
    %v3225 = vadd.f32 0.0, %v3224
    %v3226 = vpop.f32.mrf.mxu0
    %3227 = vmatprep.mubr.f32.mxu0 0.0
    %3228 = vmatmul.mubr.f32.gmra.mxu0 %v2897
    %v3229 = vpop.f32.mrf.mxu0
    %v3230 = vadd.f32 0.0, %v3229
    %v3231 = vpop.f32.mrf.mxu0
    %3232 = vmatprep.mubr.f32.mxu0 0.0
    %3233 = vmatmul.mubr.f32.gmra.mxu0 %v2900
    %v3234 = vpop.f32.mrf.mxu0
    %v3235 = vadd.f32 0.0, %v3234
    %v3236 = vpop.f32.mrf.mxu0
    %3237 = vmatprep.mubr.f32.mxu0 0.0
    %3238 = vmatmul.mubr.f32.gmra.mxu0 %v2903
    %v3239 = vpop.f32.mrf.mxu0
    %v3240 = vadd.f32 0.0, %v3239
    %v3241 = vpop.f32.mrf.mxu0
    %3242 = vmatprep.mubr.f32.mxu0 0.0
    %3243 = vmatmul.mubr.f32.gmra.mxu0 %v2906
    %v3244 = vpop.f32.mrf.mxu0
    %v3245 = vadd.f32 0.0, %v3244
    %v3246 = vpop.f32.mrf.mxu0
    %3247 = vmatprep.mubr.f32.mxu0 0.0
    %3248 = vmatmul.mubr.f32.gmra.mxu0 %v2909
    %v3249 = vpop.f32.mrf.mxu0
    %v3250 = vadd.f32 0.0, %v3249
    %v3251 = vpop.f32.mrf.mxu0
    %3252 = vmatprep.mubr.f32.mxu0 0.0
    %3253 = vmatmul.mubr.f32.gmra.mxu0 %v2912
    %v3254 = vpop.f32.mrf.mxu0
    %v3255 = vadd.f32 0.0, %v3254
    %v3256 = vpop.f32.mrf.mxu0
    %3257 = vmatprep.mubr.f32.mxu0 0.0
    %3258 = vmatmul.mubr.f32.gmra.mxu0 %v2915
    %v3259 = vpop.f32.mrf.mxu0
    %v3260 = vadd.f32 0.0, %v3259
    %v3261 = vpop.f32.mrf.mxu0
    %3262 = vmatprep.mubr.f32.mxu0 0.0
    %3263 = vmatmul.mubr.f32.gmra.mxu0 %v2918
    %v3264 = vpop.f32.mrf.mxu0
    %v3265 = vadd.f32 0.0, %v3264
    %v3266 = vpop.f32.mrf.mxu0
    %3267 = vmatprep.mubr.f32.mxu0 0.0
    %3268 = vmatmul.mubr.f32.gmra.mxu0 %v2921
    %v3269 = vpop.f32.mrf.mxu0
    %v3270 = vadd.f32 0.0, %v3269
    %v3271 = vpop.f32.mrf.mxu0
    %3272 = vmatprep.mubr.f32.mxu0 0.0
    %3273 = vmatmul.mubr.f32.gmra.mxu0 %v2924
    %v3274 = vpop.f32.mrf.mxu0
    %v3275 = vadd.f32 0.0, %v3274
    %v3276 = vpop.f32.mrf.mxu0
    %3277 = vmatprep.mubr.f32.mxu0 0.0
    %3278 = vmatmul.mubr.f32.gmra.mxu0 %v2927
    %v3279 = vpop.f32.mrf.mxu0
    %v3280 = vadd.f32 0.0, %v3279
    %v3281 = vpop.f32.mrf.mxu0
    %3282 = vmatprep.mubr.f32.mxu0 0.0
    %3283 = vmatmul.mubr.f32.gmra.mxu0 %v2930
    %v3284 = vpop.f32.mrf.mxu0
    %v3285 = vadd.f32 0.0, %v3284
    %v3286 = vpop.f32.mrf.mxu0
    %3287 = vmatprep.mubr.f32.mxu0 0.0
    %3288 = vmatmul.mubr.f32.gmra.mxu0 %v2933
    %v3289 = vpop.f32.mrf.mxu0
    %v3290 = vadd.f32 0.0, %v3289
    %v3291 = vpop.f32.mrf.mxu0
    %3292 = vmatprep.mubr.f32.mxu0 0.0
    %3293 = vmatmul.mubr.f32.gmra.mxu0 %v2936
    %v3294 = vpop.f32.mrf.mxu0
    %v3295 = vadd.f32 0.0, %v3294
    %v3296 = vpop.f32.mrf.mxu0
    %3297 = vmatprep.mubr.f32.mxu0 0.0
    %3298 = vmatmul.mubr.f32.gmra.mxu0 %v2939
    %v3299 = vpop.f32.mrf.mxu0
    %v3300 = vadd.f32 0.0, %v3299
    %v3301 = vpop.f32.mrf.mxu0
    %3302 = vmatprep.mubr.f32.mxu0 0.0
    %3303 = vmatmul.mubr.f32.gmra.mxu0 %v2942
    %v3304 = vpop.f32.mrf.mxu0
    %v3305 = vadd.f32 0.0, %v3304
    %v3306 = vpop.f32.mrf.mxu0
    %3307 = vmatprep.mubr.f32.mxu0 0.0
    %3308 = vmatmul.mubr.f32.gmra.mxu0 %v2945
    %v3309 = vpop.f32.mrf.mxu0
    %v3310 = vadd.f32 0.0, %v3309
    %v3311 = vpop.f32.mrf.mxu0
    %3312 = vmatprep.mubr.f32.mxu0 0.0
    %3313 = vmatmul.mubr.f32.gmra.mxu0 %v2948
    %v3314 = vpop.f32.mrf.mxu0
    %v3315 = vadd.f32 0.0, %v3314
    %v3316 = vpop.f32.mrf.mxu0
    %3317 = vmatprep.mubr.f32.mxu0 0.0
    %3318 = vmatmul.mubr.f32.gmra.mxu0 %v2951
    %v3319 = vpop.f32.mrf.mxu0
    %v3320 = vadd.f32 0.0, %v3319
    %v3321 = vpop.f32.mrf.mxu0
    %3322 = vmatprep.mubr.f32.mxu0 0.0
    %3323 = vmatmul.mubr.f32.gmra.mxu0 %v2954
    %v3324 = vpop.f32.mrf.mxu0
    %v3325 = vadd.f32 0.0, %v3324
    %v3326 = vpop.f32.mrf.mxu0
    %3327 = vmatprep.mubr.f32.mxu0 0.0
    %3328 = vmatmul.mubr.f32.gmra.mxu0 %v2957
    %v3329 = vpop.f32.mrf.mxu0
    %v3330 = vadd.f32 0.0, %v3329
    %v3331 = vpop.f32.mrf.mxu0
    %3332 = vmatprep.mubr.f32.mxu0 0.0
    %3333 = vmatmul.mubr.f32.gmra.mxu0 %v2960
    %v3334 = vpop.f32.mrf.mxu0
    %v3335 = vadd.f32 0.0, %v3334
    %v3336 = vpop.f32.mrf.mxu0
    %3337 = vmatprep.mubr.f32.mxu0 0.0
    %3338 = vmatmul.mubr.f32.gmra.mxu0 %v2963
    %v3339 = vpop.f32.mrf.mxu0
    %v3340 = vadd.f32 0.0, %v3339
    %v3341 = vpop.f32.mrf.mxu0
    %3342 = vmatprep.mubr.f32.mxu0 0.0
    %3343 = vmatmul.mubr.f32.gmra.mxu0 %v2966
    %v3344 = vpop.f32.mrf.mxu0
    %v3345 = vadd.f32 0.0, %v3344
    %v3346 = vpop.f32.mrf.mxu0
    %3347 = vmatprep.mubr.f32.mxu0 0.0
    %3348 = vmatmul.mubr.f32.gmra.mxu0 %v2969
    %v3349 = vpop.f32.mrf.mxu0
    %v3350 = vadd.f32 0.0, %v3349
    %v3351 = vpop.f32.mrf.mxu0
    %3352 = vmatprep.mubr.f32.mxu0 0.0
    %3353 = vmatmul.mubr.f32.gmra.mxu0 %v2972
    %v3354 = vpop.f32.mrf.mxu0
    %v3355 = vadd.f32 0.0, %v3354
    %v3356 = vpop.f32.mrf.mxu0
    %3357 = vmatprep.mubr.f32.mxu0 0.0
    %3358 = vmatmul.mubr.f32.gmra.mxu0 %v2975
    %v3359 = vpop.f32.mrf.mxu0
    %v3360 = vadd.f32 0.0, %v3359
    %v3361 = vpop.f32.mrf.mxu0
    %3362 = vmatprep.mubr.f32.mxu0 0.0
    %3363 = vmatmul.mubr.f32.gmra.mxu0 %v2978
    %v3364 = vpop.f32.mrf.mxu0
    %v3365 = vadd.f32 0.0, %v3364
    %v3366 = vpop.f32.mrf.mxu0
    %3367 = vdwg.mxu0
    %v3368 = vadd.f32 %v2659, %v3050
    %v3369 = vadd.f32 %v2660, %v3055
    %v3370 = vadd.f32 %v2661, %v3060
    %v3371 = vadd.f32 %v2662, %v3065
    %v3372 = vadd.f32 %v2663, %v3070
    %v3373 = vadd.f32 %v2664, %v3075
    %v3374 = vadd.f32 %v2665, %v3080
    %v3375 = vadd.f32 %v2666, %v3085
    %v3376 = vadd.f32 %v2667, %v3090
    %v3377 = vadd.f32 %v2668, %v3095
    %v3378 = vadd.f32 %v2669, %v3100
    %v3379 = vadd.f32 %v2670, %v3105
    %v3380 = vadd.f32 %v2671, %v3110
    %v3381 = vadd.f32 %v2672, %v3115
    %v3382 = vadd.f32 %v2673, %v3120
    %v3383 = vadd.f32 %v2674, %v3125
    %v3384 = vadd.f32 %v2675, %v3130
    %v3385 = vadd.f32 %v2676, %v3135
    %v3386 = vadd.f32 %v2677, %v3140
    %v3387 = vadd.f32 %v2678, %v3145
    %v3388 = vadd.f32 %v2679, %v3150
    %v3389 = vadd.f32 %v2680, %v3155
    %v3390 = vadd.f32 %v2681, %v3160
    %v3391 = vadd.f32 %v2682, %v3165
    %v3392 = vadd.f32 %v2683, %v3170
    %v3393 = vadd.f32 %v2684, %v3175
    %v3394 = vadd.f32 %v2685, %v3180
    %v3395 = vadd.f32 %v2686, %v3185
    %v3396 = vadd.f32 %v2687, %v3190
    %v3397 = vadd.f32 %v2688, %v3195
    %v3398 = vadd.f32 %v2689, %v3200
    %v3399 = vadd.f32 %v2690, %v3205
    %v3400 = vadd.f32 %v2691, %v3210
    %v3401 = vadd.f32 %v2692, %v3215
    %v3402 = vadd.f32 %v2693, %v3220
    %v3403 = vadd.f32 %v2694, %v3225
    %v3404 = vadd.f32 %v2695, %v3230
    %v3405 = vadd.f32 %v2696, %v3235
    %v3406 = vadd.f32 %v2697, %v3240
    %v3407 = vadd.f32 %v2698, %v3245
    %v3408 = vadd.f32 %v2699, %v3250
    %v3409 = vadd.f32 %v2700, %v3255
    %v3410 = vadd.f32 %v2701, %v3260
    %v3411 = vadd.f32 %v2702, %v3265
    %v3412 = vadd.f32 %v2703, %v3270
    %v3413 = vadd.f32 %v2704, %v3275
    %v3414 = vadd.f32 %v2705, %v3280
    %v3415 = vadd.f32 %v2706, %v3285
    %v3416 = vadd.f32 %v2707, %v3290
    %v3417 = vadd.f32 %v2708, %v3295
    %v3418 = vadd.f32 %v2709, %v3300
    %v3419 = vadd.f32 %v2710, %v3305
    %v3420 = vadd.f32 %v2711, %v3310
    %v3421 = vadd.f32 %v2712, %v3315
    %v3422 = vadd.f32 %v2713, %v3320
    %v3423 = vadd.f32 %v2714, %v3325
    %v3424 = vadd.f32 %v2715, %v3330
    %v3425 = vadd.f32 %v2716, %v3335
    %v3426 = vadd.f32 %v2717, %v3340
    %v3427 = vadd.f32 %v2718, %v3345
    %v3428 = vadd.f32 %v2719, %v3350
    %v3429 = vadd.f32 %v2720, %v3355
    %v3430 = vadd.f32 %v2721, %v3360
    %v3431 = vadd.f32 %v2722, %v3365
    %v3432 = vld [vmem:[%s2013 + $0x2] sm:$0xff]
    %v3433 = vld [vmem:[%s2013 + $0xa] sm:$0xff]
    %v3434 = vld [vmem:[%s2013 + $0x1a] sm:$0xff]
    %v3435 = vld [vmem:[%s2013 + $0x22] sm:$0xff]
    %v3436 = vld [vmem:[%s2013 + $0x32] sm:$0xff]
    %v3437 = vld [vmem:[%s2013 + $0x3a] sm:$0xff]
    %v3438 = vld [vmem:[%s2013 + $0x4a] sm:$0xff]
    %v3439 = vld [vmem:[%s2013 + $0x52] sm:$0xff]
    %v3440 = vld [vmem:[%s2013 + $0x62] sm:$0xff]
    %v3441 = vld [vmem:[%s2013 + $0x6a] sm:$0xff]
    %v3442 = vld [vmem:[%s2013 + $0x7a] sm:$0xff]
    %v3443 = vld [vmem:[%s2013 + $0x82] sm:$0xff]
    %v3444 = vld [vmem:[%s2013 + $0x92] sm:$0xff]
    %v3445 = vld [vmem:[%s2013 + $0x9a] sm:$0xff]
    %v3446 = vld [vmem:[%s2013 + $0xaa] sm:$0xff]
    %v3447 = vld [vmem:[%s2013 + $0xb2] sm:$0xff]
    %v3448 = vld [vmem:[%s2013 + $0xc2] sm:$0xff]
    %v3449 = vld [vmem:[%s2013 + $0xca] sm:$0xff]
    %v3450 = vld [vmem:[%s2013 + $0xda] sm:$0xff]
    %v3451 = vld [vmem:[%s2013 + $0xe2] sm:$0xff]
    %v3452 = vld [vmem:[%s2013 + $0xf2] sm:$0xff]
    %v3453 = vld [vmem:[%s2013 + $0xfa] sm:$0xff]
    %v3454 = vld [vmem:[%s2013 + $0x10a] sm:$0xff]
    %v3455 = vld [vmem:[%s2013 + $0x112] sm:$0xff]
    %v3456 = vld [vmem:[%s2013 + $0x122] sm:$0xff]
    %v3457 = vld [vmem:[%s2013 + $0x12a] sm:$0xff]
    %v3458 = vld [vmem:[%s2013 + $0x13a] sm:$0xff]
    %v3459 = vld [vmem:[%s2013 + $0x142] sm:$0xff]
    %v3460 = vld [vmem:[%s2013 + $0x152] sm:$0xff]
    %v3461 = vld [vmem:[%s2013 + $0x15a] sm:$0xff]
    %v3462 = vld [vmem:[%s2013 + $0x16a] sm:$0xff]
    %v3463 = vld [vmem:[%s2013 + $0x172] sm:$0xff]
    %v3464 = vld [vmem:[%s2013 + $0x1b2] sm:$0xff]
    %v3465 = vld [vmem:[%s2013 + $0x1ba] sm:$0xff]
    %v3466 = vld [vmem:[%s2013 + $0x1ca] sm:$0xff]
    %v3467 = vld [vmem:[%s2013 + $0x1d2] sm:$0xff]
    %v3468 = vld [vmem:[%s2013 + $0x1e2] sm:$0xff]
    %v3469 = vld [vmem:[%s2013 + $0x1ea] sm:$0xff]
    %v3470 = vld [vmem:[%s2013 + $0x1fa] sm:$0xff]
    %v3471 = vld [vmem:[%s2013 + $0x202] sm:$0xff]
    %v3472 = vld [vmem:[%s2013 + $0x212] sm:$0xff]
    %v3473 = vld [vmem:[%s2013 + $0x21a] sm:$0xff]
    %v3474 = vld [vmem:[%s2013 + $0x22a] sm:$0xff]
    %v3475 = vld [vmem:[%s2013 + $0x232] sm:$0xff]
    %v3476 = vld [vmem:[%s2013 + $0x242] sm:$0xff]
    %v3477 = vld [vmem:[%s2013 + $0x24a] sm:$0xff]
    %v3478 = vld [vmem:[%s2013 + $0x25a] sm:$0xff]
    %v3479 = vld [vmem:[%s2013 + $0x262] sm:$0xff]
    %v3480 = vld [vmem:[%s2013 + $0x272] sm:$0xff]
    %v3481 = vld [vmem:[%s2013 + $0x27a] sm:$0xff]
    %v3482 = vld [vmem:[%s2013 + $0x28a] sm:$0xff]
    %v3483 = vld [vmem:[%s2013 + $0x292] sm:$0xff]
    %v3484 = vld [vmem:[%s2013 + $0x2a2] sm:$0xff]
    %v3485 = vld [vmem:[%s2013 + $0x2aa] sm:$0xff]
    %v3486 = vld [vmem:[%s2013 + $0x2ba] sm:$0xff]
    %v3487 = vld [vmem:[%s2013 + $0x2c2] sm:$0xff]
    %v3488 = vld [vmem:[%s2013 + $0x2d2] sm:$0xff]
    %v3489 = vld [vmem:[%s2013 + $0x2da] sm:$0xff]
    %v3490 = vld [vmem:[%s2013 + $0x2ea] sm:$0xff]
    %v3491 = vld [vmem:[%s2013 + $0x2f2] sm:$0xff]
    %v3492 = vld [vmem:[%s2013 + $0x302] sm:$0xff]
    %v3493 = vld [vmem:[%s2013 + $0x30a] sm:$0xff]
    %v3494 = vld [vmem:[%s2013 + $0x31a] sm:$0xff]
    %v3495 = vld [vmem:[%s2013 + $0x322] sm:$0xff]
    %v3496 = vld [vmem:[%s1 + $0x28] sm:$0x7]
    %v3498 = vsel %vm142, %v3432, 0
    %v3501 = vsel %vm142, %v3433, 0
    %v3504 = vsel %vm142, %v3434, 0
    %v3507 = vsel %vm142, %v3435, 0
    %v3510 = vsel %vm142, %v3436, 0
    %v3513 = vsel %vm142, %v3437, 0
    %v3516 = vsel %vm142, %v3438, 0
    %v3519 = vsel %vm142, %v3439, 0
    %v3522 = vsel %vm142, %v3440, 0
    %v3525 = vsel %vm142, %v3441, 0
    %v3528 = vsel %vm142, %v3442, 0
    %v3531 = vsel %vm142, %v3443, 0
    %v3534 = vsel %vm142, %v3444, 0
    %v3537 = vsel %vm142, %v3445, 0
    %v3540 = vsel %vm142, %v3446, 0
    %v3543 = vsel %vm142, %v3447, 0
    %v3546 = vsel %vm142, %v3448, 0
    %v3549 = vsel %vm142, %v3449, 0
    %v3552 = vsel %vm142, %v3450, 0
    %v3555 = vsel %vm142, %v3451, 0
    %v3558 = vsel %vm142, %v3452, 0
    %v3561 = vsel %vm142, %v3453, 0
    %v3564 = vsel %vm142, %v3454, 0
    %v3567 = vsel %vm142, %v3455, 0
    %v3570 = vsel %vm142, %v3456, 0
    %v3573 = vsel %vm142, %v3457, 0
    %v3576 = vsel %vm142, %v3458, 0
    %v3579 = vsel %vm142, %v3459, 0
    %v3582 = vsel %vm142, %v3460, 0
    %v3585 = vsel %vm142, %v3461, 0
    %v3588 = vsel %vm142, %v3462, 0
    %v3591 = vsel %vm142, %v3463, 0
    %v3594 = vsel %vm142, %v3464, 0
    %v3597 = vsel %vm142, %v3465, 0
    %v3600 = vsel %vm142, %v3466, 0
    %v3603 = vsel %vm142, %v3467, 0
    %v3606 = vsel %vm142, %v3468, 0
    %v3609 = vsel %vm142, %v3469, 0
    %v3612 = vsel %vm142, %v3470, 0
    %v3615 = vsel %vm142, %v3471, 0
    %v3618 = vsel %vm142, %v3472, 0
    %v3621 = vsel %vm142, %v3473, 0
    %v3624 = vsel %vm142, %v3474, 0
    %v3627 = vsel %vm142, %v3475, 0
    %v3630 = vsel %vm142, %v3476, 0
    %v3633 = vsel %vm142, %v3477, 0
    %v3636 = vsel %vm142, %v3478, 0
    %v3639 = vsel %vm142, %v3479, 0
    %v3642 = vsel %vm142, %v3480, 0
    %v3645 = vsel %vm142, %v3481, 0
    %v3648 = vsel %vm142, %v3482, 0
    %v3651 = vsel %vm142, %v3483, 0
    %v3654 = vsel %vm142, %v3484, 0
    %v3657 = vsel %vm142, %v3485, 0
    %v3660 = vsel %vm142, %v3486, 0
    %v3663 = vsel %vm142, %v3487, 0
    %v3666 = vsel %vm142, %v3488, 0
    %v3669 = vsel %vm142, %v3489, 0
    %v3672 = vsel %vm142, %v3490, 0
    %v3675 = vsel %vm142, %v3491, 0
    %v3678 = vsel %vm142, %v3492, 0
    %v3681 = vsel %vm142, %v3493, 0
    %v3684 = vsel %vm142, %v3494, 0
    %v3687 = vsel %vm142, %v3495, 0
    %v3690 = vsel %vm335, %v3496, 0
    %3692 = vmatprep.subr.mxu0 0.0
    %3693 = vmatpush1.msra.mxu0 0.0
    %3694 = vmatprep.subr.mxu0 0.0
    %3695 = vmatpush1.msra.mxu0 0.0
    %3696 = vmatprep.subr.mxu0 0.0
    %3697 = vmatpush1.msra.mxu0 0.0
    %3698 = vmatprep.subr.mxu0 0.0
    %3699 = vmatpush1.msra.mxu0 0.0
    %3700 = vmatprep.subr.mxu0 0.0
    %3701 = vmatpush1.msra.mxu0 0.0
    %3702 = vmatprep.subr.mxu0 0.0
    %3703 = vmatpush1.msra.mxu0 0.0
    %3704 = vmatprep.subr.mxu0 0.0
    %3705 = vmatpush1.msra.mxu0 0.0
    %3706 = vmatprep.subr.mxu0 0.0
    %3707 = vmatpush1.msra.mxu0 0.0
    %3708 = vmatprep.subr.mxu0 0.0
    %3709 = vmatpush1.msra.mxu0 0.0
    %3710 = vmatprep.subr.mxu0 0.0
    %3711 = vmatpush1.msra.mxu0 0.0
    %3712 = vmatprep.subr.mxu0 0.0
    %3713 = vmatpush1.msra.mxu0 0.0
    %3714 = vmatprep.subr.mxu0 0.0
    %3715 = vmatpush1.msra.mxu0 0.0
    %3716 = vmatprep.subr.mxu0 0.0
    %3717 = vmatpush1.msra.mxu0 0.0
    %3718 = vmatprep.subr.mxu0 0.0
    %3719 = vmatpush1.msra.mxu0 0.0
    %3720 = vmatprep.subr.mxu0 0.0
    %3721 = vmatpush1.msra.mxu0 0.0
    %3722 = vmatprep.subr.mxu0 0.0
    %3723 = vmatpush1.msra.mxu0 %v3690
    %3724 = vmatprep.subr.mxu0 0.0
    %3725 = vmatpush2.msra.mxu0 0.0
    %3726 = vmatprep.subr.mxu0 0.0
    %3727 = vmatpush2.msra.mxu0 0.0
    %3728 = vmatprep.subr.mxu0 0.0
    %3729 = vmatpush2.msra.mxu0 0.0
    %3730 = vmatprep.subr.mxu0 0.0
    %3731 = vmatpush2.msra.mxu0 0.0
    %3732 = vmatprep.subr.mxu0 0.0
    %3733 = vmatpush2.msra.mxu0 0.0
    %3734 = vmatprep.subr.mxu0 0.0
    %3735 = vmatpush2.msra.mxu0 0.0
    %3736 = vmatprep.subr.mxu0 0.0
    %3737 = vmatpush2.msra.mxu0 0.0
    %3738 = vmatprep.subr.mxu0 0.0
    %3739 = vmatpush2.msra.mxu0 0.0
    %3740 = vmatprep.subr.mxu0 0.0
    %3741 = vmatpush2.msra.mxu0 0.0
    %3742 = vmatprep.subr.mxu0 0.0
    %3743 = vmatpush2.msra.mxu0 0.0
    %3744 = vmatprep.subr.mxu0 0.0
    %3745 = vmatpush2.msra.mxu0 0.0
    %3746 = vmatprep.subr.mxu0 0.0
    %3747 = vmatpush2.msra.mxu0 0.0
    %3748 = vmatprep.subr.mxu0 0.0
    %3749 = vmatpush2.msra.mxu0 0.0
    %3750 = vmatprep.subr.mxu0 0.0
    %3751 = vmatpush2.msra.mxu0 0.0
    %3752 = vmatprep.subr.mxu0 0.0
    %3753 = vmatpush2.msra.mxu0 0.0
    %3754 = vmatprep.subr.mxu0 0.0
    %3755 = vmatpush2.msra.mxu0 0.0
    %3756 = vmatprep.mubr.f32.mxu0 0.0
    %3757 = vmatmul.mubr.f32.gmra.mxu0 %v3498
    %v3758 = vpop.f32.mrf.mxu0
    %v3759 = vadd.f32 0.0, %v3758
    %v3760 = vpop.f32.mrf.mxu0
    %3761 = vmatprep.mubr.f32.mxu0 0.0
    %3762 = vmatmul.mubr.f32.gmra.mxu0 %v3501
    %v3763 = vpop.f32.mrf.mxu0
    %v3764 = vadd.f32 0.0, %v3763
    %v3765 = vpop.f32.mrf.mxu0
    %3766 = vmatprep.mubr.f32.mxu0 0.0
    %3767 = vmatmul.mubr.f32.gmra.mxu0 %v3504
    %v3768 = vpop.f32.mrf.mxu0
    %v3769 = vadd.f32 0.0, %v3768
    %v3770 = vpop.f32.mrf.mxu0
    %3771 = vmatprep.mubr.f32.mxu0 0.0
    %3772 = vmatmul.mubr.f32.gmra.mxu0 %v3507
    %v3773 = vpop.f32.mrf.mxu0
    %v3774 = vadd.f32 0.0, %v3773
    %v3775 = vpop.f32.mrf.mxu0
    %3776 = vmatprep.mubr.f32.mxu0 0.0
    %3777 = vmatmul.mubr.f32.gmra.mxu0 %v3510
    %v3778 = vpop.f32.mrf.mxu0
    %v3779 = vadd.f32 0.0, %v3778
    %v3780 = vpop.f32.mrf.mxu0
    %3781 = vmatprep.mubr.f32.mxu0 0.0
    %3782 = vmatmul.mubr.f32.gmra.mxu0 %v3513
    %v3783 = vpop.f32.mrf.mxu0
    %v3784 = vadd.f32 0.0, %v3783
    %v3785 = vpop.f32.mrf.mxu0
    %3786 = vmatprep.mubr.f32.mxu0 0.0
    %3787 = vmatmul.mubr.f32.gmra.mxu0 %v3516
    %v3788 = vpop.f32.mrf.mxu0
    %v3789 = vadd.f32 0.0, %v3788
    %v3790 = vpop.f32.mrf.mxu0
    %3791 = vmatprep.mubr.f32.mxu0 0.0
    %3792 = vmatmul.mubr.f32.gmra.mxu0 %v3519
    %v3793 = vpop.f32.mrf.mxu0
    %v3794 = vadd.f32 0.0, %v3793
    %v3795 = vpop.f32.mrf.mxu0
    %3796 = vmatprep.mubr.f32.mxu0 0.0
    %3797 = vmatmul.mubr.f32.gmra.mxu0 %v3522
    %v3798 = vpop.f32.mrf.mxu0
    %v3799 = vadd.f32 0.0, %v3798
    %v3800 = vpop.f32.mrf.mxu0
    %3801 = vmatprep.mubr.f32.mxu0 0.0
    %3802 = vmatmul.mubr.f32.gmra.mxu0 %v3525
    %v3803 = vpop.f32.mrf.mxu0
    %v3804 = vadd.f32 0.0, %v3803
    %v3805 = vpop.f32.mrf.mxu0
    %3806 = vmatprep.mubr.f32.mxu0 0.0
    %3807 = vmatmul.mubr.f32.gmra.mxu0 %v3528
    %v3808 = vpop.f32.mrf.mxu0
    %v3809 = vadd.f32 0.0, %v3808
    %v3810 = vpop.f32.mrf.mxu0
    %3811 = vmatprep.mubr.f32.mxu0 0.0
    %3812 = vmatmul.mubr.f32.gmra.mxu0 %v3531
    %v3813 = vpop.f32.mrf.mxu0
    %v3814 = vadd.f32 0.0, %v3813
    %v3815 = vpop.f32.mrf.mxu0
    %3816 = vmatprep.mubr.f32.mxu0 0.0
    %3817 = vmatmul.mubr.f32.gmra.mxu0 %v3534
    %v3818 = vpop.f32.mrf.mxu0
    %v3819 = vadd.f32 0.0, %v3818
    %v3820 = vpop.f32.mrf.mxu0
    %3821 = vmatprep.mubr.f32.mxu0 0.0
    %3822 = vmatmul.mubr.f32.gmra.mxu0 %v3537
    %v3823 = vpop.f32.mrf.mxu0
    %v3824 = vadd.f32 0.0, %v3823
    %v3825 = vpop.f32.mrf.mxu0
    %3826 = vmatprep.mubr.f32.mxu0 0.0
    %3827 = vmatmul.mubr.f32.gmra.mxu0 %v3540
    %v3828 = vpop.f32.mrf.mxu0
    %v3829 = vadd.f32 0.0, %v3828
    %v3830 = vpop.f32.mrf.mxu0
    %3831 = vmatprep.mubr.f32.mxu0 0.0
    %3832 = vmatmul.mubr.f32.gmra.mxu0 %v3543
    %v3833 = vpop.f32.mrf.mxu0
    %v3834 = vadd.f32 0.0, %v3833
    %v3835 = vpop.f32.mrf.mxu0
    %3836 = vmatprep.mubr.f32.mxu0 0.0
    %3837 = vmatmul.mubr.f32.gmra.mxu0 %v3546
    %v3838 = vpop.f32.mrf.mxu0
    %v3839 = vadd.f32 0.0, %v3838
    %v3840 = vpop.f32.mrf.mxu0
    %3841 = vmatprep.mubr.f32.mxu0 0.0
    %3842 = vmatmul.mubr.f32.gmra.mxu0 %v3549
    %v3843 = vpop.f32.mrf.mxu0
    %v3844 = vadd.f32 0.0, %v3843
    %v3845 = vpop.f32.mrf.mxu0
    %3846 = vmatprep.mubr.f32.mxu0 0.0
    %3847 = vmatmul.mubr.f32.gmra.mxu0 %v3552
    %v3848 = vpop.f32.mrf.mxu0
    %v3849 = vadd.f32 0.0, %v3848
    %v3850 = vpop.f32.mrf.mxu0
    %3851 = vmatprep.mubr.f32.mxu0 0.0
    %3852 = vmatmul.mubr.f32.gmra.mxu0 %v3555
    %v3853 = vpop.f32.mrf.mxu0
    %v3854 = vadd.f32 0.0, %v3853
    %v3855 = vpop.f32.mrf.mxu0
    %3856 = vmatprep.mubr.f32.mxu0 0.0
    %3857 = vmatmul.mubr.f32.gmra.mxu0 %v3558
    %v3858 = vpop.f32.mrf.mxu0
    %v3859 = vadd.f32 0.0, %v3858
    %v3860 = vpop.f32.mrf.mxu0
    %3861 = vmatprep.mubr.f32.mxu0 0.0
    %3862 = vmatmul.mubr.f32.gmra.mxu0 %v3561
    %v3863 = vpop.f32.mrf.mxu0
    %v3864 = vadd.f32 0.0, %v3863
    %v3865 = vpop.f32.mrf.mxu0
    %3866 = vmatprep.mubr.f32.mxu0 0.0
    %3867 = vmatmul.mubr.f32.gmra.mxu0 %v3564
    %v3868 = vpop.f32.mrf.mxu0
    %v3869 = vadd.f32 0.0, %v3868
    %v3870 = vpop.f32.mrf.mxu0
    %3871 = vmatprep.mubr.f32.mxu0 0.0
    %3872 = vmatmul.mubr.f32.gmra.mxu0 %v3567
    %v3873 = vpop.f32.mrf.mxu0
    %v3874 = vadd.f32 0.0, %v3873
    %v3875 = vpop.f32.mrf.mxu0
    %3876 = vmatprep.mubr.f32.mxu0 0.0
    %3877 = vmatmul.mubr.f32.gmra.mxu0 %v3570
    %v3878 = vpop.f32.mrf.mxu0
    %v3879 = vadd.f32 0.0, %v3878
    %v3880 = vpop.f32.mrf.mxu0
    %3881 = vmatprep.mubr.f32.mxu0 0.0
    %3882 = vmatmul.mubr.f32.gmra.mxu0 %v3573
    %v3883 = vpop.f32.mrf.mxu0
    %v3884 = vadd.f32 0.0, %v3883
    %v3885 = vpop.f32.mrf.mxu0
    %3886 = vmatprep.mubr.f32.mxu0 0.0
    %3887 = vmatmul.mubr.f32.gmra.mxu0 %v3576
    %v3888 = vpop.f32.mrf.mxu0
    %v3889 = vadd.f32 0.0, %v3888
    %v3890 = vpop.f32.mrf.mxu0
    %3891 = vmatprep.mubr.f32.mxu0 0.0
    %3892 = vmatmul.mubr.f32.gmra.mxu0 %v3579
    %v3893 = vpop.f32.mrf.mxu0
    %v3894 = vadd.f32 0.0, %v3893
    %v3895 = vpop.f32.mrf.mxu0
    %3896 = vmatprep.mubr.f32.mxu0 0.0
    %3897 = vmatmul.mubr.f32.gmra.mxu0 %v3582
    %v3898 = vpop.f32.mrf.mxu0
    %v3899 = vadd.f32 0.0, %v3898
    %v3900 = vpop.f32.mrf.mxu0
    %3901 = vmatprep.mubr.f32.mxu0 0.0
    %3902 = vmatmul.mubr.f32.gmra.mxu0 %v3585
    %v3903 = vpop.f32.mrf.mxu0
    %v3904 = vadd.f32 0.0, %v3903
    %v3905 = vpop.f32.mrf.mxu0
    %3906 = vmatprep.mubr.f32.mxu0 0.0
    %3907 = vmatmul.mubr.f32.gmra.mxu0 %v3588
    %v3908 = vpop.f32.mrf.mxu0
    %v3909 = vadd.f32 0.0, %v3908
    %v3910 = vpop.f32.mrf.mxu0
    %3911 = vmatprep.mubr.f32.mxu0 0.0
    %3912 = vmatmul.mubr.f32.gmra.mxu0 %v3591
    %v3913 = vpop.f32.mrf.mxu0
    %v3914 = vadd.f32 0.0, %v3913
    %v3915 = vpop.f32.mrf.mxu0
    %3916 = vmatprep.mubr.f32.mxu0 0.0
    %3917 = vmatmul.mubr.f32.gmra.mxu0 %v3594
    %v3918 = vpop.f32.mrf.mxu0
    %v3919 = vadd.f32 0.0, %v3918
    %v3920 = vpop.f32.mrf.mxu0
    %3921 = vmatprep.mubr.f32.mxu0 0.0
    %3922 = vmatmul.mubr.f32.gmra.mxu0 %v3597
    %v3923 = vpop.f32.mrf.mxu0
    %v3924 = vadd.f32 0.0, %v3923
    %v3925 = vpop.f32.mrf.mxu0
    %3926 = vmatprep.mubr.f32.mxu0 0.0
    %3927 = vmatmul.mubr.f32.gmra.mxu0 %v3600
    %v3928 = vpop.f32.mrf.mxu0
    %v3929 = vadd.f32 0.0, %v3928
    %v3930 = vpop.f32.mrf.mxu0
    %3931 = vmatprep.mubr.f32.mxu0 0.0
    %3932 = vmatmul.mubr.f32.gmra.mxu0 %v3603
    %v3933 = vpop.f32.mrf.mxu0
    %v3934 = vadd.f32 0.0, %v3933
    %v3935 = vpop.f32.mrf.mxu0
    %3936 = vmatprep.mubr.f32.mxu0 0.0
    %3937 = vmatmul.mubr.f32.gmra.mxu0 %v3606
    %v3938 = vpop.f32.mrf.mxu0
    %v3939 = vadd.f32 0.0, %v3938
    %v3940 = vpop.f32.mrf.mxu0
    %3941 = vmatprep.mubr.f32.mxu0 0.0
    %3942 = vmatmul.mubr.f32.gmra.mxu0 %v3609
    %v3943 = vpop.f32.mrf.mxu0
    %v3944 = vadd.f32 0.0, %v3943
    %v3945 = vpop.f32.mrf.mxu0
    %3946 = vmatprep.mubr.f32.mxu0 0.0
    %3947 = vmatmul.mubr.f32.gmra.mxu0 %v3612
    %v3948 = vpop.f32.mrf.mxu0
    %v3949 = vadd.f32 0.0, %v3948
    %v3950 = vpop.f32.mrf.mxu0
    %3951 = vmatprep.mubr.f32.mxu0 0.0
    %3952 = vmatmul.mubr.f32.gmra.mxu0 %v3615
    %v3953 = vpop.f32.mrf.mxu0
    %v3954 = vadd.f32 0.0, %v3953
    %v3955 = vpop.f32.mrf.mxu0
    %3956 = vmatprep.mubr.f32.mxu0 0.0
    %3957 = vmatmul.mubr.f32.gmra.mxu0 %v3618
    %v3958 = vpop.f32.mrf.mxu0
    %v3959 = vadd.f32 0.0, %v3958
    %v3960 = vpop.f32.mrf.mxu0
    %3961 = vmatprep.mubr.f32.mxu0 0.0
    %3962 = vmatmul.mubr.f32.gmra.mxu0 %v3621
    %v3963 = vpop.f32.mrf.mxu0
    %v3964 = vadd.f32 0.0, %v3963
    %v3965 = vpop.f32.mrf.mxu0
    %3966 = vmatprep.mubr.f32.mxu0 0.0
    %3967 = vmatmul.mubr.f32.gmra.mxu0 %v3624
    %v3968 = vpop.f32.mrf.mxu0
    %v3969 = vadd.f32 0.0, %v3968
    %v3970 = vpop.f32.mrf.mxu0
    %3971 = vmatprep.mubr.f32.mxu0 0.0
    %3972 = vmatmul.mubr.f32.gmra.mxu0 %v3627
    %v3973 = vpop.f32.mrf.mxu0
    %v3974 = vadd.f32 0.0, %v3973
    %v3975 = vpop.f32.mrf.mxu0
    %3976 = vmatprep.mubr.f32.mxu0 0.0
    %3977 = vmatmul.mubr.f32.gmra.mxu0 %v3630
    %v3978 = vpop.f32.mrf.mxu0
    %v3979 = vadd.f32 0.0, %v3978
    %v3980 = vpop.f32.mrf.mxu0
    %3981 = vmatprep.mubr.f32.mxu0 0.0
    %3982 = vmatmul.mubr.f32.gmra.mxu0 %v3633
    %v3983 = vpop.f32.mrf.mxu0
    %v3984 = vadd.f32 0.0, %v3983
    %v3985 = vpop.f32.mrf.mxu0
    %3986 = vmatprep.mubr.f32.mxu0 0.0
    %3987 = vmatmul.mubr.f32.gmra.mxu0 %v3636
    %v3988 = vpop.f32.mrf.mxu0
    %v3989 = vadd.f32 0.0, %v3988
    %v3990 = vpop.f32.mrf.mxu0
    %3991 = vmatprep.mubr.f32.mxu0 0.0
    %3992 = vmatmul.mubr.f32.gmra.mxu0 %v3639
    %v3993 = vpop.f32.mrf.mxu0
    %v3994 = vadd.f32 0.0, %v3993
    %v3995 = vpop.f32.mrf.mxu0
    %3996 = vmatprep.mubr.f32.mxu0 0.0
    %3997 = vmatmul.mubr.f32.gmra.mxu0 %v3642
    %v3998 = vpop.f32.mrf.mxu0
    %v3999 = vadd.f32 0.0, %v3998
    %v4000 = vpop.f32.mrf.mxu0
    %4001 = vmatprep.mubr.f32.mxu0 0.0
    %4002 = vmatmul.mubr.f32.gmra.mxu0 %v3645
    %v4003 = vpop.f32.mrf.mxu0
    %v4004 = vadd.f32 0.0, %v4003
    %v4005 = vpop.f32.mrf.mxu0
    %4006 = vmatprep.mubr.f32.mxu0 0.0
    %4007 = vmatmul.mubr.f32.gmra.mxu0 %v3648
    %v4008 = vpop.f32.mrf.mxu0
    %v4009 = vadd.f32 0.0, %v4008
    %v4010 = vpop.f32.mrf.mxu0
    %4011 = vmatprep.mubr.f32.mxu0 0.0
    %4012 = vmatmul.mubr.f32.gmra.mxu0 %v3651
    %v4013 = vpop.f32.mrf.mxu0
    %v4014 = vadd.f32 0.0, %v4013
    %v4015 = vpop.f32.mrf.mxu0
    %4016 = vmatprep.mubr.f32.mxu0 0.0
    %4017 = vmatmul.mubr.f32.gmra.mxu0 %v3654
    %v4018 = vpop.f32.mrf.mxu0
    %v4019 = vadd.f32 0.0, %v4018
    %v4020 = vpop.f32.mrf.mxu0
    %4021 = vmatprep.mubr.f32.mxu0 0.0
    %4022 = vmatmul.mubr.f32.gmra.mxu0 %v3657
    %v4023 = vpop.f32.mrf.mxu0
    %v4024 = vadd.f32 0.0, %v4023
    %v4025 = vpop.f32.mrf.mxu0
    %4026 = vmatprep.mubr.f32.mxu0 0.0
    %4027 = vmatmul.mubr.f32.gmra.mxu0 %v3660
    %v4028 = vpop.f32.mrf.mxu0
    %v4029 = vadd.f32 0.0, %v4028
    %v4030 = vpop.f32.mrf.mxu0
    %4031 = vmatprep.mubr.f32.mxu0 0.0
    %4032 = vmatmul.mubr.f32.gmra.mxu0 %v3663
    %v4033 = vpop.f32.mrf.mxu0
    %v4034 = vadd.f32 0.0, %v4033
    %v4035 = vpop.f32.mrf.mxu0
    %4036 = vmatprep.mubr.f32.mxu0 0.0
    %4037 = vmatmul.mubr.f32.gmra.mxu0 %v3666
    %v4038 = vpop.f32.mrf.mxu0
    %v4039 = vadd.f32 0.0, %v4038
    %v4040 = vpop.f32.mrf.mxu0
    %4041 = vmatprep.mubr.f32.mxu0 0.0
    %4042 = vmatmul.mubr.f32.gmra.mxu0 %v3669
    %v4043 = vpop.f32.mrf.mxu0
    %v4044 = vadd.f32 0.0, %v4043
    %v4045 = vpop.f32.mrf.mxu0
    %4046 = vmatprep.mubr.f32.mxu0 0.0
    %4047 = vmatmul.mubr.f32.gmra.mxu0 %v3672
    %v4048 = vpop.f32.mrf.mxu0
    %v4049 = vadd.f32 0.0, %v4048
    %v4050 = vpop.f32.mrf.mxu0
    %4051 = vmatprep.mubr.f32.mxu0 0.0
    %4052 = vmatmul.mubr.f32.gmra.mxu0 %v3675
    %v4053 = vpop.f32.mrf.mxu0
    %v4054 = vadd.f32 0.0, %v4053
    %v4055 = vpop.f32.mrf.mxu0
    %4056 = vmatprep.mubr.f32.mxu0 0.0
    %4057 = vmatmul.mubr.f32.gmra.mxu0 %v3678
    %v4058 = vpop.f32.mrf.mxu0
    %v4059 = vadd.f32 0.0, %v4058
    %v4060 = vpop.f32.mrf.mxu0
    %4061 = vmatprep.mubr.f32.mxu0 0.0
    %4062 = vmatmul.mubr.f32.gmra.mxu0 %v3681
    %v4063 = vpop.f32.mrf.mxu0
    %v4064 = vadd.f32 0.0, %v4063
    %v4065 = vpop.f32.mrf.mxu0
    %4066 = vmatprep.mubr.f32.mxu0 0.0
    %4067 = vmatmul.mubr.f32.gmra.mxu0 %v3684
    %v4068 = vpop.f32.mrf.mxu0
    %v4069 = vadd.f32 0.0, %v4068
    %v4070 = vpop.f32.mrf.mxu0
    %4071 = vmatprep.mubr.f32.mxu0 0.0
    %4072 = vmatmul.mubr.f32.gmra.mxu0 %v3687
    %v4073 = vpop.f32.mrf.mxu0
    %v4074 = vadd.f32 0.0, %v4073
    %v4075 = vpop.f32.mrf.mxu0
    %4076 = vdwg.mxu0
    %v4077 = vadd.f32 %v3368, %v3759
    %v4078 = vadd.f32 %v3369, %v3764
    %v4079 = vadd.f32 %v3370, %v3769
    %v4080 = vadd.f32 %v3371, %v3774
    %v4081 = vadd.f32 %v3372, %v3779
    %v4082 = vadd.f32 %v3373, %v3784
    %v4083 = vadd.f32 %v3374, %v3789
    %v4084 = vadd.f32 %v3375, %v3794
    %v4085 = vadd.f32 %v3376, %v3799
    %v4086 = vadd.f32 %v3377, %v3804
    %v4087 = vadd.f32 %v3378, %v3809
    %v4088 = vadd.f32 %v3379, %v3814
    %v4089 = vadd.f32 %v3380, %v3819
    %v4090 = vadd.f32 %v3381, %v3824
    %v4091 = vadd.f32 %v3382, %v3829
    %v4092 = vadd.f32 %v3383, %v3834
    %v4093 = vadd.f32 %v3384, %v3839
    %v4094 = vadd.f32 %v3385, %v3844
    %v4095 = vadd.f32 %v3386, %v3849
    %v4096 = vadd.f32 %v3387, %v3854
    %v4097 = vadd.f32 %v3388, %v3859
    %v4098 = vadd.f32 %v3389, %v3864
    %v4099 = vadd.f32 %v3390, %v3869
    %v4100 = vadd.f32 %v3391, %v3874
    %v4101 = vadd.f32 %v3392, %v3879
    %v4102 = vadd.f32 %v3393, %v3884
    %v4103 = vadd.f32 %v3394, %v3889
    %v4104 = vadd.f32 %v3395, %v3894
    %v4105 = vadd.f32 %v3396, %v3899
    %v4106 = vadd.f32 %v3397, %v3904
    %v4107 = vadd.f32 %v3398, %v3909
    %v4108 = vadd.f32 %v3399, %v3914
    %v4109 = vadd.f32 %v3400, %v3919
    %v4110 = vadd.f32 %v3401, %v3924
    %v4111 = vadd.f32 %v3402, %v3929
    %v4112 = vadd.f32 %v3403, %v3934
    %v4113 = vadd.f32 %v3404, %v3939
    %v4114 = vadd.f32 %v3405, %v3944
    %v4115 = vadd.f32 %v3406, %v3949
    %v4116 = vadd.f32 %v3407, %v3954
    %v4117 = vadd.f32 %v3408, %v3959
    %v4118 = vadd.f32 %v3409, %v3964
    %v4119 = vadd.f32 %v3410, %v3969
    %v4120 = vadd.f32 %v3411, %v3974
    %v4121 = vadd.f32 %v3412, %v3979
    %v4122 = vadd.f32 %v3413, %v3984
    %v4123 = vadd.f32 %v3414, %v3989
    %v4124 = vadd.f32 %v3415, %v3994
    %v4125 = vadd.f32 %v3416, %v3999
    %v4126 = vadd.f32 %v3417, %v4004
    %v4127 = vadd.f32 %v3418, %v4009
    %v4128 = vadd.f32 %v3419, %v4014
    %v4129 = vadd.f32 %v3420, %v4019
    %v4130 = vadd.f32 %v3421, %v4024
    %v4131 = vadd.f32 %v3422, %v4029
    %v4132 = vadd.f32 %v3423, %v4034
    %v4133 = vadd.f32 %v3424, %v4039
    %v4134 = vadd.f32 %v3425, %v4044
    %v4135 = vadd.f32 %v3426, %v4049
    %v4136 = vadd.f32 %v3427, %v4054
    %v4137 = vadd.f32 %v3428, %v4059
    %v4138 = vadd.f32 %v3429, %v4064
    %v4139 = vadd.f32 %v3430, %v4069
    %v4140 = vadd.f32 %v3431, %v4074
    %s4141 = scalar_lea.vmem %s0, 48
    %v4142 = vld [vmem:[%s4141] sm:$0xff]
    %v4143 = vld [vmem:[%s4141 + $0x8] sm:$0xff]
    %v4144 = vld [vmem:[%s4141 + $0x18] sm:$0xff]
    %v4145 = vld [vmem:[%s4141 + $0x20] sm:$0xff]
    %v4146 = vld [vmem:[%s4141 + $0x30] sm:$0xff]
    %v4147 = vld [vmem:[%s4141 + $0x38] sm:$0xff]
    %v4148 = vld [vmem:[%s4141 + $0x48] sm:$0xff]
    %v4149 = vld [vmem:[%s4141 + $0x50] sm:$0xff]
    %v4150 = vld [vmem:[%s4141 + $0x60] sm:$0xff]
    %v4151 = vld [vmem:[%s4141 + $0x68] sm:$0xff]
    %v4152 = vld [vmem:[%s4141 + $0x78] sm:$0xff]
    %v4153 = vld [vmem:[%s4141 + $0x80] sm:$0xff]
    %v4154 = vld [vmem:[%s4141 + $0x90] sm:$0xff]
    %v4155 = vld [vmem:[%s4141 + $0x98] sm:$0xff]
    %v4156 = vld [vmem:[%s4141 + $0xa8] sm:$0xff]
    %v4157 = vld [vmem:[%s4141 + $0xb0] sm:$0xff]
    %v4158 = vld [vmem:[%s4141 + $0xc0] sm:$0xff]
    %v4159 = vld [vmem:[%s4141 + $0xc8] sm:$0xff]
    %v4160 = vld [vmem:[%s4141 + $0xd8] sm:$0xff]
    %v4161 = vld [vmem:[%s4141 + $0xe0] sm:$0xff]
    %v4162 = vld [vmem:[%s4141 + $0xf0] sm:$0xff]
    %v4163 = vld [vmem:[%s4141 + $0xf8] sm:$0xff]
    %v4164 = vld [vmem:[%s4141 + $0x108] sm:$0xff]
    %v4165 = vld [vmem:[%s4141 + $0x110] sm:$0xff]
    %v4166 = vld [vmem:[%s4141 + $0x120] sm:$0xff]
    %v4167 = vld [vmem:[%s4141 + $0x128] sm:$0xff]
    %v4168 = vld [vmem:[%s4141 + $0x138] sm:$0xff]
    %v4169 = vld [vmem:[%s4141 + $0x140] sm:$0xff]
    %v4170 = vld [vmem:[%s4141 + $0x150] sm:$0xff]
    %v4171 = vld [vmem:[%s4141 + $0x158] sm:$0xff]
    %v4172 = vld [vmem:[%s4141 + $0x168] sm:$0xff]
    %v4173 = vld [vmem:[%s4141 + $0x170] sm:$0xff]
    %v4174 = vld [vmem:[%s4141 + $0x1b0] sm:$0xff]
    %v4175 = vld [vmem:[%s4141 + $0x1b8] sm:$0xff]
    %v4176 = vld [vmem:[%s4141 + $0x1c8] sm:$0xff]
    %v4177 = vld [vmem:[%s4141 + $0x1d0] sm:$0xff]
    %v4178 = vld [vmem:[%s4141 + $0x1e0] sm:$0xff]
    %v4179 = vld [vmem:[%s4141 + $0x1e8] sm:$0xff]
    %v4180 = vld [vmem:[%s4141 + $0x1f8] sm:$0xff]
    %v4181 = vld [vmem:[%s4141 + $0x200] sm:$0xff]
    %v4182 = vld [vmem:[%s4141 + $0x210] sm:$0xff]
    %v4183 = vld [vmem:[%s4141 + $0x218] sm:$0xff]
    %v4184 = vld [vmem:[%s4141 + $0x228] sm:$0xff]
    %v4185 = vld [vmem:[%s4141 + $0x230] sm:$0xff]
    %v4186 = vld [vmem:[%s4141 + $0x240] sm:$0xff]
    %v4187 = vld [vmem:[%s4141 + $0x248] sm:$0xff]
    %v4188 = vld [vmem:[%s4141 + $0x258] sm:$0xff]
    %v4189 = vld [vmem:[%s4141 + $0x260] sm:$0xff]
    %v4190 = vld [vmem:[%s4141 + $0x270] sm:$0xff]
    %v4191 = vld [vmem:[%s4141 + $0x278] sm:$0xff]
    %v4192 = vld [vmem:[%s4141 + $0x288] sm:$0xff]
    %v4193 = vld [vmem:[%s4141 + $0x290] sm:$0xff]
    %v4194 = vld [vmem:[%s4141 + $0x2a0] sm:$0xff]
    %v4195 = vld [vmem:[%s4141 + $0x2a8] sm:$0xff]
    %v4196 = vld [vmem:[%s4141 + $0x2b8] sm:$0xff]
    %v4197 = vld [vmem:[%s4141 + $0x2c0] sm:$0xff]
    %v4198 = vld [vmem:[%s4141 + $0x2d0] sm:$0xff]
    %v4199 = vld [vmem:[%s4141 + $0x2d8] sm:$0xff]
    %v4200 = vld [vmem:[%s4141 + $0x2e8] sm:$0xff]
    %v4201 = vld [vmem:[%s4141 + $0x2f0] sm:$0xff]
    %v4202 = vld [vmem:[%s4141 + $0x300] sm:$0xff]
    %v4203 = vld [vmem:[%s4141 + $0x308] sm:$0xff]
    %v4204 = vld [vmem:[%s4141 + $0x318] sm:$0xff]
    %v4205 = vld [vmem:[%s4141 + $0x320] sm:$0xff]
    %v4206 = vld [vmem:[%s1 + $0x30] sm:$0x7]
    %v4208 = vsel %vm142, %v4142, 0
    %v4211 = vsel %vm142, %v4143, 0
    %v4214 = vsel %vm142, %v4144, 0
    %v4217 = vsel %vm142, %v4145, 0
    %v4220 = vsel %vm142, %v4146, 0
    %v4223 = vsel %vm142, %v4147, 0
    %v4226 = vsel %vm142, %v4148, 0
    %v4229 = vsel %vm142, %v4149, 0
    %v4232 = vsel %vm142, %v4150, 0
    %v4235 = vsel %vm142, %v4151, 0
    %v4238 = vsel %vm142, %v4152, 0
    %v4241 = vsel %vm142, %v4153, 0
    %v4244 = vsel %vm142, %v4154, 0
    %v4247 = vsel %vm142, %v4155, 0
    %v4250 = vsel %vm142, %v4156, 0
    %v4253 = vsel %vm142, %v4157, 0
    %v4256 = vsel %vm142, %v4158, 0
    %v4259 = vsel %vm142, %v4159, 0
    %v4262 = vsel %vm142, %v4160, 0
    %v4265 = vsel %vm142, %v4161, 0
    %v4268 = vsel %vm142, %v4162, 0
    %v4271 = vsel %vm142, %v4163, 0
    %v4274 = vsel %vm142, %v4164, 0
    %v4277 = vsel %vm142, %v4165, 0
    %v4280 = vsel %vm142, %v4166, 0
    %v4283 = vsel %vm142, %v4167, 0
    %v4286 = vsel %vm142, %v4168, 0
    %v4289 = vsel %vm142, %v4169, 0
    %v4292 = vsel %vm142, %v4170, 0
    %v4295 = vsel %vm142, %v4171, 0
    %v4298 = vsel %vm142, %v4172, 0
    %v4301 = vsel %vm142, %v4173, 0
    %v4304 = vsel %vm142, %v4174, 0
    %v4307 = vsel %vm142, %v4175, 0
    %v4310 = vsel %vm142, %v4176, 0
    %v4313 = vsel %vm142, %v4177, 0
    %v4316 = vsel %vm142, %v4178, 0
    %v4319 = vsel %vm142, %v4179, 0
    %v4322 = vsel %vm142, %v4180, 0
    %v4325 = vsel %vm142, %v4181, 0
    %v4328 = vsel %vm142, %v4182, 0
    %v4331 = vsel %vm142, %v4183, 0
    %v4334 = vsel %vm142, %v4184, 0
    %v4337 = vsel %vm142, %v4185, 0
    %v4340 = vsel %vm142, %v4186, 0
    %v4343 = vsel %vm142, %v4187, 0
    %v4346 = vsel %vm142, %v4188, 0
    %v4349 = vsel %vm142, %v4189, 0
    %v4352 = vsel %vm142, %v4190, 0
    %v4355 = vsel %vm142, %v4191, 0
    %v4358 = vsel %vm142, %v4192, 0
    %v4361 = vsel %vm142, %v4193, 0
    %v4364 = vsel %vm142, %v4194, 0
    %v4367 = vsel %vm142, %v4195, 0
    %v4370 = vsel %vm142, %v4196, 0
    %v4373 = vsel %vm142, %v4197, 0
    %v4376 = vsel %vm142, %v4198, 0
    %v4379 = vsel %vm142, %v4199, 0
    %v4382 = vsel %vm142, %v4200, 0
    %v4385 = vsel %vm142, %v4201, 0
    %v4388 = vsel %vm142, %v4202, 0
    %v4391 = vsel %vm142, %v4203, 0
    %v4394 = vsel %vm142, %v4204, 0
    %v4397 = vsel %vm142, %v4205, 0
    %v4400 = vsel %vm335, %v4206, 0
    %4402 = vmatprep.subr.mxu0 0.0
    %4403 = vmatpush1.msra.mxu0 0.0
    %4404 = vmatprep.subr.mxu0 0.0
    %4405 = vmatpush1.msra.mxu0 0.0
    %4406 = vmatprep.subr.mxu0 0.0
    %4407 = vmatpush1.msra.mxu0 0.0
    %4408 = vmatprep.subr.mxu0 0.0
    %4409 = vmatpush1.msra.mxu0 0.0
    %4410 = vmatprep.subr.mxu0 0.0
    %4411 = vmatpush1.msra.mxu0 0.0
    %4412 = vmatprep.subr.mxu0 0.0
    %4413 = vmatpush1.msra.mxu0 0.0
    %4414 = vmatprep.subr.mxu0 0.0
    %4415 = vmatpush1.msra.mxu0 0.0
    %4416 = vmatprep.subr.mxu0 0.0
    %4417 = vmatpush1.msra.mxu0 0.0
    %4418 = vmatprep.subr.mxu0 0.0
    %4419 = vmatpush1.msra.mxu0 0.0
    %4420 = vmatprep.subr.mxu0 0.0
    %4421 = vmatpush1.msra.mxu0 0.0
    %4422 = vmatprep.subr.mxu0 0.0
    %4423 = vmatpush1.msra.mxu0 0.0
    %4424 = vmatprep.subr.mxu0 0.0
    %4425 = vmatpush1.msra.mxu0 0.0
    %4426 = vmatprep.subr.mxu0 0.0
    %4427 = vmatpush1.msra.mxu0 0.0
    %4428 = vmatprep.subr.mxu0 0.0
    %4429 = vmatpush1.msra.mxu0 0.0
    %4430 = vmatprep.subr.mxu0 0.0
    %4431 = vmatpush1.msra.mxu0 0.0
    %4432 = vmatprep.subr.mxu0 0.0
    %4433 = vmatpush1.msra.mxu0 %v4400
    %4434 = vmatprep.subr.mxu0 0.0
    %4435 = vmatpush2.msra.mxu0 0.0
    %4436 = vmatprep.subr.mxu0 0.0
    %4437 = vmatpush2.msra.mxu0 0.0
    %4438 = vmatprep.subr.mxu0 0.0
    %4439 = vmatpush2.msra.mxu0 0.0
    %4440 = vmatprep.subr.mxu0 0.0
    %4441 = vmatpush2.msra.mxu0 0.0
    %4442 = vmatprep.subr.mxu0 0.0
    %4443 = vmatpush2.msra.mxu0 0.0
    %4444 = vmatprep.subr.mxu0 0.0
    %4445 = vmatpush2.msra.mxu0 0.0
    %4446 = vmatprep.subr.mxu0 0.0
    %4447 = vmatpush2.msra.mxu0 0.0
    %4448 = vmatprep.subr.mxu0 0.0
    %4449 = vmatpush2.msra.mxu0 0.0
    %4450 = vmatprep.subr.mxu0 0.0
    %4451 = vmatpush2.msra.mxu0 0.0
    %4452 = vmatprep.subr.mxu0 0.0
    %4453 = vmatpush2.msra.mxu0 0.0
    %4454 = vmatprep.subr.mxu0 0.0
    %4455 = vmatpush2.msra.mxu0 0.0
    %4456 = vmatprep.subr.mxu0 0.0
    %4457 = vmatpush2.msra.mxu0 0.0
    %4458 = vmatprep.subr.mxu0 0.0
    %4459 = vmatpush2.msra.mxu0 0.0
    %4460 = vmatprep.subr.mxu0 0.0
    %4461 = vmatpush2.msra.mxu0 0.0
    %4462 = vmatprep.subr.mxu0 0.0
    %4463 = vmatpush2.msra.mxu0 0.0
    %4464 = vmatprep.subr.mxu0 0.0
    %4465 = vmatpush2.msra.mxu0 0.0
    %4466 = vmatprep.mubr.f32.mxu0 0.0
    %4467 = vmatmul.mubr.f32.gmra.mxu0 %v4208
    %v4468 = vpop.f32.mrf.mxu0
    %v4469 = vadd.f32 0.0, %v4468
    %v4470 = vpop.f32.mrf.mxu0
    %4471 = vmatprep.mubr.f32.mxu0 0.0
    %4472 = vmatmul.mubr.f32.gmra.mxu0 %v4211
    %v4473 = vpop.f32.mrf.mxu0
    %v4474 = vadd.f32 0.0, %v4473
    %v4475 = vpop.f32.mrf.mxu0
    %4476 = vmatprep.mubr.f32.mxu0 0.0
    %4477 = vmatmul.mubr.f32.gmra.mxu0 %v4214
    %v4478 = vpop.f32.mrf.mxu0
    %v4479 = vadd.f32 0.0, %v4478
    %v4480 = vpop.f32.mrf.mxu0
    %4481 = vmatprep.mubr.f32.mxu0 0.0
    %4482 = vmatmul.mubr.f32.gmra.mxu0 %v4217
    %v4483 = vpop.f32.mrf.mxu0
    %v4484 = vadd.f32 0.0, %v4483
    %v4485 = vpop.f32.mrf.mxu0
    %4486 = vmatprep.mubr.f32.mxu0 0.0
    %4487 = vmatmul.mubr.f32.gmra.mxu0 %v4220
    %v4488 = vpop.f32.mrf.mxu0
    %v4489 = vadd.f32 0.0, %v4488
    %v4490 = vpop.f32.mrf.mxu0
    %4491 = vmatprep.mubr.f32.mxu0 0.0
    %4492 = vmatmul.mubr.f32.gmra.mxu0 %v4223
    %v4493 = vpop.f32.mrf.mxu0
    %v4494 = vadd.f32 0.0, %v4493
    %v4495 = vpop.f32.mrf.mxu0
    %4496 = vmatprep.mubr.f32.mxu0 0.0
    %4497 = vmatmul.mubr.f32.gmra.mxu0 %v4226
    %v4498 = vpop.f32.mrf.mxu0
    %v4499 = vadd.f32 0.0, %v4498
    %v4500 = vpop.f32.mrf.mxu0
    %4501 = vmatprep.mubr.f32.mxu0 0.0
    %4502 = vmatmul.mubr.f32.gmra.mxu0 %v4229
    %v4503 = vpop.f32.mrf.mxu0
    %v4504 = vadd.f32 0.0, %v4503
    %v4505 = vpop.f32.mrf.mxu0
    %4506 = vmatprep.mubr.f32.mxu0 0.0
    %4507 = vmatmul.mubr.f32.gmra.mxu0 %v4232
    %v4508 = vpop.f32.mrf.mxu0
    %v4509 = vadd.f32 0.0, %v4508
    %v4510 = vpop.f32.mrf.mxu0
    %4511 = vmatprep.mubr.f32.mxu0 0.0
    %4512 = vmatmul.mubr.f32.gmra.mxu0 %v4235
    %v4513 = vpop.f32.mrf.mxu0
    %v4514 = vadd.f32 0.0, %v4513
    %v4515 = vpop.f32.mrf.mxu0
    %4516 = vmatprep.mubr.f32.mxu0 0.0
    %4517 = vmatmul.mubr.f32.gmra.mxu0 %v4238
    %v4518 = vpop.f32.mrf.mxu0
    %v4519 = vadd.f32 0.0, %v4518
    %v4520 = vpop.f32.mrf.mxu0
    %4521 = vmatprep.mubr.f32.mxu0 0.0
    %4522 = vmatmul.mubr.f32.gmra.mxu0 %v4241
    %v4523 = vpop.f32.mrf.mxu0
    %v4524 = vadd.f32 0.0, %v4523
    %v4525 = vpop.f32.mrf.mxu0
    %4526 = vmatprep.mubr.f32.mxu0 0.0
    %4527 = vmatmul.mubr.f32.gmra.mxu0 %v4244
    %v4528 = vpop.f32.mrf.mxu0
    %v4529 = vadd.f32 0.0, %v4528
    %v4530 = vpop.f32.mrf.mxu0
    %4531 = vmatprep.mubr.f32.mxu0 0.0
    %4532 = vmatmul.mubr.f32.gmra.mxu0 %v4247
    %v4533 = vpop.f32.mrf.mxu0
    %v4534 = vadd.f32 0.0, %v4533
    %v4535 = vpop.f32.mrf.mxu0
    %4536 = vmatprep.mubr.f32.mxu0 0.0
    %4537 = vmatmul.mubr.f32.gmra.mxu0 %v4250
    %v4538 = vpop.f32.mrf.mxu0
    %v4539 = vadd.f32 0.0, %v4538
    %v4540 = vpop.f32.mrf.mxu0
    %4541 = vmatprep.mubr.f32.mxu0 0.0
    %4542 = vmatmul.mubr.f32.gmra.mxu0 %v4253
    %v4543 = vpop.f32.mrf.mxu0
    %v4544 = vadd.f32 0.0, %v4543
    %v4545 = vpop.f32.mrf.mxu0
    %4546 = vmatprep.mubr.f32.mxu0 0.0
    %4547 = vmatmul.mubr.f32.gmra.mxu0 %v4256
    %v4548 = vpop.f32.mrf.mxu0
    %v4549 = vadd.f32 0.0, %v4548
    %v4550 = vpop.f32.mrf.mxu0
    %4551 = vmatprep.mubr.f32.mxu0 0.0
    %4552 = vmatmul.mubr.f32.gmra.mxu0 %v4259
    %v4553 = vpop.f32.mrf.mxu0
    %v4554 = vadd.f32 0.0, %v4553
    %v4555 = vpop.f32.mrf.mxu0
    %4556 = vmatprep.mubr.f32.mxu0 0.0
    %4557 = vmatmul.mubr.f32.gmra.mxu0 %v4262
    %v4558 = vpop.f32.mrf.mxu0
    %v4559 = vadd.f32 0.0, %v4558
    %v4560 = vpop.f32.mrf.mxu0
    %4561 = vmatprep.mubr.f32.mxu0 0.0
    %4562 = vmatmul.mubr.f32.gmra.mxu0 %v4265
    %v4563 = vpop.f32.mrf.mxu0
    %v4564 = vadd.f32 0.0, %v4563
    %v4565 = vpop.f32.mrf.mxu0
    %4566 = vmatprep.mubr.f32.mxu0 0.0
    %4567 = vmatmul.mubr.f32.gmra.mxu0 %v4268
    %v4568 = vpop.f32.mrf.mxu0
    %v4569 = vadd.f32 0.0, %v4568
    %v4570 = vpop.f32.mrf.mxu0
    %4571 = vmatprep.mubr.f32.mxu0 0.0
    %4572 = vmatmul.mubr.f32.gmra.mxu0 %v4271
    %v4573 = vpop.f32.mrf.mxu0
    %v4574 = vadd.f32 0.0, %v4573
    %v4575 = vpop.f32.mrf.mxu0
    %4576 = vmatprep.mubr.f32.mxu0 0.0
    %4577 = vmatmul.mubr.f32.gmra.mxu0 %v4274
    %v4578 = vpop.f32.mrf.mxu0
    %v4579 = vadd.f32 0.0, %v4578
    %v4580 = vpop.f32.mrf.mxu0
    %4581 = vmatprep.mubr.f32.mxu0 0.0
    %4582 = vmatmul.mubr.f32.gmra.mxu0 %v4277
    %v4583 = vpop.f32.mrf.mxu0
    %v4584 = vadd.f32 0.0, %v4583
    %v4585 = vpop.f32.mrf.mxu0
    %4586 = vmatprep.mubr.f32.mxu0 0.0
    %4587 = vmatmul.mubr.f32.gmra.mxu0 %v4280
    %v4588 = vpop.f32.mrf.mxu0
    %v4589 = vadd.f32 0.0, %v4588
    %v4590 = vpop.f32.mrf.mxu0
    %4591 = vmatprep.mubr.f32.mxu0 0.0
    %4592 = vmatmul.mubr.f32.gmra.mxu0 %v4283
    %v4593 = vpop.f32.mrf.mxu0
    %v4594 = vadd.f32 0.0, %v4593
    %v4595 = vpop.f32.mrf.mxu0
    %4596 = vmatprep.mubr.f32.mxu0 0.0
    %4597 = vmatmul.mubr.f32.gmra.mxu0 %v4286
    %v4598 = vpop.f32.mrf.mxu0
    %v4599 = vadd.f32 0.0, %v4598
    %v4600 = vpop.f32.mrf.mxu0
    %4601 = vmatprep.mubr.f32.mxu0 0.0
    %4602 = vmatmul.mubr.f32.gmra.mxu0 %v4289
    %v4603 = vpop.f32.mrf.mxu0
    %v4604 = vadd.f32 0.0, %v4603
    %v4605 = vpop.f32.mrf.mxu0
    %4606 = vmatprep.mubr.f32.mxu0 0.0
    %4607 = vmatmul.mubr.f32.gmra.mxu0 %v4292
    %v4608 = vpop.f32.mrf.mxu0
    %v4609 = vadd.f32 0.0, %v4608
    %v4610 = vpop.f32.mrf.mxu0
    %4611 = vmatprep.mubr.f32.mxu0 0.0
    %4612 = vmatmul.mubr.f32.gmra.mxu0 %v4295
    %v4613 = vpop.f32.mrf.mxu0
    %v4614 = vadd.f32 0.0, %v4613
    %v4615 = vpop.f32.mrf.mxu0
    %4616 = vmatprep.mubr.f32.mxu0 0.0
    %4617 = vmatmul.mubr.f32.gmra.mxu0 %v4298
    %v4618 = vpop.f32.mrf.mxu0
    %v4619 = vadd.f32 0.0, %v4618
    %v4620 = vpop.f32.mrf.mxu0
    %4621 = vmatprep.mubr.f32.mxu0 0.0
    %4622 = vmatmul.mubr.f32.gmra.mxu0 %v4301
    %v4623 = vpop.f32.mrf.mxu0
    %v4624 = vadd.f32 0.0, %v4623
    %v4625 = vpop.f32.mrf.mxu0
    %4626 = vmatprep.mubr.f32.mxu0 0.0
    %4627 = vmatmul.mubr.f32.gmra.mxu0 %v4304
    %v4628 = vpop.f32.mrf.mxu0
    %v4629 = vadd.f32 0.0, %v4628
    %v4630 = vpop.f32.mrf.mxu0
    %4631 = vmatprep.mubr.f32.mxu0 0.0
    %4632 = vmatmul.mubr.f32.gmra.mxu0 %v4307
    %v4633 = vpop.f32.mrf.mxu0
    %v4634 = vadd.f32 0.0, %v4633
    %v4635 = vpop.f32.mrf.mxu0
    %4636 = vmatprep.mubr.f32.mxu0 0.0
    %4637 = vmatmul.mubr.f32.gmra.mxu0 %v4310
    %v4638 = vpop.f32.mrf.mxu0
    %v4639 = vadd.f32 0.0, %v4638
    %v4640 = vpop.f32.mrf.mxu0
    %4641 = vmatprep.mubr.f32.mxu0 0.0
    %4642 = vmatmul.mubr.f32.gmra.mxu0 %v4313
    %v4643 = vpop.f32.mrf.mxu0
    %v4644 = vadd.f32 0.0, %v4643
    %v4645 = vpop.f32.mrf.mxu0
    %4646 = vmatprep.mubr.f32.mxu0 0.0
    %4647 = vmatmul.mubr.f32.gmra.mxu0 %v4316
    %v4648 = vpop.f32.mrf.mxu0
    %v4649 = vadd.f32 0.0, %v4648
    %v4650 = vpop.f32.mrf.mxu0
    %4651 = vmatprep.mubr.f32.mxu0 0.0
    %4652 = vmatmul.mubr.f32.gmra.mxu0 %v4319
    %v4653 = vpop.f32.mrf.mxu0
    %v4654 = vadd.f32 0.0, %v4653
    %v4655 = vpop.f32.mrf.mxu0
    %4656 = vmatprep.mubr.f32.mxu0 0.0
    %4657 = vmatmul.mubr.f32.gmra.mxu0 %v4322
    %v4658 = vpop.f32.mrf.mxu0
    %v4659 = vadd.f32 0.0, %v4658
    %v4660 = vpop.f32.mrf.mxu0
    %4661 = vmatprep.mubr.f32.mxu0 0.0
    %4662 = vmatmul.mubr.f32.gmra.mxu0 %v4325
    %v4663 = vpop.f32.mrf.mxu0
    %v4664 = vadd.f32 0.0, %v4663
    %v4665 = vpop.f32.mrf.mxu0
    %4666 = vmatprep.mubr.f32.mxu0 0.0
    %4667 = vmatmul.mubr.f32.gmra.mxu0 %v4328
    %v4668 = vpop.f32.mrf.mxu0
    %v4669 = vadd.f32 0.0, %v4668
    %v4670 = vpop.f32.mrf.mxu0
    %4671 = vmatprep.mubr.f32.mxu0 0.0
    %4672 = vmatmul.mubr.f32.gmra.mxu0 %v4331
    %v4673 = vpop.f32.mrf.mxu0
    %v4674 = vadd.f32 0.0, %v4673
    %v4675 = vpop.f32.mrf.mxu0
    %4676 = vmatprep.mubr.f32.mxu0 0.0
    %4677 = vmatmul.mubr.f32.gmra.mxu0 %v4334
    %v4678 = vpop.f32.mrf.mxu0
    %v4679 = vadd.f32 0.0, %v4678
    %v4680 = vpop.f32.mrf.mxu0
    %4681 = vmatprep.mubr.f32.mxu0 0.0
    %4682 = vmatmul.mubr.f32.gmra.mxu0 %v4337
    %v4683 = vpop.f32.mrf.mxu0
    %v4684 = vadd.f32 0.0, %v4683
    %v4685 = vpop.f32.mrf.mxu0
    %4686 = vmatprep.mubr.f32.mxu0 0.0
    %4687 = vmatmul.mubr.f32.gmra.mxu0 %v4340
    %v4688 = vpop.f32.mrf.mxu0
    %v4689 = vadd.f32 0.0, %v4688
    %v4690 = vpop.f32.mrf.mxu0
    %4691 = vmatprep.mubr.f32.mxu0 0.0
    %4692 = vmatmul.mubr.f32.gmra.mxu0 %v4343
    %v4693 = vpop.f32.mrf.mxu0
    %v4694 = vadd.f32 0.0, %v4693
    %v4695 = vpop.f32.mrf.mxu0
    %4696 = vmatprep.mubr.f32.mxu0 0.0
    %4697 = vmatmul.mubr.f32.gmra.mxu0 %v4346
    %v4698 = vpop.f32.mrf.mxu0
    %v4699 = vadd.f32 0.0, %v4698
    %v4700 = vpop.f32.mrf.mxu0
    %4701 = vmatprep.mubr.f32.mxu0 0.0
    %4702 = vmatmul.mubr.f32.gmra.mxu0 %v4349
    %v4703 = vpop.f32.mrf.mxu0
    %v4704 = vadd.f32 0.0, %v4703
    %v4705 = vpop.f32.mrf.mxu0
    %4706 = vmatprep.mubr.f32.mxu0 0.0
    %4707 = vmatmul.mubr.f32.gmra.mxu0 %v4352
    %v4708 = vpop.f32.mrf.mxu0
    %v4709 = vadd.f32 0.0, %v4708
    %v4710 = vpop.f32.mrf.mxu0
    %4711 = vmatprep.mubr.f32.mxu0 0.0
    %4712 = vmatmul.mubr.f32.gmra.mxu0 %v4355
    %v4713 = vpop.f32.mrf.mxu0
    %v4714 = vadd.f32 0.0, %v4713
    %v4715 = vpop.f32.mrf.mxu0
    %4716 = vmatprep.mubr.f32.mxu0 0.0
    %4717 = vmatmul.mubr.f32.gmra.mxu0 %v4358
    %v4718 = vpop.f32.mrf.mxu0
    %v4719 = vadd.f32 0.0, %v4718
    %v4720 = vpop.f32.mrf.mxu0
    %4721 = vmatprep.mubr.f32.mxu0 0.0
    %4722 = vmatmul.mubr.f32.gmra.mxu0 %v4361
    %v4723 = vpop.f32.mrf.mxu0
    %v4724 = vadd.f32 0.0, %v4723
    %v4725 = vpop.f32.mrf.mxu0
    %4726 = vmatprep.mubr.f32.mxu0 0.0
    %4727 = vmatmul.mubr.f32.gmra.mxu0 %v4364
    %v4728 = vpop.f32.mrf.mxu0
    %v4729 = vadd.f32 0.0, %v4728
    %v4730 = vpop.f32.mrf.mxu0
    %4731 = vmatprep.mubr.f32.mxu0 0.0
    %4732 = vmatmul.mubr.f32.gmra.mxu0 %v4367
    %v4733 = vpop.f32.mrf.mxu0
    %v4734 = vadd.f32 0.0, %v4733
    %v4735 = vpop.f32.mrf.mxu0
    %4736 = vmatprep.mubr.f32.mxu0 0.0
    %4737 = vmatmul.mubr.f32.gmra.mxu0 %v4370
    %v4738 = vpop.f32.mrf.mxu0
    %v4739 = vadd.f32 0.0, %v4738
    %v4740 = vpop.f32.mrf.mxu0
    %4741 = vmatprep.mubr.f32.mxu0 0.0
    %4742 = vmatmul.mubr.f32.gmra.mxu0 %v4373
    %v4743 = vpop.f32.mrf.mxu0
    %v4744 = vadd.f32 0.0, %v4743
    %v4745 = vpop.f32.mrf.mxu0
    %4746 = vmatprep.mubr.f32.mxu0 0.0
    %4747 = vmatmul.mubr.f32.gmra.mxu0 %v4376
    %v4748 = vpop.f32.mrf.mxu0
    %v4749 = vadd.f32 0.0, %v4748
    %v4750 = vpop.f32.mrf.mxu0
    %4751 = vmatprep.mubr.f32.mxu0 0.0
    %4752 = vmatmul.mubr.f32.gmra.mxu0 %v4379
    %v4753 = vpop.f32.mrf.mxu0
    %v4754 = vadd.f32 0.0, %v4753
    %v4755 = vpop.f32.mrf.mxu0
    %4756 = vmatprep.mubr.f32.mxu0 0.0
    %4757 = vmatmul.mubr.f32.gmra.mxu0 %v4382
    %v4758 = vpop.f32.mrf.mxu0
    %v4759 = vadd.f32 0.0, %v4758
    %v4760 = vpop.f32.mrf.mxu0
    %4761 = vmatprep.mubr.f32.mxu0 0.0
    %4762 = vmatmul.mubr.f32.gmra.mxu0 %v4385
    %v4763 = vpop.f32.mrf.mxu0
    %v4764 = vadd.f32 0.0, %v4763
    %v4765 = vpop.f32.mrf.mxu0
    %4766 = vmatprep.mubr.f32.mxu0 0.0
    %4767 = vmatmul.mubr.f32.gmra.mxu0 %v4388
    %v4768 = vpop.f32.mrf.mxu0
    %v4769 = vadd.f32 0.0, %v4768
    %v4770 = vpop.f32.mrf.mxu0
    %4771 = vmatprep.mubr.f32.mxu0 0.0
    %4772 = vmatmul.mubr.f32.gmra.mxu0 %v4391
    %v4773 = vpop.f32.mrf.mxu0
    %v4774 = vadd.f32 0.0, %v4773
    %v4775 = vpop.f32.mrf.mxu0
    %4776 = vmatprep.mubr.f32.mxu0 0.0
    %4777 = vmatmul.mubr.f32.gmra.mxu0 %v4394
    %v4778 = vpop.f32.mrf.mxu0
    %v4779 = vadd.f32 0.0, %v4778
    %v4780 = vpop.f32.mrf.mxu0
    %4781 = vmatprep.mubr.f32.mxu0 0.0
    %4782 = vmatmul.mubr.f32.gmra.mxu0 %v4397
    %v4783 = vpop.f32.mrf.mxu0
    %v4784 = vadd.f32 0.0, %v4783
    %v4785 = vpop.f32.mrf.mxu0
    %4786 = vdwg.mxu0
    %v4787 = vadd.f32 %v4077, %v4469
    %v4788 = vadd.f32 %v4078, %v4474
    %v4789 = vadd.f32 %v4079, %v4479
    %v4790 = vadd.f32 %v4080, %v4484
    %v4791 = vadd.f32 %v4081, %v4489
    %v4792 = vadd.f32 %v4082, %v4494
    %v4793 = vadd.f32 %v4083, %v4499
    %v4794 = vadd.f32 %v4084, %v4504
    %v4795 = vadd.f32 %v4085, %v4509
    %v4796 = vadd.f32 %v4086, %v4514
    %v4797 = vadd.f32 %v4087, %v4519
    %v4798 = vadd.f32 %v4088, %v4524
    %v4799 = vadd.f32 %v4089, %v4529
    %v4800 = vadd.f32 %v4090, %v4534
    %v4801 = vadd.f32 %v4091, %v4539
    %v4802 = vadd.f32 %v4092, %v4544
    %v4803 = vadd.f32 %v4093, %v4549
    %v4804 = vadd.f32 %v4094, %v4554
    %v4805 = vadd.f32 %v4095, %v4559
    %v4806 = vadd.f32 %v4096, %v4564
    %v4807 = vadd.f32 %v4097, %v4569
    %v4808 = vadd.f32 %v4098, %v4574
    %v4809 = vadd.f32 %v4099, %v4579
    %v4810 = vadd.f32 %v4100, %v4584
    %v4811 = vadd.f32 %v4101, %v4589
    %v4812 = vadd.f32 %v4102, %v4594
    %v4813 = vadd.f32 %v4103, %v4599
    %v4814 = vadd.f32 %v4104, %v4604
    %v4815 = vadd.f32 %v4105, %v4609
    %v4816 = vadd.f32 %v4106, %v4614
    %v4817 = vadd.f32 %v4107, %v4619
    %v4818 = vadd.f32 %v4108, %v4624
    %v4819 = vadd.f32 %v4109, %v4629
    %v4820 = vadd.f32 %v4110, %v4634
    %v4821 = vadd.f32 %v4111, %v4639
    %v4822 = vadd.f32 %v4112, %v4644
    %v4823 = vadd.f32 %v4113, %v4649
    %v4824 = vadd.f32 %v4114, %v4654
    %v4825 = vadd.f32 %v4115, %v4659
    %v4826 = vadd.f32 %v4116, %v4664
    %v4827 = vadd.f32 %v4117, %v4669
    %v4828 = vadd.f32 %v4118, %v4674
    %v4829 = vadd.f32 %v4119, %v4679
    %v4830 = vadd.f32 %v4120, %v4684
    %v4831 = vadd.f32 %v4121, %v4689
    %v4832 = vadd.f32 %v4122, %v4694
    %v4833 = vadd.f32 %v4123, %v4699
    %v4834 = vadd.f32 %v4124, %v4704
    %v4835 = vadd.f32 %v4125, %v4709
    %v4836 = vadd.f32 %v4126, %v4714
    %v4837 = vadd.f32 %v4127, %v4719
    %v4838 = vadd.f32 %v4128, %v4724
    %v4839 = vadd.f32 %v4129, %v4729
    %v4840 = vadd.f32 %v4130, %v4734
    %v4841 = vadd.f32 %v4131, %v4739
    %v4842 = vadd.f32 %v4132, %v4744
    %v4843 = vadd.f32 %v4133, %v4749
    %v4844 = vadd.f32 %v4134, %v4754
    %v4845 = vadd.f32 %v4135, %v4759
    %v4846 = vadd.f32 %v4136, %v4764
    %v4847 = vadd.f32 %v4137, %v4769
    %v4848 = vadd.f32 %v4138, %v4774
    %v4849 = vadd.f32 %v4139, %v4779
    %v4850 = vadd.f32 %v4140, %v4784
    %v4851 = vld [vmem:[%s4141 + $0x1] sm:$0xff]
    %v4852 = vld [vmem:[%s4141 + $0x9] sm:$0xff]
    %v4853 = vld [vmem:[%s4141 + $0x19] sm:$0xff]
    %v4854 = vld [vmem:[%s4141 + $0x21] sm:$0xff]
    %v4855 = vld [vmem:[%s4141 + $0x31] sm:$0xff]
    %v4856 = vld [vmem:[%s4141 + $0x39] sm:$0xff]
    %v4857 = vld [vmem:[%s4141 + $0x49] sm:$0xff]
    %v4858 = vld [vmem:[%s4141 + $0x51] sm:$0xff]
    %v4859 = vld [vmem:[%s4141 + $0x61] sm:$0xff]
    %v4860 = vld [vmem:[%s4141 + $0x69] sm:$0xff]
    %v4861 = vld [vmem:[%s4141 + $0x79] sm:$0xff]
    %v4862 = vld [vmem:[%s4141 + $0x81] sm:$0xff]
    %v4863 = vld [vmem:[%s4141 + $0x91] sm:$0xff]
    %v4864 = vld [vmem:[%s4141 + $0x99] sm:$0xff]
    %v4865 = vld [vmem:[%s4141 + $0xa9] sm:$0xff]
    %v4866 = vld [vmem:[%s4141 + $0xb1] sm:$0xff]
    %v4867 = vld [vmem:[%s4141 + $0xc1] sm:$0xff]
    %v4868 = vld [vmem:[%s4141 + $0xc9] sm:$0xff]
    %v4869 = vld [vmem:[%s4141 + $0xd9] sm:$0xff]
    %v4870 = vld [vmem:[%s4141 + $0xe1] sm:$0xff]
    %v4871 = vld [vmem:[%s4141 + $0xf1] sm:$0xff]
    %v4872 = vld [vmem:[%s4141 + $0xf9] sm:$0xff]
    %v4873 = vld [vmem:[%s4141 + $0x109] sm:$0xff]
    %v4874 = vld [vmem:[%s4141 + $0x111] sm:$0xff]
    %v4875 = vld [vmem:[%s4141 + $0x121] sm:$0xff]
    %v4876 = vld [vmem:[%s4141 + $0x129] sm:$0xff]
    %v4877 = vld [vmem:[%s4141 + $0x139] sm:$0xff]
    %v4878 = vld [vmem:[%s4141 + $0x141] sm:$0xff]
    %v4879 = vld [vmem:[%s4141 + $0x151] sm:$0xff]
    %v4880 = vld [vmem:[%s4141 + $0x159] sm:$0xff]
    %v4881 = vld [vmem:[%s4141 + $0x169] sm:$0xff]
    %v4882 = vld [vmem:[%s4141 + $0x171] sm:$0xff]
    %v4883 = vld [vmem:[%s4141 + $0x1b1] sm:$0xff]
    %v4884 = vld [vmem:[%s4141 + $0x1b9] sm:$0xff]
    %v4885 = vld [vmem:[%s4141 + $0x1c9] sm:$0xff]
    %v4886 = vld [vmem:[%s4141 + $0x1d1] sm:$0xff]
    %v4887 = vld [vmem:[%s4141 + $0x1e1] sm:$0xff]
    %v4888 = vld [vmem:[%s4141 + $0x1e9] sm:$0xff]
    %v4889 = vld [vmem:[%s4141 + $0x1f9] sm:$0xff]
    %v4890 = vld [vmem:[%s4141 + $0x201] sm:$0xff]
    %v4891 = vld [vmem:[%s4141 + $0x211] sm:$0xff]
    %v4892 = vld [vmem:[%s4141 + $0x219] sm:$0xff]
    %v4893 = vld [vmem:[%s4141 + $0x229] sm:$0xff]
    %v4894 = vld [vmem:[%s4141 + $0x231] sm:$0xff]
    %v4895 = vld [vmem:[%s4141 + $0x241] sm:$0xff]
    %v4896 = vld [vmem:[%s4141 + $0x249] sm:$0xff]
    %v4897 = vld [vmem:[%s4141 + $0x259] sm:$0xff]
    %v4898 = vld [vmem:[%s4141 + $0x261] sm:$0xff]
    %v4899 = vld [vmem:[%s4141 + $0x271] sm:$0xff]
    %v4900 = vld [vmem:[%s4141 + $0x279] sm:$0xff]
    %v4901 = vld [vmem:[%s4141 + $0x289] sm:$0xff]
    %v4902 = vld [vmem:[%s4141 + $0x291] sm:$0xff]
    %v4903 = vld [vmem:[%s4141 + $0x2a1] sm:$0xff]
    %v4904 = vld [vmem:[%s4141 + $0x2a9] sm:$0xff]
    %v4905 = vld [vmem:[%s4141 + $0x2b9] sm:$0xff]
    %v4906 = vld [vmem:[%s4141 + $0x2c1] sm:$0xff]
    %v4907 = vld [vmem:[%s4141 + $0x2d1] sm:$0xff]
    %v4908 = vld [vmem:[%s4141 + $0x2d9] sm:$0xff]
    %v4909 = vld [vmem:[%s4141 + $0x2e9] sm:$0xff]
    %v4910 = vld [vmem:[%s4141 + $0x2f1] sm:$0xff]
    %v4911 = vld [vmem:[%s4141 + $0x301] sm:$0xff]
    %v4912 = vld [vmem:[%s4141 + $0x309] sm:$0xff]
    %v4913 = vld [vmem:[%s4141 + $0x319] sm:$0xff]
    %v4914 = vld [vmem:[%s4141 + $0x321] sm:$0xff]
    %v4915 = vld [vmem:[%s1 + $0x38] sm:$0x7]
    %v4917 = vsel %vm142, %v4851, 0
    %v4920 = vsel %vm142, %v4852, 0
    %v4923 = vsel %vm142, %v4853, 0
    %v4926 = vsel %vm142, %v4854, 0
    %v4929 = vsel %vm142, %v4855, 0
    %v4932 = vsel %vm142, %v4856, 0
    %v4935 = vsel %vm142, %v4857, 0
    %v4938 = vsel %vm142, %v4858, 0
    %v4941 = vsel %vm142, %v4859, 0
    %v4944 = vsel %vm142, %v4860, 0
    %v4947 = vsel %vm142, %v4861, 0
    %v4950 = vsel %vm142, %v4862, 0
    %v4953 = vsel %vm142, %v4863, 0
    %v4956 = vsel %vm142, %v4864, 0
    %v4959 = vsel %vm142, %v4865, 0
    %v4962 = vsel %vm142, %v4866, 0
    %v4965 = vsel %vm142, %v4867, 0
    %v4968 = vsel %vm142, %v4868, 0
    %v4971 = vsel %vm142, %v4869, 0
    %v4974 = vsel %vm142, %v4870, 0
    %v4977 = vsel %vm142, %v4871, 0
    %v4980 = vsel %vm142, %v4872, 0
    %v4983 = vsel %vm142, %v4873, 0
    %v4986 = vsel %vm142, %v4874, 0
    %v4989 = vsel %vm142, %v4875, 0
    %v4992 = vsel %vm142, %v4876, 0
    %v4995 = vsel %vm142, %v4877, 0
    %v4998 = vsel %vm142, %v4878, 0
    %v5001 = vsel %vm142, %v4879, 0
    %v5004 = vsel %vm142, %v4880, 0
    %v5007 = vsel %vm142, %v4881, 0
    %v5010 = vsel %vm142, %v4882, 0
    %v5013 = vsel %vm142, %v4883, 0
    %v5016 = vsel %vm142, %v4884, 0
    %v5019 = vsel %vm142, %v4885, 0
    %v5022 = vsel %vm142, %v4886, 0
    %v5025 = vsel %vm142, %v4887, 0
    %v5028 = vsel %vm142, %v4888, 0
    %v5031 = vsel %vm142, %v4889, 0
    %v5034 = vsel %vm142, %v4890, 0
    %v5037 = vsel %vm142, %v4891, 0
    %v5040 = vsel %vm142, %v4892, 0
    %v5043 = vsel %vm142, %v4893, 0
    %v5046 = vsel %vm142, %v4894, 0
    %v5049 = vsel %vm142, %v4895, 0
    %v5052 = vsel %vm142, %v4896, 0
    %v5055 = vsel %vm142, %v4897, 0
    %v5058 = vsel %vm142, %v4898, 0
    %v5061 = vsel %vm142, %v4899, 0
    %v5064 = vsel %vm142, %v4900, 0
    %v5067 = vsel %vm142, %v4901, 0
    %v5070 = vsel %vm142, %v4902, 0
    %v5073 = vsel %vm142, %v4903, 0
    %v5076 = vsel %vm142, %v4904, 0
    %v5079 = vsel %vm142, %v4905, 0
    %v5082 = vsel %vm142, %v4906, 0
    %v5085 = vsel %vm142, %v4907, 0
    %v5088 = vsel %vm142, %v4908, 0
    %v5091 = vsel %vm142, %v4909, 0
    %v5094 = vsel %vm142, %v4910, 0
    %v5097 = vsel %vm142, %v4911, 0
    %v5100 = vsel %vm142, %v4912, 0
    %v5103 = vsel %vm142, %v4913, 0
    %v5106 = vsel %vm142, %v4914, 0
    %v5109 = vsel %vm335, %v4915, 0
    %5111 = vmatprep.subr.mxu0 0.0
    %5112 = vmatpush1.msra.mxu0 0.0
    %5113 = vmatprep.subr.mxu0 0.0
    %5114 = vmatpush1.msra.mxu0 0.0
    %5115 = vmatprep.subr.mxu0 0.0
    %5116 = vmatpush1.msra.mxu0 0.0
    %5117 = vmatprep.subr.mxu0 0.0
    %5118 = vmatpush1.msra.mxu0 0.0
    %5119 = vmatprep.subr.mxu0 0.0
    %5120 = vmatpush1.msra.mxu0 0.0
    %5121 = vmatprep.subr.mxu0 0.0
    %5122 = vmatpush1.msra.mxu0 0.0
    %5123 = vmatprep.subr.mxu0 0.0
    %5124 = vmatpush1.msra.mxu0 0.0
    %5125 = vmatprep.subr.mxu0 0.0
    %5126 = vmatpush1.msra.mxu0 0.0
    %5127 = vmatprep.subr.mxu0 0.0
    %5128 = vmatpush1.msra.mxu0 0.0
    %5129 = vmatprep.subr.mxu0 0.0
    %5130 = vmatpush1.msra.mxu0 0.0
    %5131 = vmatprep.subr.mxu0 0.0
    %5132 = vmatpush1.msra.mxu0 0.0
    %5133 = vmatprep.subr.mxu0 0.0
    %5134 = vmatpush1.msra.mxu0 0.0
    %5135 = vmatprep.subr.mxu0 0.0
    %5136 = vmatpush1.msra.mxu0 0.0
    %5137 = vmatprep.subr.mxu0 0.0
    %5138 = vmatpush1.msra.mxu0 0.0
    %5139 = vmatprep.subr.mxu0 0.0
    %5140 = vmatpush1.msra.mxu0 0.0
    %5141 = vmatprep.subr.mxu0 0.0
    %5142 = vmatpush1.msra.mxu0 %v5109
    %5143 = vmatprep.subr.mxu0 0.0
    %5144 = vmatpush2.msra.mxu0 0.0
    %5145 = vmatprep.subr.mxu0 0.0
    %5146 = vmatpush2.msra.mxu0 0.0
    %5147 = vmatprep.subr.mxu0 0.0
    %5148 = vmatpush2.msra.mxu0 0.0
    %5149 = vmatprep.subr.mxu0 0.0
    %5150 = vmatpush2.msra.mxu0 0.0
    %5151 = vmatprep.subr.mxu0 0.0
    %5152 = vmatpush2.msra.mxu0 0.0
    %5153 = vmatprep.subr.mxu0 0.0
    %5154 = vmatpush2.msra.mxu0 0.0
    %5155 = vmatprep.subr.mxu0 0.0
    %5156 = vmatpush2.msra.mxu0 0.0
    %5157 = vmatprep.subr.mxu0 0.0
    %5158 = vmatpush2.msra.mxu0 0.0
    %5159 = vmatprep.subr.mxu0 0.0
    %5160 = vmatpush2.msra.mxu0 0.0
    %5161 = vmatprep.subr.mxu0 0.0
    %5162 = vmatpush2.msra.mxu0 0.0
    %5163 = vmatprep.subr.mxu0 0.0
    %5164 = vmatpush2.msra.mxu0 0.0
    %5165 = vmatprep.subr.mxu0 0.0
    %5166 = vmatpush2.msra.mxu0 0.0
    %5167 = vmatprep.subr.mxu0 0.0
    %5168 = vmatpush2.msra.mxu0 0.0
    %5169 = vmatprep.subr.mxu0 0.0
    %5170 = vmatpush2.msra.mxu0 0.0
    %5171 = vmatprep.subr.mxu0 0.0
    %5172 = vmatpush2.msra.mxu0 0.0
    %5173 = vmatprep.subr.mxu0 0.0
    %5174 = vmatpush2.msra.mxu0 0.0
    %5175 = vmatprep.mubr.f32.mxu0 0.0
    %5176 = vmatmul.mubr.f32.gmra.mxu0 %v4917
    %v5177 = vpop.f32.mrf.mxu0
    %v5178 = vadd.f32 0.0, %v5177
    %v5179 = vpop.f32.mrf.mxu0
    %5180 = vmatprep.mubr.f32.mxu0 0.0
    %5181 = vmatmul.mubr.f32.gmra.mxu0 %v4920
    %v5182 = vpop.f32.mrf.mxu0
    %v5183 = vadd.f32 0.0, %v5182
    %v5184 = vpop.f32.mrf.mxu0
    %5185 = vmatprep.mubr.f32.mxu0 0.0
    %5186 = vmatmul.mubr.f32.gmra.mxu0 %v4923
    %v5187 = vpop.f32.mrf.mxu0
    %v5188 = vadd.f32 0.0, %v5187
    %v5189 = vpop.f32.mrf.mxu0
    %5190 = vmatprep.mubr.f32.mxu0 0.0
    %5191 = vmatmul.mubr.f32.gmra.mxu0 %v4926
    %v5192 = vpop.f32.mrf.mxu0
    %v5193 = vadd.f32 0.0, %v5192
    %v5194 = vpop.f32.mrf.mxu0
    %5195 = vmatprep.mubr.f32.mxu0 0.0
    %5196 = vmatmul.mubr.f32.gmra.mxu0 %v4929
    %v5197 = vpop.f32.mrf.mxu0
    %v5198 = vadd.f32 0.0, %v5197
    %v5199 = vpop.f32.mrf.mxu0
    %5200 = vmatprep.mubr.f32.mxu0 0.0
    %5201 = vmatmul.mubr.f32.gmra.mxu0 %v4932
    %v5202 = vpop.f32.mrf.mxu0
    %v5203 = vadd.f32 0.0, %v5202
    %v5204 = vpop.f32.mrf.mxu0
    %5205 = vmatprep.mubr.f32.mxu0 0.0
    %5206 = vmatmul.mubr.f32.gmra.mxu0 %v4935
    %v5207 = vpop.f32.mrf.mxu0
    %v5208 = vadd.f32 0.0, %v5207
    %v5209 = vpop.f32.mrf.mxu0
    %5210 = vmatprep.mubr.f32.mxu0 0.0
    %5211 = vmatmul.mubr.f32.gmra.mxu0 %v4938
    %v5212 = vpop.f32.mrf.mxu0
    %v5213 = vadd.f32 0.0, %v5212
    %v5214 = vpop.f32.mrf.mxu0
    %5215 = vmatprep.mubr.f32.mxu0 0.0
    %5216 = vmatmul.mubr.f32.gmra.mxu0 %v4941
    %v5217 = vpop.f32.mrf.mxu0
    %v5218 = vadd.f32 0.0, %v5217
    %v5219 = vpop.f32.mrf.mxu0
    %5220 = vmatprep.mubr.f32.mxu0 0.0
    %5221 = vmatmul.mubr.f32.gmra.mxu0 %v4944
    %v5222 = vpop.f32.mrf.mxu0
    %v5223 = vadd.f32 0.0, %v5222
    %v5224 = vpop.f32.mrf.mxu0
    %5225 = vmatprep.mubr.f32.mxu0 0.0
    %5226 = vmatmul.mubr.f32.gmra.mxu0 %v4947
    %v5227 = vpop.f32.mrf.mxu0
    %v5228 = vadd.f32 0.0, %v5227
    %v5229 = vpop.f32.mrf.mxu0
    %5230 = vmatprep.mubr.f32.mxu0 0.0
    %5231 = vmatmul.mubr.f32.gmra.mxu0 %v4950
    %v5232 = vpop.f32.mrf.mxu0
    %v5233 = vadd.f32 0.0, %v5232
    %v5234 = vpop.f32.mrf.mxu0
    %5235 = vmatprep.mubr.f32.mxu0 0.0
    %5236 = vmatmul.mubr.f32.gmra.mxu0 %v4953
    %v5237 = vpop.f32.mrf.mxu0
    %v5238 = vadd.f32 0.0, %v5237
    %v5239 = vpop.f32.mrf.mxu0
    %5240 = vmatprep.mubr.f32.mxu0 0.0
    %5241 = vmatmul.mubr.f32.gmra.mxu0 %v4956
    %v5242 = vpop.f32.mrf.mxu0
    %v5243 = vadd.f32 0.0, %v5242
    %v5244 = vpop.f32.mrf.mxu0
    %5245 = vmatprep.mubr.f32.mxu0 0.0
    %5246 = vmatmul.mubr.f32.gmra.mxu0 %v4959
    %v5247 = vpop.f32.mrf.mxu0
    %v5248 = vadd.f32 0.0, %v5247
    %v5249 = vpop.f32.mrf.mxu0
    %5250 = vmatprep.mubr.f32.mxu0 0.0
    %5251 = vmatmul.mubr.f32.gmra.mxu0 %v4962
    %v5252 = vpop.f32.mrf.mxu0
    %v5253 = vadd.f32 0.0, %v5252
    %v5254 = vpop.f32.mrf.mxu0
    %5255 = vmatprep.mubr.f32.mxu0 0.0
    %5256 = vmatmul.mubr.f32.gmra.mxu0 %v4965
    %v5257 = vpop.f32.mrf.mxu0
    %v5258 = vadd.f32 0.0, %v5257
    %v5259 = vpop.f32.mrf.mxu0
    %5260 = vmatprep.mubr.f32.mxu0 0.0
    %5261 = vmatmul.mubr.f32.gmra.mxu0 %v4968
    %v5262 = vpop.f32.mrf.mxu0
    %v5263 = vadd.f32 0.0, %v5262
    %v5264 = vpop.f32.mrf.mxu0
    %5265 = vmatprep.mubr.f32.mxu0 0.0
    %5266 = vmatmul.mubr.f32.gmra.mxu0 %v4971
    %v5267 = vpop.f32.mrf.mxu0
    %v5268 = vadd.f32 0.0, %v5267
    %v5269 = vpop.f32.mrf.mxu0
    %5270 = vmatprep.mubr.f32.mxu0 0.0
    %5271 = vmatmul.mubr.f32.gmra.mxu0 %v4974
    %v5272 = vpop.f32.mrf.mxu0
    %v5273 = vadd.f32 0.0, %v5272
    %v5274 = vpop.f32.mrf.mxu0
    %5275 = vmatprep.mubr.f32.mxu0 0.0
    %5276 = vmatmul.mubr.f32.gmra.mxu0 %v4977
    %v5277 = vpop.f32.mrf.mxu0
    %v5278 = vadd.f32 0.0, %v5277
    %v5279 = vpop.f32.mrf.mxu0
    %5280 = vmatprep.mubr.f32.mxu0 0.0
    %5281 = vmatmul.mubr.f32.gmra.mxu0 %v4980
    %v5282 = vpop.f32.mrf.mxu0
    %v5283 = vadd.f32 0.0, %v5282
    %v5284 = vpop.f32.mrf.mxu0
    %5285 = vmatprep.mubr.f32.mxu0 0.0
    %5286 = vmatmul.mubr.f32.gmra.mxu0 %v4983
    %v5287 = vpop.f32.mrf.mxu0
    %v5288 = vadd.f32 0.0, %v5287
    %v5289 = vpop.f32.mrf.mxu0
    %5290 = vmatprep.mubr.f32.mxu0 0.0
    %5291 = vmatmul.mubr.f32.gmra.mxu0 %v4986
    %v5292 = vpop.f32.mrf.mxu0
    %v5293 = vadd.f32 0.0, %v5292
    %v5294 = vpop.f32.mrf.mxu0
    %5295 = vmatprep.mubr.f32.mxu0 0.0
    %5296 = vmatmul.mubr.f32.gmra.mxu0 %v4989
    %v5297 = vpop.f32.mrf.mxu0
    %v5298 = vadd.f32 0.0, %v5297
    %v5299 = vpop.f32.mrf.mxu0
    %5300 = vmatprep.mubr.f32.mxu0 0.0
    %5301 = vmatmul.mubr.f32.gmra.mxu0 %v4992
    %v5302 = vpop.f32.mrf.mxu0
    %v5303 = vadd.f32 0.0, %v5302
    %v5304 = vpop.f32.mrf.mxu0
    %5305 = vmatprep.mubr.f32.mxu0 0.0
    %5306 = vmatmul.mubr.f32.gmra.mxu0 %v4995
    %v5307 = vpop.f32.mrf.mxu0
    %v5308 = vadd.f32 0.0, %v5307
    %v5309 = vpop.f32.mrf.mxu0
    %5310 = vmatprep.mubr.f32.mxu0 0.0
    %5311 = vmatmul.mubr.f32.gmra.mxu0 %v4998
    %v5312 = vpop.f32.mrf.mxu0
    %v5313 = vadd.f32 0.0, %v5312
    %v5314 = vpop.f32.mrf.mxu0
    %5315 = vmatprep.mubr.f32.mxu0 0.0
    %5316 = vmatmul.mubr.f32.gmra.mxu0 %v5001
    %v5317 = vpop.f32.mrf.mxu0
    %v5318 = vadd.f32 0.0, %v5317
    %v5319 = vpop.f32.mrf.mxu0
    %5320 = vmatprep.mubr.f32.mxu0 0.0
    %5321 = vmatmul.mubr.f32.gmra.mxu0 %v5004
    %v5322 = vpop.f32.mrf.mxu0
    %v5323 = vadd.f32 0.0, %v5322
    %v5324 = vpop.f32.mrf.mxu0
    %5325 = vmatprep.mubr.f32.mxu0 0.0
    %5326 = vmatmul.mubr.f32.gmra.mxu0 %v5007
    %v5327 = vpop.f32.mrf.mxu0
    %v5328 = vadd.f32 0.0, %v5327
    %v5329 = vpop.f32.mrf.mxu0
    %5330 = vmatprep.mubr.f32.mxu0 0.0
    %5331 = vmatmul.mubr.f32.gmra.mxu0 %v5010
    %v5332 = vpop.f32.mrf.mxu0
    %v5333 = vadd.f32 0.0, %v5332
    %v5334 = vpop.f32.mrf.mxu0
    %5335 = vmatprep.mubr.f32.mxu0 0.0
    %5336 = vmatmul.mubr.f32.gmra.mxu0 %v5013
    %v5337 = vpop.f32.mrf.mxu0
    %v5338 = vadd.f32 0.0, %v5337
    %v5339 = vpop.f32.mrf.mxu0
    %5340 = vmatprep.mubr.f32.mxu0 0.0
    %5341 = vmatmul.mubr.f32.gmra.mxu0 %v5016
    %v5342 = vpop.f32.mrf.mxu0
    %v5343 = vadd.f32 0.0, %v5342
    %v5344 = vpop.f32.mrf.mxu0
    %5345 = vmatprep.mubr.f32.mxu0 0.0
    %5346 = vmatmul.mubr.f32.gmra.mxu0 %v5019
    %v5347 = vpop.f32.mrf.mxu0
    %v5348 = vadd.f32 0.0, %v5347
    %v5349 = vpop.f32.mrf.mxu0
    %5350 = vmatprep.mubr.f32.mxu0 0.0
    %5351 = vmatmul.mubr.f32.gmra.mxu0 %v5022
    %v5352 = vpop.f32.mrf.mxu0
    %v5353 = vadd.f32 0.0, %v5352
    %v5354 = vpop.f32.mrf.mxu0
    %5355 = vmatprep.mubr.f32.mxu0 0.0
    %5356 = vmatmul.mubr.f32.gmra.mxu0 %v5025
    %v5357 = vpop.f32.mrf.mxu0
    %v5358 = vadd.f32 0.0, %v5357
    %v5359 = vpop.f32.mrf.mxu0
    %5360 = vmatprep.mubr.f32.mxu0 0.0
    %5361 = vmatmul.mubr.f32.gmra.mxu0 %v5028
    %v5362 = vpop.f32.mrf.mxu0
    %v5363 = vadd.f32 0.0, %v5362
    %v5364 = vpop.f32.mrf.mxu0
    %5365 = vmatprep.mubr.f32.mxu0 0.0
    %5366 = vmatmul.mubr.f32.gmra.mxu0 %v5031
    %v5367 = vpop.f32.mrf.mxu0
    %v5368 = vadd.f32 0.0, %v5367
    %v5369 = vpop.f32.mrf.mxu0
    %5370 = vmatprep.mubr.f32.mxu0 0.0
    %5371 = vmatmul.mubr.f32.gmra.mxu0 %v5034
    %v5372 = vpop.f32.mrf.mxu0
    %v5373 = vadd.f32 0.0, %v5372
    %v5374 = vpop.f32.mrf.mxu0
    %5375 = vmatprep.mubr.f32.mxu0 0.0
    %5376 = vmatmul.mubr.f32.gmra.mxu0 %v5037
    %v5377 = vpop.f32.mrf.mxu0
    %v5378 = vadd.f32 0.0, %v5377
    %v5379 = vpop.f32.mrf.mxu0
    %5380 = vmatprep.mubr.f32.mxu0 0.0
    %5381 = vmatmul.mubr.f32.gmra.mxu0 %v5040
    %v5382 = vpop.f32.mrf.mxu0
    %v5383 = vadd.f32 0.0, %v5382
    %v5384 = vpop.f32.mrf.mxu0
    %5385 = vmatprep.mubr.f32.mxu0 0.0
    %5386 = vmatmul.mubr.f32.gmra.mxu0 %v5043
    %v5387 = vpop.f32.mrf.mxu0
    %v5388 = vadd.f32 0.0, %v5387
    %v5389 = vpop.f32.mrf.mxu0
    %5390 = vmatprep.mubr.f32.mxu0 0.0
    %5391 = vmatmul.mubr.f32.gmra.mxu0 %v5046
    %v5392 = vpop.f32.mrf.mxu0
    %v5393 = vadd.f32 0.0, %v5392
    %v5394 = vpop.f32.mrf.mxu0
    %5395 = vmatprep.mubr.f32.mxu0 0.0
    %5396 = vmatmul.mubr.f32.gmra.mxu0 %v5049
    %v5397 = vpop.f32.mrf.mxu0
    %v5398 = vadd.f32 0.0, %v5397
    %v5399 = vpop.f32.mrf.mxu0
    %5400 = vmatprep.mubr.f32.mxu0 0.0
    %5401 = vmatmul.mubr.f32.gmra.mxu0 %v5052
    %v5402 = vpop.f32.mrf.mxu0
    %v5403 = vadd.f32 0.0, %v5402
    %v5404 = vpop.f32.mrf.mxu0
    %5405 = vmatprep.mubr.f32.mxu0 0.0
    %5406 = vmatmul.mubr.f32.gmra.mxu0 %v5055
    %v5407 = vpop.f32.mrf.mxu0
    %v5408 = vadd.f32 0.0, %v5407
    %v5409 = vpop.f32.mrf.mxu0
    %5410 = vmatprep.mubr.f32.mxu0 0.0
    %5411 = vmatmul.mubr.f32.gmra.mxu0 %v5058
    %v5412 = vpop.f32.mrf.mxu0
    %v5413 = vadd.f32 0.0, %v5412
    %v5414 = vpop.f32.mrf.mxu0
    %5415 = vmatprep.mubr.f32.mxu0 0.0
    %5416 = vmatmul.mubr.f32.gmra.mxu0 %v5061
    %v5417 = vpop.f32.mrf.mxu0
    %v5418 = vadd.f32 0.0, %v5417
    %v5419 = vpop.f32.mrf.mxu0
    %5420 = vmatprep.mubr.f32.mxu0 0.0
    %5421 = vmatmul.mubr.f32.gmra.mxu0 %v5064
    %v5422 = vpop.f32.mrf.mxu0
    %v5423 = vadd.f32 0.0, %v5422
    %v5424 = vpop.f32.mrf.mxu0
    %5425 = vmatprep.mubr.f32.mxu0 0.0
    %5426 = vmatmul.mubr.f32.gmra.mxu0 %v5067
    %v5427 = vpop.f32.mrf.mxu0
    %v5428 = vadd.f32 0.0, %v5427
    %v5429 = vpop.f32.mrf.mxu0
    %5430 = vmatprep.mubr.f32.mxu0 0.0
    %5431 = vmatmul.mubr.f32.gmra.mxu0 %v5070
    %v5432 = vpop.f32.mrf.mxu0
    %v5433 = vadd.f32 0.0, %v5432
    %v5434 = vpop.f32.mrf.mxu0
    %5435 = vmatprep.mubr.f32.mxu0 0.0
    %5436 = vmatmul.mubr.f32.gmra.mxu0 %v5073
    %v5437 = vpop.f32.mrf.mxu0
    %v5438 = vadd.f32 0.0, %v5437
    %v5439 = vpop.f32.mrf.mxu0
    %5440 = vmatprep.mubr.f32.mxu0 0.0
    %5441 = vmatmul.mubr.f32.gmra.mxu0 %v5076
    %v5442 = vpop.f32.mrf.mxu0
    %v5443 = vadd.f32 0.0, %v5442
    %v5444 = vpop.f32.mrf.mxu0
    %5445 = vmatprep.mubr.f32.mxu0 0.0
    %5446 = vmatmul.mubr.f32.gmra.mxu0 %v5079
    %v5447 = vpop.f32.mrf.mxu0
    %v5448 = vadd.f32 0.0, %v5447
    %v5449 = vpop.f32.mrf.mxu0
    %5450 = vmatprep.mubr.f32.mxu0 0.0
    %5451 = vmatmul.mubr.f32.gmra.mxu0 %v5082
    %v5452 = vpop.f32.mrf.mxu0
    %v5453 = vadd.f32 0.0, %v5452
    %v5454 = vpop.f32.mrf.mxu0
    %5455 = vmatprep.mubr.f32.mxu0 0.0
    %5456 = vmatmul.mubr.f32.gmra.mxu0 %v5085
    %v5457 = vpop.f32.mrf.mxu0
    %v5458 = vadd.f32 0.0, %v5457
    %v5459 = vpop.f32.mrf.mxu0
    %5460 = vmatprep.mubr.f32.mxu0 0.0
    %5461 = vmatmul.mubr.f32.gmra.mxu0 %v5088
    %v5462 = vpop.f32.mrf.mxu0
    %v5463 = vadd.f32 0.0, %v5462
    %v5464 = vpop.f32.mrf.mxu0
    %5465 = vmatprep.mubr.f32.mxu0 0.0
    %5466 = vmatmul.mubr.f32.gmra.mxu0 %v5091
    %v5467 = vpop.f32.mrf.mxu0
    %v5468 = vadd.f32 0.0, %v5467
    %v5469 = vpop.f32.mrf.mxu0
    %5470 = vmatprep.mubr.f32.mxu0 0.0
    %5471 = vmatmul.mubr.f32.gmra.mxu0 %v5094
    %v5472 = vpop.f32.mrf.mxu0
    %v5473 = vadd.f32 0.0, %v5472
    %v5474 = vpop.f32.mrf.mxu0
    %5475 = vmatprep.mubr.f32.mxu0 0.0
    %5476 = vmatmul.mubr.f32.gmra.mxu0 %v5097
    %v5477 = vpop.f32.mrf.mxu0
    %v5478 = vadd.f32 0.0, %v5477
    %v5479 = vpop.f32.mrf.mxu0
    %5480 = vmatprep.mubr.f32.mxu0 0.0
    %5481 = vmatmul.mubr.f32.gmra.mxu0 %v5100
    %v5482 = vpop.f32.mrf.mxu0
    %v5483 = vadd.f32 0.0, %v5482
    %v5484 = vpop.f32.mrf.mxu0
    %5485 = vmatprep.mubr.f32.mxu0 0.0
    %5486 = vmatmul.mubr.f32.gmra.mxu0 %v5103
    %v5487 = vpop.f32.mrf.mxu0
    %v5488 = vadd.f32 0.0, %v5487
    %v5489 = vpop.f32.mrf.mxu0
    %5490 = vmatprep.mubr.f32.mxu0 0.0
    %5491 = vmatmul.mubr.f32.gmra.mxu0 %v5106
    %v5492 = vpop.f32.mrf.mxu0
    %v5493 = vadd.f32 0.0, %v5492
    %v5494 = vpop.f32.mrf.mxu0
    %5495 = vdwg.mxu0
    %v5496 = vadd.f32 %v4787, %v5178
    %v5497 = vadd.f32 %v4788, %v5183
    %v5498 = vadd.f32 %v4789, %v5188
    %v5499 = vadd.f32 %v4790, %v5193
    %v5500 = vadd.f32 %v4791, %v5198
    %v5501 = vadd.f32 %v4792, %v5203
    %v5502 = vadd.f32 %v4793, %v5208
    %v5503 = vadd.f32 %v4794, %v5213
    %v5504 = vadd.f32 %v4795, %v5218
    %v5505 = vadd.f32 %v4796, %v5223
    %v5506 = vadd.f32 %v4797, %v5228
    %v5507 = vadd.f32 %v4798, %v5233
    %v5508 = vadd.f32 %v4799, %v5238
    %v5509 = vadd.f32 %v4800, %v5243
    %v5510 = vadd.f32 %v4801, %v5248
    %v5511 = vadd.f32 %v4802, %v5253
    %v5512 = vadd.f32 %v4803, %v5258
    %v5513 = vadd.f32 %v4804, %v5263
    %v5514 = vadd.f32 %v4805, %v5268
    %v5515 = vadd.f32 %v4806, %v5273
    %v5516 = vadd.f32 %v4807, %v5278
    %v5517 = vadd.f32 %v4808, %v5283
    %v5518 = vadd.f32 %v4809, %v5288
    %v5519 = vadd.f32 %v4810, %v5293
    %v5520 = vadd.f32 %v4811, %v5298
    %v5521 = vadd.f32 %v4812, %v5303
    %v5522 = vadd.f32 %v4813, %v5308
    %v5523 = vadd.f32 %v4814, %v5313
    %v5524 = vadd.f32 %v4815, %v5318
    %v5525 = vadd.f32 %v4816, %v5323
    %v5526 = vadd.f32 %v4817, %v5328
    %v5527 = vadd.f32 %v4818, %v5333
    %v5528 = vadd.f32 %v4819, %v5338
    %v5529 = vadd.f32 %v4820, %v5343
    %v5530 = vadd.f32 %v4821, %v5348
    %v5531 = vadd.f32 %v4822, %v5353
    %v5532 = vadd.f32 %v4823, %v5358
    %v5533 = vadd.f32 %v4824, %v5363
    %v5534 = vadd.f32 %v4825, %v5368
    %v5535 = vadd.f32 %v4826, %v5373
    %v5536 = vadd.f32 %v4827, %v5378
    %v5537 = vadd.f32 %v4828, %v5383
    %v5538 = vadd.f32 %v4829, %v5388
    %v5539 = vadd.f32 %v4830, %v5393
    %v5540 = vadd.f32 %v4831, %v5398
    %v5541 = vadd.f32 %v4832, %v5403
    %v5542 = vadd.f32 %v4833, %v5408
    %v5543 = vadd.f32 %v4834, %v5413
    %v5544 = vadd.f32 %v4835, %v5418
    %v5545 = vadd.f32 %v4836, %v5423
    %v5546 = vadd.f32 %v4837, %v5428
    %v5547 = vadd.f32 %v4838, %v5433
    %v5548 = vadd.f32 %v4839, %v5438
    %v5549 = vadd.f32 %v4840, %v5443
    %v5550 = vadd.f32 %v4841, %v5448
    %v5551 = vadd.f32 %v4842, %v5453
    %v5552 = vadd.f32 %v4843, %v5458
    %v5553 = vadd.f32 %v4844, %v5463
    %v5554 = vadd.f32 %v4845, %v5468
    %v5555 = vadd.f32 %v4846, %v5473
    %v5556 = vadd.f32 %v4847, %v5478
    %v5557 = vadd.f32 %v4848, %v5483
    %v5558 = vadd.f32 %v4849, %v5488
    %v5559 = vadd.f32 %v4850, %v5493
    %v5560 = vld [vmem:[%s4141 + $0x2] sm:$0xff]
    %v5561 = vld [vmem:[%s4141 + $0xa] sm:$0xff]
    %v5562 = vld [vmem:[%s4141 + $0x1a] sm:$0xff]
    %v5563 = vld [vmem:[%s4141 + $0x22] sm:$0xff]
    %v5564 = vld [vmem:[%s4141 + $0x32] sm:$0xff]
    %v5565 = vld [vmem:[%s4141 + $0x3a] sm:$0xff]
    %v5566 = vld [vmem:[%s4141 + $0x4a] sm:$0xff]
    %v5567 = vld [vmem:[%s4141 + $0x52] sm:$0xff]
    %v5568 = vld [vmem:[%s4141 + $0x62] sm:$0xff]
    %v5569 = vld [vmem:[%s4141 + $0x6a] sm:$0xff]
    %v5570 = vld [vmem:[%s4141 + $0x7a] sm:$0xff]
    %v5571 = vld [vmem:[%s4141 + $0x82] sm:$0xff]
    %v5572 = vld [vmem:[%s4141 + $0x92] sm:$0xff]
    %v5573 = vld [vmem:[%s4141 + $0x9a] sm:$0xff]
    %v5574 = vld [vmem:[%s4141 + $0xaa] sm:$0xff]
    %v5575 = vld [vmem:[%s4141 + $0xb2] sm:$0xff]
    %v5576 = vld [vmem:[%s4141 + $0xc2] sm:$0xff]
    %v5577 = vld [vmem:[%s4141 + $0xca] sm:$0xff]
    %v5578 = vld [vmem:[%s4141 + $0xda] sm:$0xff]
    %v5579 = vld [vmem:[%s4141 + $0xe2] sm:$0xff]
    %v5580 = vld [vmem:[%s4141 + $0xf2] sm:$0xff]
    %v5581 = vld [vmem:[%s4141 + $0xfa] sm:$0xff]
    %v5582 = vld [vmem:[%s4141 + $0x10a] sm:$0xff]
    %v5583 = vld [vmem:[%s4141 + $0x112] sm:$0xff]
    %v5584 = vld [vmem:[%s4141 + $0x122] sm:$0xff]
    %v5585 = vld [vmem:[%s4141 + $0x12a] sm:$0xff]
    %v5586 = vld [vmem:[%s4141 + $0x13a] sm:$0xff]
    %v5587 = vld [vmem:[%s4141 + $0x142] sm:$0xff]
    %v5588 = vld [vmem:[%s4141 + $0x152] sm:$0xff]
    %v5589 = vld [vmem:[%s4141 + $0x15a] sm:$0xff]
    %v5590 = vld [vmem:[%s4141 + $0x16a] sm:$0xff]
    %v5591 = vld [vmem:[%s4141 + $0x172] sm:$0xff]
    %v5592 = vld [vmem:[%s4141 + $0x1b2] sm:$0xff]
    %v5593 = vld [vmem:[%s4141 + $0x1ba] sm:$0xff]
    %v5594 = vld [vmem:[%s4141 + $0x1ca] sm:$0xff]
    %v5595 = vld [vmem:[%s4141 + $0x1d2] sm:$0xff]
    %v5596 = vld [vmem:[%s4141 + $0x1e2] sm:$0xff]
    %v5597 = vld [vmem:[%s4141 + $0x1ea] sm:$0xff]
    %v5598 = vld [vmem:[%s4141 + $0x1fa] sm:$0xff]
    %v5599 = vld [vmem:[%s4141 + $0x202] sm:$0xff]
    %v5600 = vld [vmem:[%s4141 + $0x212] sm:$0xff]
    %v5601 = vld [vmem:[%s4141 + $0x21a] sm:$0xff]
    %v5602 = vld [vmem:[%s4141 + $0x22a] sm:$0xff]
    %v5603 = vld [vmem:[%s4141 + $0x232] sm:$0xff]
    %v5604 = vld [vmem:[%s4141 + $0x242] sm:$0xff]
    %v5605 = vld [vmem:[%s4141 + $0x24a] sm:$0xff]
    %v5606 = vld [vmem:[%s4141 + $0x25a] sm:$0xff]
    %v5607 = vld [vmem:[%s4141 + $0x262] sm:$0xff]
    %v5608 = vld [vmem:[%s4141 + $0x272] sm:$0xff]
    %v5609 = vld [vmem:[%s4141 + $0x27a] sm:$0xff]
    %v5610 = vld [vmem:[%s4141 + $0x28a] sm:$0xff]
    %v5611 = vld [vmem:[%s4141 + $0x292] sm:$0xff]
    %v5612 = vld [vmem:[%s4141 + $0x2a2] sm:$0xff]
    %v5613 = vld [vmem:[%s4141 + $0x2aa] sm:$0xff]
    %v5614 = vld [vmem:[%s4141 + $0x2ba] sm:$0xff]
    %v5615 = vld [vmem:[%s4141 + $0x2c2] sm:$0xff]
    %v5616 = vld [vmem:[%s4141 + $0x2d2] sm:$0xff]
    %v5617 = vld [vmem:[%s4141 + $0x2da] sm:$0xff]
    %v5618 = vld [vmem:[%s4141 + $0x2ea] sm:$0xff]
    %v5619 = vld [vmem:[%s4141 + $0x2f2] sm:$0xff]
    %v5620 = vld [vmem:[%s4141 + $0x302] sm:$0xff]
    %v5621 = vld [vmem:[%s4141 + $0x30a] sm:$0xff]
    %v5622 = vld [vmem:[%s4141 + $0x31a] sm:$0xff]
    %v5623 = vld [vmem:[%s4141 + $0x322] sm:$0xff]
    %v5624 = vld [vmem:[%s1 + $0x40] sm:$0x7]
    %v5626 = vsel %vm142, %v5560, 0
    %v5629 = vsel %vm142, %v5561, 0
    %v5632 = vsel %vm142, %v5562, 0
    %v5635 = vsel %vm142, %v5563, 0
    %v5638 = vsel %vm142, %v5564, 0
    %v5641 = vsel %vm142, %v5565, 0
    %v5644 = vsel %vm142, %v5566, 0
    %v5647 = vsel %vm142, %v5567, 0
    %v5650 = vsel %vm142, %v5568, 0
    %v5653 = vsel %vm142, %v5569, 0
    %v5656 = vsel %vm142, %v5570, 0
    %v5659 = vsel %vm142, %v5571, 0
    %v5662 = vsel %vm142, %v5572, 0
    %v5665 = vsel %vm142, %v5573, 0
    %v5668 = vsel %vm142, %v5574, 0
    %v5671 = vsel %vm142, %v5575, 0
    %v5674 = vsel %vm142, %v5576, 0
    %v5677 = vsel %vm142, %v5577, 0
    %v5680 = vsel %vm142, %v5578, 0
    %v5683 = vsel %vm142, %v5579, 0
    %v5686 = vsel %vm142, %v5580, 0
    %v5689 = vsel %vm142, %v5581, 0
    %v5692 = vsel %vm142, %v5582, 0
    %v5695 = vsel %vm142, %v5583, 0
    %v5698 = vsel %vm142, %v5584, 0
    %v5701 = vsel %vm142, %v5585, 0
    %v5704 = vsel %vm142, %v5586, 0
    %v5707 = vsel %vm142, %v5587, 0
    %v5710 = vsel %vm142, %v5588, 0
    %v5713 = vsel %vm142, %v5589, 0
    %v5716 = vsel %vm142, %v5590, 0
    %v5719 = vsel %vm142, %v5591, 0
    %v5722 = vsel %vm142, %v5592, 0
    %v5725 = vsel %vm142, %v5593, 0
    %v5728 = vsel %vm142, %v5594, 0
    %v5731 = vsel %vm142, %v5595, 0
    %v5734 = vsel %vm142, %v5596, 0
    %v5737 = vsel %vm142, %v5597, 0
    %v5740 = vsel %vm142, %v5598, 0
    %v5743 = vsel %vm142, %v5599, 0
    %v5746 = vsel %vm142, %v5600, 0
    %v5749 = vsel %vm142, %v5601, 0
    %v5752 = vsel %vm142, %v5602, 0
    %v5755 = vsel %vm142, %v5603, 0
    %v5758 = vsel %vm142, %v5604, 0
    %v5761 = vsel %vm142, %v5605, 0
    %v5764 = vsel %vm142, %v5606, 0
    %v5767 = vsel %vm142, %v5607, 0
    %v5770 = vsel %vm142, %v5608, 0
    %v5773 = vsel %vm142, %v5609, 0
    %v5776 = vsel %vm142, %v5610, 0
    %v5779 = vsel %vm142, %v5611, 0
    %v5782 = vsel %vm142, %v5612, 0
    %v5785 = vsel %vm142, %v5613, 0
    %v5788 = vsel %vm142, %v5614, 0
    %v5791 = vsel %vm142, %v5615, 0
    %v5794 = vsel %vm142, %v5616, 0
    %v5797 = vsel %vm142, %v5617, 0
    %v5800 = vsel %vm142, %v5618, 0
    %v5803 = vsel %vm142, %v5619, 0
    %v5806 = vsel %vm142, %v5620, 0
    %v5809 = vsel %vm142, %v5621, 0
    %v5812 = vsel %vm142, %v5622, 0
    %v5815 = vsel %vm142, %v5623, 0
    %v5818 = vsel %vm335, %v5624, 0
    %5820 = vmatprep.subr.mxu0 0.0
    %5821 = vmatpush1.msra.mxu0 0.0
    %5822 = vmatprep.subr.mxu0 0.0
    %5823 = vmatpush1.msra.mxu0 0.0
    %5824 = vmatprep.subr.mxu0 0.0
    %5825 = vmatpush1.msra.mxu0 0.0
    %5826 = vmatprep.subr.mxu0 0.0
    %5827 = vmatpush1.msra.mxu0 0.0
    %5828 = vmatprep.subr.mxu0 0.0
    %5829 = vmatpush1.msra.mxu0 0.0
    %5830 = vmatprep.subr.mxu0 0.0
    %5831 = vmatpush1.msra.mxu0 0.0
    %5832 = vmatprep.subr.mxu0 0.0
    %5833 = vmatpush1.msra.mxu0 0.0
    %5834 = vmatprep.subr.mxu0 0.0
    %5835 = vmatpush1.msra.mxu0 0.0
    %5836 = vmatprep.subr.mxu0 0.0
    %5837 = vmatpush1.msra.mxu0 0.0
    %5838 = vmatprep.subr.mxu0 0.0
    %5839 = vmatpush1.msra.mxu0 0.0
    %5840 = vmatprep.subr.mxu0 0.0
    %5841 = vmatpush1.msra.mxu0 0.0
    %5842 = vmatprep.subr.mxu0 0.0
    %5843 = vmatpush1.msra.mxu0 0.0
    %5844 = vmatprep.subr.mxu0 0.0
    %5845 = vmatpush1.msra.mxu0 0.0
    %5846 = vmatprep.subr.mxu0 0.0
    %5847 = vmatpush1.msra.mxu0 0.0
    %5848 = vmatprep.subr.mxu0 0.0
    %5849 = vmatpush1.msra.mxu0 0.0
    %5850 = vmatprep.subr.mxu0 0.0
    %5851 = vmatpush1.msra.mxu0 %v5818
    %5852 = vmatprep.subr.mxu0 0.0
    %5853 = vmatpush2.msra.mxu0 0.0
    %5854 = vmatprep.subr.mxu0 0.0
    %5855 = vmatpush2.msra.mxu0 0.0
    %5856 = vmatprep.subr.mxu0 0.0
    %5857 = vmatpush2.msra.mxu0 0.0
    %5858 = vmatprep.subr.mxu0 0.0
    %5859 = vmatpush2.msra.mxu0 0.0
    %5860 = vmatprep.subr.mxu0 0.0
    %5861 = vmatpush2.msra.mxu0 0.0
    %5862 = vmatprep.subr.mxu0 0.0
    %5863 = vmatpush2.msra.mxu0 0.0
    %5864 = vmatprep.subr.mxu0 0.0
    %5865 = vmatpush2.msra.mxu0 0.0
    %5866 = vmatprep.subr.mxu0 0.0
    %5867 = vmatpush2.msra.mxu0 0.0
    %5868 = vmatprep.subr.mxu0 0.0
    %5869 = vmatpush2.msra.mxu0 0.0
    %5870 = vmatprep.subr.mxu0 0.0
    %5871 = vmatpush2.msra.mxu0 0.0
    %5872 = vmatprep.subr.mxu0 0.0
    %5873 = vmatpush2.msra.mxu0 0.0
    %5874 = vmatprep.subr.mxu0 0.0
    %5875 = vmatpush2.msra.mxu0 0.0
    %5876 = vmatprep.subr.mxu0 0.0
    %5877 = vmatpush2.msra.mxu0 0.0
    %5878 = vmatprep.subr.mxu0 0.0
    %5879 = vmatpush2.msra.mxu0 0.0
    %5880 = vmatprep.subr.mxu0 0.0
    %5881 = vmatpush2.msra.mxu0 0.0
    %5882 = vmatprep.subr.mxu0 0.0
    %5883 = vmatpush2.msra.mxu0 0.0
    %5884 = vmatprep.mubr.f32.mxu0 0.0
    %5885 = vmatmul.mubr.f32.gmra.mxu0 %v5626
    %v5886 = vpop.f32.mrf.mxu0
    %v5887 = vadd.f32 0.0, %v5886
    %v5888 = vpop.f32.mrf.mxu0
    %5889 = vmatprep.mubr.f32.mxu0 0.0
    %5890 = vmatmul.mubr.f32.gmra.mxu0 %v5629
    %v5891 = vpop.f32.mrf.mxu0
    %v5892 = vadd.f32 0.0, %v5891
    %v5893 = vpop.f32.mrf.mxu0
    %5894 = vmatprep.mubr.f32.mxu0 0.0
    %5895 = vmatmul.mubr.f32.gmra.mxu0 %v5632
    %v5896 = vpop.f32.mrf.mxu0
    %v5897 = vadd.f32 0.0, %v5896
    %v5898 = vpop.f32.mrf.mxu0
    %5899 = vmatprep.mubr.f32.mxu0 0.0
    %5900 = vmatmul.mubr.f32.gmra.mxu0 %v5635
    %v5901 = vpop.f32.mrf.mxu0
    %v5902 = vadd.f32 0.0, %v5901
    %v5903 = vpop.f32.mrf.mxu0
    %5904 = vmatprep.mubr.f32.mxu0 0.0
    %5905 = vmatmul.mubr.f32.gmra.mxu0 %v5638
    %v5906 = vpop.f32.mrf.mxu0
    %v5907 = vadd.f32 0.0, %v5906
    %v5908 = vpop.f32.mrf.mxu0
    %5909 = vmatprep.mubr.f32.mxu0 0.0
    %5910 = vmatmul.mubr.f32.gmra.mxu0 %v5641
    %v5911 = vpop.f32.mrf.mxu0
    %v5912 = vadd.f32 0.0, %v5911
    %v5913 = vpop.f32.mrf.mxu0
    %5914 = vmatprep.mubr.f32.mxu0 0.0
    %5915 = vmatmul.mubr.f32.gmra.mxu0 %v5644
    %v5916 = vpop.f32.mrf.mxu0
    %v5917 = vadd.f32 0.0, %v5916
    %v5918 = vpop.f32.mrf.mxu0
    %5919 = vmatprep.mubr.f32.mxu0 0.0
    %5920 = vmatmul.mubr.f32.gmra.mxu0 %v5647
    %v5921 = vpop.f32.mrf.mxu0
    %v5922 = vadd.f32 0.0, %v5921
    %v5923 = vpop.f32.mrf.mxu0
    %5924 = vmatprep.mubr.f32.mxu0 0.0
    %5925 = vmatmul.mubr.f32.gmra.mxu0 %v5650
    %v5926 = vpop.f32.mrf.mxu0
    %v5927 = vadd.f32 0.0, %v5926
    %v5928 = vpop.f32.mrf.mxu0
    %5929 = vmatprep.mubr.f32.mxu0 0.0
    %5930 = vmatmul.mubr.f32.gmra.mxu0 %v5653
    %v5931 = vpop.f32.mrf.mxu0
    %v5932 = vadd.f32 0.0, %v5931
    %v5933 = vpop.f32.mrf.mxu0
    %5934 = vmatprep.mubr.f32.mxu0 0.0
    %5935 = vmatmul.mubr.f32.gmra.mxu0 %v5656
    %v5936 = vpop.f32.mrf.mxu0
    %v5937 = vadd.f32 0.0, %v5936
    %v5938 = vpop.f32.mrf.mxu0
    %5939 = vmatprep.mubr.f32.mxu0 0.0
    %5940 = vmatmul.mubr.f32.gmra.mxu0 %v5659
    %v5941 = vpop.f32.mrf.mxu0
    %v5942 = vadd.f32 0.0, %v5941
    %v5943 = vpop.f32.mrf.mxu0
    %5944 = vmatprep.mubr.f32.mxu0 0.0
    %5945 = vmatmul.mubr.f32.gmra.mxu0 %v5662
    %v5946 = vpop.f32.mrf.mxu0
    %v5947 = vadd.f32 0.0, %v5946
    %v5948 = vpop.f32.mrf.mxu0
    %5949 = vmatprep.mubr.f32.mxu0 0.0
    %5950 = vmatmul.mubr.f32.gmra.mxu0 %v5665
    %v5951 = vpop.f32.mrf.mxu0
    %v5952 = vadd.f32 0.0, %v5951
    %v5953 = vpop.f32.mrf.mxu0
    %5954 = vmatprep.mubr.f32.mxu0 0.0
    %5955 = vmatmul.mubr.f32.gmra.mxu0 %v5668
    %v5956 = vpop.f32.mrf.mxu0
    %v5957 = vadd.f32 0.0, %v5956
    %v5958 = vpop.f32.mrf.mxu0
    %5959 = vmatprep.mubr.f32.mxu0 0.0
    %5960 = vmatmul.mubr.f32.gmra.mxu0 %v5671
    %v5961 = vpop.f32.mrf.mxu0
    %v5962 = vadd.f32 0.0, %v5961
    %v5963 = vpop.f32.mrf.mxu0
    %5964 = vmatprep.mubr.f32.mxu0 0.0
    %5965 = vmatmul.mubr.f32.gmra.mxu0 %v5674
    %v5966 = vpop.f32.mrf.mxu0
    %v5967 = vadd.f32 0.0, %v5966
    %v5968 = vpop.f32.mrf.mxu0
    %5969 = vmatprep.mubr.f32.mxu0 0.0
    %5970 = vmatmul.mubr.f32.gmra.mxu0 %v5677
    %v5971 = vpop.f32.mrf.mxu0
    %v5972 = vadd.f32 0.0, %v5971
    %v5973 = vpop.f32.mrf.mxu0
    %5974 = vmatprep.mubr.f32.mxu0 0.0
    %5975 = vmatmul.mubr.f32.gmra.mxu0 %v5680
    %v5976 = vpop.f32.mrf.mxu0
    %v5977 = vadd.f32 0.0, %v5976
    %v5978 = vpop.f32.mrf.mxu0
    %5979 = vmatprep.mubr.f32.mxu0 0.0
    %5980 = vmatmul.mubr.f32.gmra.mxu0 %v5683
    %v5981 = vpop.f32.mrf.mxu0
    %v5982 = vadd.f32 0.0, %v5981
    %v5983 = vpop.f32.mrf.mxu0
    %5984 = vmatprep.mubr.f32.mxu0 0.0
    %5985 = vmatmul.mubr.f32.gmra.mxu0 %v5686
    %v5986 = vpop.f32.mrf.mxu0
    %v5987 = vadd.f32 0.0, %v5986
    %v5988 = vpop.f32.mrf.mxu0
    %5989 = vmatprep.mubr.f32.mxu0 0.0
    %5990 = vmatmul.mubr.f32.gmra.mxu0 %v5689
    %v5991 = vpop.f32.mrf.mxu0
    %v5992 = vadd.f32 0.0, %v5991
    %v5993 = vpop.f32.mrf.mxu0
    %5994 = vmatprep.mubr.f32.mxu0 0.0
    %5995 = vmatmul.mubr.f32.gmra.mxu0 %v5692
    %v5996 = vpop.f32.mrf.mxu0
    %v5997 = vadd.f32 0.0, %v5996
    %v5998 = vpop.f32.mrf.mxu0
    %5999 = vmatprep.mubr.f32.mxu0 0.0
    %6000 = vmatmul.mubr.f32.gmra.mxu0 %v5695
    %v6001 = vpop.f32.mrf.mxu0
    %v6002 = vadd.f32 0.0, %v6001
    %v6003 = vpop.f32.mrf.mxu0
    %6004 = vmatprep.mubr.f32.mxu0 0.0
    %6005 = vmatmul.mubr.f32.gmra.mxu0 %v5698
    %v6006 = vpop.f32.mrf.mxu0
    %v6007 = vadd.f32 0.0, %v6006
    %v6008 = vpop.f32.mrf.mxu0
    %6009 = vmatprep.mubr.f32.mxu0 0.0
    %6010 = vmatmul.mubr.f32.gmra.mxu0 %v5701
    %v6011 = vpop.f32.mrf.mxu0
    %v6012 = vadd.f32 0.0, %v6011
    %v6013 = vpop.f32.mrf.mxu0
    %6014 = vmatprep.mubr.f32.mxu0 0.0
    %6015 = vmatmul.mubr.f32.gmra.mxu0 %v5704
    %v6016 = vpop.f32.mrf.mxu0
    %v6017 = vadd.f32 0.0, %v6016
    %v6018 = vpop.f32.mrf.mxu0
    %6019 = vmatprep.mubr.f32.mxu0 0.0
    %6020 = vmatmul.mubr.f32.gmra.mxu0 %v5707
    %v6021 = vpop.f32.mrf.mxu0
    %v6022 = vadd.f32 0.0, %v6021
    %v6023 = vpop.f32.mrf.mxu0
    %6024 = vmatprep.mubr.f32.mxu0 0.0
    %6025 = vmatmul.mubr.f32.gmra.mxu0 %v5710
    %v6026 = vpop.f32.mrf.mxu0
    %v6027 = vadd.f32 0.0, %v6026
    %v6028 = vpop.f32.mrf.mxu0
    %6029 = vmatprep.mubr.f32.mxu0 0.0
    %6030 = vmatmul.mubr.f32.gmra.mxu0 %v5713
    %v6031 = vpop.f32.mrf.mxu0
    %v6032 = vadd.f32 0.0, %v6031
    %v6033 = vpop.f32.mrf.mxu0
    %6034 = vmatprep.mubr.f32.mxu0 0.0
    %6035 = vmatmul.mubr.f32.gmra.mxu0 %v5716
    %v6036 = vpop.f32.mrf.mxu0
    %v6037 = vadd.f32 0.0, %v6036
    %v6038 = vpop.f32.mrf.mxu0
    %6039 = vmatprep.mubr.f32.mxu0 0.0
    %6040 = vmatmul.mubr.f32.gmra.mxu0 %v5719
    %v6041 = vpop.f32.mrf.mxu0
    %v6042 = vadd.f32 0.0, %v6041
    %v6043 = vpop.f32.mrf.mxu0
    %6044 = vmatprep.mubr.f32.mxu0 0.0
    %6045 = vmatmul.mubr.f32.gmra.mxu0 %v5722
    %v6046 = vpop.f32.mrf.mxu0
    %v6047 = vadd.f32 0.0, %v6046
    %v6048 = vpop.f32.mrf.mxu0
    %6049 = vmatprep.mubr.f32.mxu0 0.0
    %6050 = vmatmul.mubr.f32.gmra.mxu0 %v5725
    %v6051 = vpop.f32.mrf.mxu0
    %v6052 = vadd.f32 0.0, %v6051
    %v6053 = vpop.f32.mrf.mxu0
    %6054 = vmatprep.mubr.f32.mxu0 0.0
    %6055 = vmatmul.mubr.f32.gmra.mxu0 %v5728
    %v6056 = vpop.f32.mrf.mxu0
    %v6057 = vadd.f32 0.0, %v6056
    %v6058 = vpop.f32.mrf.mxu0
    %6059 = vmatprep.mubr.f32.mxu0 0.0
    %6060 = vmatmul.mubr.f32.gmra.mxu0 %v5731
    %v6061 = vpop.f32.mrf.mxu0
    %v6062 = vadd.f32 0.0, %v6061
    %v6063 = vpop.f32.mrf.mxu0
    %6064 = vmatprep.mubr.f32.mxu0 0.0
    %6065 = vmatmul.mubr.f32.gmra.mxu0 %v5734
    %v6066 = vpop.f32.mrf.mxu0
    %v6067 = vadd.f32 0.0, %v6066
    %v6068 = vpop.f32.mrf.mxu0
    %6069 = vmatprep.mubr.f32.mxu0 0.0
    %6070 = vmatmul.mubr.f32.gmra.mxu0 %v5737
    %v6071 = vpop.f32.mrf.mxu0
    %v6072 = vadd.f32 0.0, %v6071
    %v6073 = vpop.f32.mrf.mxu0
    %6074 = vmatprep.mubr.f32.mxu0 0.0
    %6075 = vmatmul.mubr.f32.gmra.mxu0 %v5740
    %v6076 = vpop.f32.mrf.mxu0
    %v6077 = vadd.f32 0.0, %v6076
    %v6078 = vpop.f32.mrf.mxu0
    %6079 = vmatprep.mubr.f32.mxu0 0.0
    %6080 = vmatmul.mubr.f32.gmra.mxu0 %v5743
    %v6081 = vpop.f32.mrf.mxu0
    %v6082 = vadd.f32 0.0, %v6081
    %v6083 = vpop.f32.mrf.mxu0
    %6084 = vmatprep.mubr.f32.mxu0 0.0
    %6085 = vmatmul.mubr.f32.gmra.mxu0 %v5746
    %v6086 = vpop.f32.mrf.mxu0
    %v6087 = vadd.f32 0.0, %v6086
    %v6088 = vpop.f32.mrf.mxu0
    %6089 = vmatprep.mubr.f32.mxu0 0.0
    %6090 = vmatmul.mubr.f32.gmra.mxu0 %v5749
    %v6091 = vpop.f32.mrf.mxu0
    %v6092 = vadd.f32 0.0, %v6091
    %v6093 = vpop.f32.mrf.mxu0
    %6094 = vmatprep.mubr.f32.mxu0 0.0
    %6095 = vmatmul.mubr.f32.gmra.mxu0 %v5752
    %v6096 = vpop.f32.mrf.mxu0
    %v6097 = vadd.f32 0.0, %v6096
    %v6098 = vpop.f32.mrf.mxu0
    %6099 = vmatprep.mubr.f32.mxu0 0.0
    %6100 = vmatmul.mubr.f32.gmra.mxu0 %v5755
    %v6101 = vpop.f32.mrf.mxu0
    %v6102 = vadd.f32 0.0, %v6101
    %v6103 = vpop.f32.mrf.mxu0
    %6104 = vmatprep.mubr.f32.mxu0 0.0
    %6105 = vmatmul.mubr.f32.gmra.mxu0 %v5758
    %v6106 = vpop.f32.mrf.mxu0
    %v6107 = vadd.f32 0.0, %v6106
    %v6108 = vpop.f32.mrf.mxu0
    %6109 = vmatprep.mubr.f32.mxu0 0.0
    %6110 = vmatmul.mubr.f32.gmra.mxu0 %v5761
    %v6111 = vpop.f32.mrf.mxu0
    %v6112 = vadd.f32 0.0, %v6111
    %v6113 = vpop.f32.mrf.mxu0
    %6114 = vmatprep.mubr.f32.mxu0 0.0
    %6115 = vmatmul.mubr.f32.gmra.mxu0 %v5764
    %v6116 = vpop.f32.mrf.mxu0
    %v6117 = vadd.f32 0.0, %v6116
    %v6118 = vpop.f32.mrf.mxu0
    %6119 = vmatprep.mubr.f32.mxu0 0.0
    %6120 = vmatmul.mubr.f32.gmra.mxu0 %v5767
    %v6121 = vpop.f32.mrf.mxu0
    %v6122 = vadd.f32 0.0, %v6121
    %v6123 = vpop.f32.mrf.mxu0
    %6124 = vmatprep.mubr.f32.mxu0 0.0
    %6125 = vmatmul.mubr.f32.gmra.mxu0 %v5770
    %v6126 = vpop.f32.mrf.mxu0
    %v6127 = vadd.f32 0.0, %v6126
    %v6128 = vpop.f32.mrf.mxu0
    %6129 = vmatprep.mubr.f32.mxu0 0.0
    %6130 = vmatmul.mubr.f32.gmra.mxu0 %v5773
    %v6131 = vpop.f32.mrf.mxu0
    %v6132 = vadd.f32 0.0, %v6131
    %v6133 = vpop.f32.mrf.mxu0
    %6134 = vmatprep.mubr.f32.mxu0 0.0
    %6135 = vmatmul.mubr.f32.gmra.mxu0 %v5776
    %v6136 = vpop.f32.mrf.mxu0
    %v6137 = vadd.f32 0.0, %v6136
    %v6138 = vpop.f32.mrf.mxu0
    %6139 = vmatprep.mubr.f32.mxu0 0.0
    %6140 = vmatmul.mubr.f32.gmra.mxu0 %v5779
    %v6141 = vpop.f32.mrf.mxu0
    %v6142 = vadd.f32 0.0, %v6141
    %v6143 = vpop.f32.mrf.mxu0
    %6144 = vmatprep.mubr.f32.mxu0 0.0
    %6145 = vmatmul.mubr.f32.gmra.mxu0 %v5782
    %v6146 = vpop.f32.mrf.mxu0
    %v6147 = vadd.f32 0.0, %v6146
    %v6148 = vpop.f32.mrf.mxu0
    %6149 = vmatprep.mubr.f32.mxu0 0.0
    %6150 = vmatmul.mubr.f32.gmra.mxu0 %v5785
    %v6151 = vpop.f32.mrf.mxu0
    %v6152 = vadd.f32 0.0, %v6151
    %v6153 = vpop.f32.mrf.mxu0
    %6154 = vmatprep.mubr.f32.mxu0 0.0
    %6155 = vmatmul.mubr.f32.gmra.mxu0 %v5788
    %v6156 = vpop.f32.mrf.mxu0
    %v6157 = vadd.f32 0.0, %v6156
    %v6158 = vpop.f32.mrf.mxu0
    %6159 = vmatprep.mubr.f32.mxu0 0.0
    %6160 = vmatmul.mubr.f32.gmra.mxu0 %v5791
    %v6161 = vpop.f32.mrf.mxu0
    %v6162 = vadd.f32 0.0, %v6161
    %v6163 = vpop.f32.mrf.mxu0
    %6164 = vmatprep.mubr.f32.mxu0 0.0
    %6165 = vmatmul.mubr.f32.gmra.mxu0 %v5794
    %v6166 = vpop.f32.mrf.mxu0
    %v6167 = vadd.f32 0.0, %v6166
    %v6168 = vpop.f32.mrf.mxu0
    %6169 = vmatprep.mubr.f32.mxu0 0.0
    %6170 = vmatmul.mubr.f32.gmra.mxu0 %v5797
    %v6171 = vpop.f32.mrf.mxu0
    %v6172 = vadd.f32 0.0, %v6171
    %v6173 = vpop.f32.mrf.mxu0
    %6174 = vmatprep.mubr.f32.mxu0 0.0
    %6175 = vmatmul.mubr.f32.gmra.mxu0 %v5800
    %v6176 = vpop.f32.mrf.mxu0
    %v6177 = vadd.f32 0.0, %v6176
    %v6178 = vpop.f32.mrf.mxu0
    %6179 = vmatprep.mubr.f32.mxu0 0.0
    %6180 = vmatmul.mubr.f32.gmra.mxu0 %v5803
    %v6181 = vpop.f32.mrf.mxu0
    %v6182 = vadd.f32 0.0, %v6181
    %v6183 = vpop.f32.mrf.mxu0
    %6184 = vmatprep.mubr.f32.mxu0 0.0
    %6185 = vmatmul.mubr.f32.gmra.mxu0 %v5806
    %v6186 = vpop.f32.mrf.mxu0
    %v6187 = vadd.f32 0.0, %v6186
    %v6188 = vpop.f32.mrf.mxu0
    %6189 = vmatprep.mubr.f32.mxu0 0.0
    %6190 = vmatmul.mubr.f32.gmra.mxu0 %v5809
    %v6191 = vpop.f32.mrf.mxu0
    %v6192 = vadd.f32 0.0, %v6191
    %v6193 = vpop.f32.mrf.mxu0
    %6194 = vmatprep.mubr.f32.mxu0 0.0
    %6195 = vmatmul.mubr.f32.gmra.mxu0 %v5812
    %v6196 = vpop.f32.mrf.mxu0
    %v6197 = vadd.f32 0.0, %v6196
    %v6198 = vpop.f32.mrf.mxu0
    %6199 = vmatprep.mubr.f32.mxu0 0.0
    %6200 = vmatmul.mubr.f32.gmra.mxu0 %v5815
    %v6201 = vpop.f32.mrf.mxu0
    %v6202 = vadd.f32 0.0, %v6201
    %v6203 = vpop.f32.mrf.mxu0
    %6204 = vdwg.mxu0
    %v6205 = vadd.f32 %v5496, %v5887
    %v6206 = vadd.f32 %v5497, %v5892
    %v6207 = vadd.f32 %v5498, %v5897
    %v6208 = vadd.f32 %v5499, %v5902
    %v6209 = vadd.f32 %v5500, %v5907
    %v6210 = vadd.f32 %v5501, %v5912
    %v6211 = vadd.f32 %v5502, %v5917
    %v6212 = vadd.f32 %v5503, %v5922
    %v6213 = vadd.f32 %v5504, %v5927
    %v6214 = vadd.f32 %v5505, %v5932
    %v6215 = vadd.f32 %v5506, %v5937
    %v6216 = vadd.f32 %v5507, %v5942
    %v6217 = vadd.f32 %v5508, %v5947
    %v6218 = vadd.f32 %v5509, %v5952
    %v6219 = vadd.f32 %v5510, %v5957
    %v6220 = vadd.f32 %v5511, %v5962
    %v6221 = vadd.f32 %v5512, %v5967
    %v6222 = vadd.f32 %v5513, %v5972
    %v6223 = vadd.f32 %v5514, %v5977
    %v6224 = vadd.f32 %v5515, %v5982
    %v6225 = vadd.f32 %v5516, %v5987
    %v6226 = vadd.f32 %v5517, %v5992
    %v6227 = vadd.f32 %v5518, %v5997
    %v6228 = vadd.f32 %v5519, %v6002
    %v6229 = vadd.f32 %v5520, %v6007
    %v6230 = vadd.f32 %v5521, %v6012
    %v6231 = vadd.f32 %v5522, %v6017
    %v6232 = vadd.f32 %v5523, %v6022
    %v6233 = vadd.f32 %v5524, %v6027
    %v6234 = vadd.f32 %v5525, %v6032
    %v6235 = vadd.f32 %v5526, %v6037
    %v6236 = vadd.f32 %v5527, %v6042
    %v6237 = vadd.f32 %v5528, %v6047
    %v6238 = vadd.f32 %v5529, %v6052
    %v6239 = vadd.f32 %v5530, %v6057
    %v6240 = vadd.f32 %v5531, %v6062
    %v6241 = vadd.f32 %v5532, %v6067
    %v6242 = vadd.f32 %v5533, %v6072
    %v6243 = vadd.f32 %v5534, %v6077
    %v6244 = vadd.f32 %v5535, %v6082
    %v6245 = vadd.f32 %v5536, %v6087
    %v6246 = vadd.f32 %v5537, %v6092
    %v6247 = vadd.f32 %v5538, %v6097
    %v6248 = vadd.f32 %v5539, %v6102
    %v6249 = vadd.f32 %v5540, %v6107
    %v6250 = vadd.f32 %v5541, %v6112
    %v6251 = vadd.f32 %v5542, %v6117
    %v6252 = vadd.f32 %v5543, %v6122
    %v6253 = vadd.f32 %v5544, %v6127
    %v6254 = vadd.f32 %v5545, %v6132
    %v6255 = vadd.f32 %v5546, %v6137
    %v6256 = vadd.f32 %v5547, %v6142
    %v6257 = vadd.f32 %v5548, %v6147
    %v6258 = vadd.f32 %v5549, %v6152
    %v6259 = vadd.f32 %v5550, %v6157
    %v6260 = vadd.f32 %v5551, %v6162
    %v6261 = vadd.f32 %v5552, %v6167
    %v6262 = vadd.f32 %v5553, %v6172
    %v6263 = vadd.f32 %v5554, %v6177
    %v6264 = vadd.f32 %v5555, %v6182
    %v6265 = vadd.f32 %v5556, %v6187
    %v6266 = vadd.f32 %v5557, %v6192
    %v6267 = vadd.f32 %v5558, %v6197
    %v6268 = vadd.f32 %v5559, %v6202
    %v6269 = vld [vmem:[%s1 + $0x48] sm:$0x1]
    %v6270 = vlaneseq
    %v6271 = vshrl.u32 %v6270, 7
    %v6272 = vsub.s32 0, %v6271
    %v6273 = vrot.slane %v6269, %v6272
    %v6274 = vadd.f32 %v6205, %v6273
    %v6275 = vadd.f32 %v6206, %v6273
    %v6276 = vadd.f32 %v6207, %v6273
    %v6277 = vadd.f32 %v6208, %v6273
    %v6278 = vadd.f32 %v6209, %v6273
    %v6279 = vadd.f32 %v6210, %v6273
    %v6280 = vadd.f32 %v6211, %v6273
    %v6281 = vadd.f32 %v6212, %v6273
    %v6282 = vadd.f32 %v6213, %v6273
    %v6283 = vadd.f32 %v6214, %v6273
    %v6284 = vadd.f32 %v6215, %v6273
    %v6285 = vadd.f32 %v6216, %v6273
    %v6286 = vadd.f32 %v6217, %v6273
    %v6287 = vadd.f32 %v6218, %v6273
    %v6288 = vadd.f32 %v6219, %v6273
    %v6289 = vadd.f32 %v6220, %v6273
    %v6290 = vadd.f32 %v6221, %v6273
    %v6291 = vadd.f32 %v6222, %v6273
    %v6292 = vadd.f32 %v6223, %v6273
    %v6293 = vadd.f32 %v6224, %v6273
    %v6294 = vadd.f32 %v6225, %v6273
    %v6295 = vadd.f32 %v6226, %v6273
    %v6296 = vadd.f32 %v6227, %v6273
    %v6297 = vadd.f32 %v6228, %v6273
    %v6298 = vadd.f32 %v6229, %v6273
    %v6299 = vadd.f32 %v6230, %v6273
    %v6300 = vadd.f32 %v6231, %v6273
    %v6301 = vadd.f32 %v6232, %v6273
    %v6302 = vadd.f32 %v6233, %v6273
    %v6303 = vadd.f32 %v6234, %v6273
    %v6304 = vadd.f32 %v6235, %v6273
    %v6305 = vadd.f32 %v6236, %v6273
    %v6306 = vadd.f32 %v6237, %v6273
    %v6307 = vadd.f32 %v6238, %v6273
    %v6308 = vadd.f32 %v6239, %v6273
    %v6309 = vadd.f32 %v6240, %v6273
    %v6310 = vadd.f32 %v6241, %v6273
    %v6311 = vadd.f32 %v6242, %v6273
    %v6312 = vadd.f32 %v6243, %v6273
    %v6313 = vadd.f32 %v6244, %v6273
    %v6314 = vadd.f32 %v6245, %v6273
    %v6315 = vadd.f32 %v6246, %v6273
    %v6316 = vadd.f32 %v6247, %v6273
    %v6317 = vadd.f32 %v6248, %v6273
    %v6318 = vadd.f32 %v6249, %v6273
    %v6319 = vadd.f32 %v6250, %v6273
    %v6320 = vadd.f32 %v6251, %v6273
    %v6321 = vadd.f32 %v6252, %v6273
    %v6322 = vadd.f32 %v6253, %v6273
    %v6323 = vadd.f32 %v6254, %v6273
    %v6324 = vadd.f32 %v6255, %v6273
    %v6325 = vadd.f32 %v6256, %v6273
    %v6326 = vadd.f32 %v6257, %v6273
    %v6327 = vadd.f32 %v6258, %v6273
    %v6328 = vadd.f32 %v6259, %v6273
    %v6329 = vadd.f32 %v6260, %v6273
    %v6330 = vadd.f32 %v6261, %v6273
    %v6331 = vadd.f32 %v6262, %v6273
    %v6332 = vadd.f32 %v6263, %v6273
    %v6333 = vadd.f32 %v6264, %v6273
    %v6334 = vadd.f32 %v6265, %v6273
    %v6335 = vadd.f32 %v6266, %v6273
    %v6336 = vadd.f32 %v6267, %v6273
    %v6337 = vadd.f32 %v6268, %v6273
    %v6338 = vmax.f32 %v6274, 0.0
    %v6339 = vmax.f32 %v6275, 0.0
    %v6340 = vmax.f32 %v6276, 0.0
    %v6341 = vmax.f32 %v6277, 0.0
    %v6342 = vmax.f32 %v6278, 0.0
    %v6343 = vmax.f32 %v6279, 0.0
    %v6344 = vmax.f32 %v6280, 0.0
    %v6345 = vmax.f32 %v6281, 0.0
    %v6346 = vmax.f32 %v6282, 0.0
    %v6347 = vmax.f32 %v6283, 0.0
    %v6348 = vmax.f32 %v6284, 0.0
    %v6349 = vmax.f32 %v6285, 0.0
    %v6350 = vmax.f32 %v6286, 0.0
    %v6351 = vmax.f32 %v6287, 0.0
    %v6352 = vmax.f32 %v6288, 0.0
    %v6353 = vmax.f32 %v6289, 0.0
    %v6354 = vmax.f32 %v6290, 0.0
    %v6355 = vmax.f32 %v6291, 0.0
    %v6356 = vmax.f32 %v6292, 0.0
    %v6357 = vmax.f32 %v6293, 0.0
    %v6358 = vmax.f32 %v6294, 0.0
    %v6359 = vmax.f32 %v6295, 0.0
    %v6360 = vmax.f32 %v6296, 0.0
    %v6361 = vmax.f32 %v6297, 0.0
    %v6362 = vmax.f32 %v6298, 0.0
    %v6363 = vmax.f32 %v6299, 0.0
    %v6364 = vmax.f32 %v6300, 0.0
    %v6365 = vmax.f32 %v6301, 0.0
    %v6366 = vmax.f32 %v6302, 0.0
    %v6367 = vmax.f32 %v6303, 0.0
    %v6368 = vmax.f32 %v6304, 0.0
    %v6369 = vmax.f32 %v6305, 0.0
    %v6370 = vmax.f32 %v6306, 0.0
    %v6371 = vmax.f32 %v6307, 0.0
    %v6372 = vmax.f32 %v6308, 0.0
    %v6373 = vmax.f32 %v6309, 0.0
    %v6374 = vmax.f32 %v6310, 0.0
    %v6375 = vmax.f32 %v6311, 0.0
    %v6376 = vmax.f32 %v6312, 0.0
    %v6377 = vmax.f32 %v6313, 0.0
    %v6378 = vmax.f32 %v6314, 0.0
    %v6379 = vmax.f32 %v6315, 0.0
    %v6380 = vmax.f32 %v6316, 0.0
    %v6381 = vmax.f32 %v6317, 0.0
    %v6382 = vmax.f32 %v6318, 0.0
    %v6383 = vmax.f32 %v6319, 0.0
    %v6384 = vmax.f32 %v6320, 0.0
    %v6385 = vmax.f32 %v6321, 0.0
    %v6386 = vmax.f32 %v6322, 0.0
    %v6387 = vmax.f32 %v6323, 0.0
    %v6388 = vmax.f32 %v6324, 0.0
    %v6389 = vmax.f32 %v6325, 0.0
    %v6390 = vmax.f32 %v6326, 0.0
    %v6391 = vmax.f32 %v6327, 0.0
    %v6392 = vmax.f32 %v6328, 0.0
    %v6393 = vmax.f32 %v6329, 0.0
    %v6394 = vmax.f32 %v6330, 0.0
    %v6395 = vmax.f32 %v6331, 0.0
    %v6396 = vmax.f32 %v6332, 0.0
    %v6397 = vmax.f32 %v6333, 0.0
    %v6398 = vmax.f32 %v6334, 0.0
    %v6399 = vmax.f32 %v6335, 0.0
    %v6400 = vmax.f32 %v6336, 0.0
    %v6401 = vmax.f32 %v6337, 0.0
    %v6402 = vlaneseq
    %v6403 = vshrl.u32 %v6402, 7
    %v6404 = vlaneseq
    %v6405 = vand.u32 %v6404, 127
    %v6406 = vadd.s32 %v6405, 128
    %v6407 = vadd.s32 %v6405, 256
    %v6408 = vadd.s32 %v6405, 384
    %v6409 = vmul.u32 %v6403, 256
    %vm6410 = vcmp.ge.s32.totalorder %v6405, %v6409
    %vm6411 = vcmp.ge.s32.totalorder %v6406, %v6409
    %vm6412 = vcmp.ge.s32.totalorder %v6407, %v6409
    %vm6413 = vcmp.ge.s32.totalorder %v6408, %v6409
    %v6414 = vadd.s32 %v6403, 1
    %v6415 = vmul.u32 %v6414, 256
    %vm6416 = vcmp.lt.s32.totalorder %v6405, %v6415
    %vm6417 = vcmp.lt.s32.totalorder %v6406, %v6415
    %vm6418 = vcmp.lt.s32.totalorder %v6407, %v6415
    %vm6419 = vcmp.lt.s32.totalorder %v6408, %v6415
    %vm6420 = vmand %vm6410, %vm6416
    %vm6421 = vmand %vm6411, %vm6417
    %vm6422 = vmand %vm6412, %vm6418
    %vm6423 = vmand %vm6413, %vm6419
    %v6424 = vsel %vm6420, 0.00390625, 0.0
    %v6425 = vsel %vm6421, 0.00390625, 0.0
    %v6426 = vsel %vm6422, 0.00390625, 0.0
    %v6427 = vsel %vm6423, 0.00390625, 0.0
    %6428 = vmatprep.subr.mxu0 0.0
    %6429 = vmatpush1.msra.mxu0 %v6353
    %6430 = vmatprep.subr.mxu0 0.0
    %6431 = vmatpush1.msra.mxu0 %v6352
    %6432 = vmatprep.subr.mxu0 0.0
    %6433 = vmatpush1.msra.mxu0 %v6351
    %6434 = vmatprep.subr.mxu0 0.0
    %6435 = vmatpush1.msra.mxu0 %v6350
    %6436 = vmatprep.subr.mxu0 0.0
    %6437 = vmatpush1.msra.mxu0 %v6349
    %6438 = vmatprep.subr.mxu0 0.0
    %6439 = vmatpush1.msra.mxu0 %v6348
    %6440 = vmatprep.subr.mxu0 0.0
    %6441 = vmatpush1.msra.mxu0 %v6347
    %6442 = vmatprep.subr.mxu0 0.0
    %6443 = vmatpush1.msra.mxu0 %v6346
    %6444 = vmatprep.subr.mxu0 0.0
    %6445 = vmatpush1.msra.mxu0 %v6345
    %6446 = vmatprep.subr.mxu0 0.0
    %6447 = vmatpush1.msra.mxu0 %v6344
    %6448 = vmatprep.subr.mxu0 0.0
    %6449 = vmatpush1.msra.mxu0 %v6343
    %6450 = vmatprep.subr.mxu0 0.0
    %6451 = vmatpush1.msra.mxu0 %v6342
    %6452 = vmatprep.subr.mxu0 0.0
    %6453 = vmatpush1.msra.mxu0 %v6341
    %6454 = vmatprep.subr.mxu0 0.0
    %6455 = vmatpush1.msra.mxu0 %v6340
    %6456 = vmatprep.subr.mxu0 0.0
    %6457 = vmatpush1.msra.mxu0 %v6339
    %6458 = vmatprep.subr.mxu0 0.0
    %6459 = vmatpush1.msra.mxu0 %v6338
    %6460 = vmatprep.subr.mxu0 0.0
    %6461 = vmatpush2.msra.mxu0 %v6369
    %6462 = vmatprep.subr.mxu0 0.0
    %6463 = vmatpush2.msra.mxu0 %v6368
    %6464 = vmatprep.subr.mxu0 0.0
    %6465 = vmatpush2.msra.mxu0 %v6367
    %6466 = vmatprep.subr.mxu0 0.0
    %6467 = vmatpush2.msra.mxu0 %v6366
    %6468 = vmatprep.subr.mxu0 0.0
    %6469 = vmatpush2.msra.mxu0 %v6365
    %6470 = vmatprep.subr.mxu0 0.0
    %6471 = vmatpush2.msra.mxu0 %v6364
    %6472 = vmatprep.subr.mxu0 0.0
    %6473 = vmatpush2.msra.mxu0 %v6363
    %6474 = vmatprep.subr.mxu0 0.0
    %6475 = vmatpush2.msra.mxu0 %v6362
    %6476 = vmatprep.subr.mxu0 0.0
    %6477 = vmatpush2.msra.mxu0 %v6361
    %6478 = vmatprep.subr.mxu0 0.0
    %6479 = vmatpush2.msra.mxu0 %v6360
    %6480 = vmatprep.subr.mxu0 0.0
    %6481 = vmatpush2.msra.mxu0 %v6359
    %6482 = vmatprep.subr.mxu0 0.0
    %6483 = vmatpush2.msra.mxu0 %v6358
    %6484 = vmatprep.subr.mxu0 0.0
    %6485 = vmatpush2.msra.mxu0 %v6357
    %6486 = vmatprep.subr.mxu0 0.0
    %6487 = vmatpush2.msra.mxu0 %v6356
    %6488 = vmatprep.subr.mxu0 0.0
    %6489 = vmatpush2.msra.mxu0 %v6355
    %6490 = vmatprep.subr.mxu0 0.0
    %6491 = vmatpush2.msra.mxu0 %v6354
    %6492 = vmatprep.mubr.f32.mxu0 %v6425
    %6493 = vmatmul.mubr.f32.gmra.mxu0 %v6424
    %v6494 = vpop.f32.mrf.mxu0
    %v6495 = vadd.f32 0.0, %v6494
    %v6496 = vpop.f32.mrf.mxu0
    %6497 = vdwg.mxu0
    %6498 = vmatprep.subr.mxu0 0.0
    %6499 = vmatpush1.msra.mxu0 %v6385
    %6500 = vmatprep.subr.mxu0 0.0
    %6501 = vmatpush1.msra.mxu0 %v6384
    %6502 = vmatprep.subr.mxu0 0.0
    %6503 = vmatpush1.msra.mxu0 %v6383
    %6504 = vmatprep.subr.mxu0 0.0
    %6505 = vmatpush1.msra.mxu0 %v6382
    %6506 = vmatprep.subr.mxu0 0.0
    %6507 = vmatpush1.msra.mxu0 %v6381
    %6508 = vmatprep.subr.mxu0 0.0
    %6509 = vmatpush1.msra.mxu0 %v6380
    %6510 = vmatprep.subr.mxu0 0.0
    %6511 = vmatpush1.msra.mxu0 %v6379
    %6512 = vmatprep.subr.mxu0 0.0
    %6513 = vmatpush1.msra.mxu0 %v6378
    %6514 = vmatprep.subr.mxu0 0.0
    %6515 = vmatpush1.msra.mxu0 %v6377
    %6516 = vmatprep.subr.mxu0 0.0
    %6517 = vmatpush1.msra.mxu0 %v6376
    %6518 = vmatprep.subr.mxu0 0.0
    %6519 = vmatpush1.msra.mxu0 %v6375
    %6520 = vmatprep.subr.mxu0 0.0
    %6521 = vmatpush1.msra.mxu0 %v6374
    %6522 = vmatprep.subr.mxu0 0.0
    %6523 = vmatpush1.msra.mxu0 %v6373
    %6524 = vmatprep.subr.mxu0 0.0
    %6525 = vmatpush1.msra.mxu0 %v6372
    %6526 = vmatprep.subr.mxu0 0.0
    %6527 = vmatpush1.msra.mxu0 %v6371
    %6528 = vmatprep.subr.mxu0 0.0
    %6529 = vmatpush1.msra.mxu0 %v6370
    %6530 = vmatprep.subr.mxu0 0.0
    %6531 = vmatpush2.msra.mxu0 %v6401
    %6532 = vmatprep.subr.mxu0 0.0
    %6533 = vmatpush2.msra.mxu0 %v6400
    %6534 = vmatprep.subr.mxu0 0.0
    %6535 = vmatpush2.msra.mxu0 %v6399
    %6536 = vmatprep.subr.mxu0 0.0
    %6537 = vmatpush2.msra.mxu0 %v6398
    %6538 = vmatprep.subr.mxu0 0.0
    %6539 = vmatpush2.msra.mxu0 %v6397
    %6540 = vmatprep.subr.mxu0 0.0
    %6541 = vmatpush2.msra.mxu0 %v6396
    %6542 = vmatprep.subr.mxu0 0.0
    %6543 = vmatpush2.msra.mxu0 %v6395
    %6544 = vmatprep.subr.mxu0 0.0
    %6545 = vmatpush2.msra.mxu0 %v6394
    %6546 = vmatprep.subr.mxu0 0.0
    %6547 = vmatpush2.msra.mxu0 %v6393
    %6548 = vmatprep.subr.mxu0 0.0
    %6549 = vmatpush2.msra.mxu0 %v6392
    %6550 = vmatprep.subr.mxu0 0.0
    %6551 = vmatpush2.msra.mxu0 %v6391
    %6552 = vmatprep.subr.mxu0 0.0
    %6553 = vmatpush2.msra.mxu0 %v6390
    %6554 = vmatprep.subr.mxu0 0.0
    %6555 = vmatpush2.msra.mxu0 %v6389
    %6556 = vmatprep.subr.mxu0 0.0
    %6557 = vmatpush2.msra.mxu0 %v6388
    %6558 = vmatprep.subr.mxu0 0.0
    %6559 = vmatpush2.msra.mxu0 %v6387
    %6560 = vmatprep.subr.mxu0 0.0
    %6561 = vmatpush2.msra.mxu0 %v6386
    %6562 = vmatprep.mubr.f32.mxu0 %v6427
    %6563 = vmatmul.mubr.f32.gmra.mxu0 %v6426
    %v6564 = vpop.f32.mrf.mxu0
    %v6565 = vadd.f32 %v6495, %v6564
    %v6566 = vpop.f32.mrf.mxu0
    %6567 = vdwg.mxu0
    %v6568 = vld [vmem:[%s1 + $0x50] sm:$0xff]
    %v6569 = vld [vmem:[%s1 + $0x58] sm:$0xff]
    %v6570 = vld [vmem:[%s1 + $0x60] sm:$0x1]
    %v6571 = vlaneseq
    %v6572 = vshrl.u32 %v6571, 7
    %v6573 = vsub.s32 0, %v6572
    %v6574 = vrot.slane %v6570, %v6573
    %vm6575 = vcmask 130048
    %v6577 = vsel %vm6575, %v6565, 0
    %6579 = vmatprep.subr.mxu0 0.0
    %6580 = vmatpush1.msra.mxu0 0.0
    %6581 = vmatprep.subr.mxu0 0.0
    %6582 = vmatpush1.msra.mxu0 0.0
    %6583 = vmatprep.subr.mxu0 0.0
    %6584 = vmatpush1.msra.mxu0 0.0
    %6585 = vmatprep.subr.mxu0 0.0
    %6586 = vmatpush1.msra.mxu0 0.0
    %6587 = vmatprep.subr.mxu0 0.0
    %6588 = vmatpush1.msra.mxu0 0.0
    %6589 = vmatprep.subr.mxu0 0.0
    %6590 = vmatpush1.msra.mxu0 0.0
    %6591 = vmatprep.subr.mxu0 0.0
    %6592 = vmatpush1.msra.mxu0 0.0
    %6593 = vmatprep.subr.mxu0 0.0
    %6594 = vmatpush1.msra.mxu0 0.0
    %6595 = vmatprep.subr.mxu0 0.0
    %6596 = vmatpush1.msra.mxu0 0.0
    %6597 = vmatprep.subr.mxu0 0.0
    %6598 = vmatpush1.msra.mxu0 0.0
    %6599 = vmatprep.subr.mxu0 0.0
    %6600 = vmatpush1.msra.mxu0 0.0
    %6601 = vmatprep.subr.mxu0 0.0
    %6602 = vmatpush1.msra.mxu0 0.0
    %6603 = vmatprep.subr.mxu0 0.0
    %6604 = vmatpush1.msra.mxu0 0.0
    %6605 = vmatprep.subr.mxu0 0.0
    %6606 = vmatpush1.msra.mxu0 0.0
    %6607 = vmatprep.subr.mxu0 0.0
    %6608 = vmatpush1.msra.mxu0 %v6569
    %6609 = vmatprep.subr.mxu0 0.0
    %6610 = vmatpush1.msra.mxu0 %v6568
    %6611 = vmatprep.subr.mxu0 0.0
    %6612 = vmatpush2.msra.mxu0 0.0
    %6613 = vmatprep.subr.mxu0 0.0
    %6614 = vmatpush2.msra.mxu0 0.0
    %6615 = vmatprep.subr.mxu0 0.0
    %6616 = vmatpush2.msra.mxu0 0.0
    %6617 = vmatprep.subr.mxu0 0.0
    %6618 = vmatpush2.msra.mxu0 0.0
    %6619 = vmatprep.subr.mxu0 0.0
    %6620 = vmatpush2.msra.mxu0 0.0
    %6621 = vmatprep.subr.mxu0 0.0
    %6622 = vmatpush2.msra.mxu0 0.0
    %6623 = vmatprep.subr.mxu0 0.0
    %6624 = vmatpush2.msra.mxu0 0.0
    %6625 = vmatprep.subr.mxu0 0.0
    %6626 = vmatpush2.msra.mxu0 0.0
    %6627 = vmatprep.subr.mxu0 0.0
    %6628 = vmatpush2.msra.mxu0 0.0
    %6629 = vmatprep.subr.mxu0 0.0
    %6630 = vmatpush2.msra.mxu0 0.0
    %6631 = vmatprep.subr.mxu0 0.0
    %6632 = vmatpush2.msra.mxu0 0.0
    %6633 = vmatprep.subr.mxu0 0.0
    %6634 = vmatpush2.msra.mxu0 0.0
    %6635 = vmatprep.subr.mxu0 0.0
    %6636 = vmatpush2.msra.mxu0 0.0
    %6637 = vmatprep.subr.mxu0 0.0
    %6638 = vmatpush2.msra.mxu0 0.0
    %6639 = vmatprep.subr.mxu0 0.0
    %6640 = vmatpush2.msra.mxu0 0.0
    %6641 = vmatprep.subr.mxu0 0.0
    %6642 = vmatpush2.msra.mxu0 0.0
    %6643 = vmatprep.mubr.f32.mxu0 0.0
    %6644 = vmatmul.mubr.f32.gmra.mxu0 %v6577
    %v6645 = vpop.f32.mrf.mxu0
    %v6646 = vadd.f32 %v6574, %v6645
    %v6647 = vpop.f32.mrf.mxu0
    %6648 = vdwg.mxu0
    %vm6649 = vcmask 74752
    %6650 = vst.msk [vmem:[#allocation2] sm:$0x3] %vm6649, %v6646
    // Predicated region
    $region10: #{gemma3_forward.1} parent=1 // pred_check
      _
    $region11: #{gemma3_forward.1} parent=1 // pred_check_branch
      %6652 = sbr.rel (0) target = $region13
    $region12: #{gemma3_forward.1} parent=1 // pred_region
      %s6654 = ssub.s32 32, 32
      %6655 = vsyncadd [#allocation3], %s6654
      %s6657 = sshll.u32 [#allocation2], 4
      %s6658 = int_to_ptr.vmem [resolvable:$true] %s6657
      %6660 = dma.vmem_to_hbm [thread:$0]  %s6658, 32, %s2, [#allocation3]
    $region13: #{gemma3_forward.1} parent=1 // pred_fallthru
      _
    // Predicated region
    $region14: #{gemma3_forward.1} parent=1 // pred_check
      _
    $region15: #{gemma3_forward.1} parent=1 // pred_check_branch
      %6662 = sbr.rel (0) target = $region17
    $region16: #{gemma3_forward.1} parent=1 // pred_region
      %6663 = dma.done [#allocation3], 32
    $region17: #{gemma3_forward.1} parent=1 // pred_fallthru
      _
    %6664 = vsyncpa [#allocation3], 1

</llo_original>
